<compile_context>
chip_gen: v5e
topology: v5e:2x2
jax: 0.10.0
libtpu: 0.0.40
codegen_flags: <defaults>
</compile_context>

<pallas_src>
import jax
import jax.numpy as jnp
from jax.experimental import pallas as pl
from jax.experimental.pallas import tpu as pltpu


def _w1_is_int8():
    """Storage/matmul format for the dominant (d_in, d_h1) weight.

    v5e/v6e MXUs have a native int8 path -> int8 weights + int8-quantized
    activations halve the dominant HBM stream.  v7x has no integer MXU path and
    unknown/emulated devices get the safe bf16 path.
    """
    try:
        kind = jax.devices()[0].device_kind.lower()
    except Exception:
        return False
    return ("v5" in kind) or ("v6" in kind)


def _quantize_rows(x):
    """Symmetric per-row int8 quantization.  round-half-up via floor(v+0.5) keeps
    the kernel and the pure-JAX reference bit-identical and lowers trivially."""
    absmax = jnp.maximum(jnp.max(jnp.abs(x), axis=1, keepdims=True), 1e-6)
    inv = 127.0 / absmax
    x_q = jnp.clip(jnp.floor(x * inv + 0.5), -127.0, 127.0).astype(jnp.int8)
    row_scale = absmax * (1.0 / 127.0)
    return x_q, row_scale


def mlp_kernel(x_ref, w1_ref, s1_ref, t1_ref,
               w2_ref, s2_ref, t2_ref,
               w3_ref, b3_ref, o_ref):
    x = x_ref[...]                                    # (B, d_in) f32

    if w1_ref.dtype == jnp.int8:
        # Layer 1 on the MXU's native int8 path.  Per-column weight dequant
        # scale is pre-folded into s1; only the per-row activation scale is
        # applied here.
        x_q, row_scale = _quantize_rows(x)
        acc = jnp.dot(x_q, w1_ref[...], preferred_element_type=jnp.int32)
        h = acc.astype(jnp.float32) * row_scale
    else:
        # bf16 path (v7x / unknown devices): bf16 weights, f32 accumulation.
        h = jnp.dot(x.astype(jnp.bfloat16), w1_ref[...],
                    preferred_element_type=jnp.float32)

    # Linear bias + BatchNorm1d (running stats) folded into (s1, t1); ReLU.
    # Dropout is identity at inference.
    h = jnp.maximum(h * s1_ref[...] + t1_ref[...], 0.0)

    # Hidden layer 2
    h = jnp.dot(h.astype(jnp.bfloat16), w2_ref[...],
                preferred_element_type=jnp.float32)
    h = jnp.maximum(h * s2_ref[...] + t2_ref[...], 0.0)

    # Output layer: Linear + Softmax over dim=1.  Exact denominator (rows must
    # sum to 1; the approx EUP reciprocal is chip-dependent and only ~1e-3).
    logits = jnp.dot(h.astype(jnp.bfloat16), w3_ref[...],
                     preferred_element_type=jnp.float32) + b3_ref[...]
    m = jnp.max(logits, axis=1, keepdims=True)
    e = jnp.exp(logits - m)
    o_ref[...] = e / jnp.sum(e, axis=1, keepdims=True)


def mlp_forward(x, params):
    (w1, s1, t1, w2, s2, t2, w3, b3) = params
    B, d_in = x.shape
    d_h1 = w1.shape[1]
    d_h2 = w2.shape[1]
    out_n = w3.shape[1]

    def full_spec(shape):
        return pl.BlockSpec(shape, lambda: (0,) * len(shape))

    flops = 2 * B * (d_in * d_h1 + d_h1 * d_h2 + d_h2 * out_n)
    bytes_accessed = (
        x.size * x.dtype.itemsize
        + sum(int(a.size) * a.dtype.itemsize for a in params)
        + B * out_n * 4
    )
    cost = pl.CostEstimate(flops=flops,
                           transcendentals=B * out_n,
                           bytes_accessed=bytes_accessed)

    return pl.pallas_call(
        mlp_kernel,
        out_shape=jax.ShapeDtypeStruct((B, out_n), jnp.float32),
        in_specs=[
            full_spec(x.shape),
            full_spec(w1.shape), full_spec(s1.shape), full_spec(t1.shape),
            full_spec(w2.shape), full_spec(s2.shape), full_spec(t2.shape),
            full_spec(w3.shape), full_spec(b3.shape),
        ],
        out_specs=full_spec((B, out_n)),
        cost_estimate=cost,
        # Working set (double-buffered) is < 8 MiB; 16 MiB leaves headroom on
        # v7x's 64 MiB physical VMEM for neighboring fusions / future prefetch.
        compiler_params=pltpu.CompilerParams(vmem_limit_bytes=16 << 20),
    )(x, w1, s1, t1, w2, s2, t2, w3, b3)


def init_params(key, layer_list, output_n, w1_int8):
    """Deterministic parameter init.  Linear bias + BatchNorm1d (running stats)
    are folded into a per-feature (scale, shift).  Layer-1 weights are stored
    int8 (per-column symmetric quant, scale folded into the BN scale) when the
    chip has an integer MXU path, otherwise bf16; remaining weights are bf16."""
    ks = jax.random.split(key, 16)
    params = []
    dims = list(layer_list)          # e.g. [2304, 768, 64]
    ki = 0
    for i in range(len(dims) - 1):
        din, dout = dims[i], dims[i + 1]
        w = jax.random.normal(ks[ki], (din, dout), jnp.float32) * 0.02; ki += 1
        b = jax.random.normal(ks[ki], (dout,), jnp.float32) * 0.01; ki += 1
        gamma = 1.0 + 0.1 * jax.random.normal(ks[ki], (dout,), jnp.float32); ki += 1
        beta = 0.1 * jax.random.normal(ks[ki], (dout,), jnp.float32); ki += 1
        running_mean = 0.1 * jax.random.normal(ks[ki], (dout,), jnp.float32); ki += 1
        running_var = 1.0 + 0.1 * jax.random.uniform(ks[ki], (dout,), jnp.float32); ki += 1
        eps = 1e-5
        # BN(z) = gamma*(z-mean)/sqrt(var+eps) + beta  with z = x@W + b
        #       = (x@W)*scale + (b*scale + beta - mean*scale)
        scale = gamma / jnp.sqrt(running_var + eps)
        shift = b * scale + beta - running_mean * scale
        if i == 0 and w1_int8:
            col_absmax = jnp.maximum(jnp.max(jnp.abs(w), axis=0), 1e-6)      # (dout,)
            w_store = jnp.clip(jnp.floor(w * (127.0 / col_absmax) + 0.5),
                               -127.0, 127.0).astype(jnp.int8)
            scale = scale * (col_absmax * (1.0 / 127.0))   # fold dequant into BN scale
        else:
            w_store = w.astype(jnp.bfloat16)
        params += [w_store, scale.reshape(1, dout), shift.reshape(1, dout)]
    # output layer
    din = dims[-1]
    w3 = jax.random.normal(ks[ki], (din, output_n), jnp.float32) * 0.02; ki += 1
    b3 = jax.random.normal(ks[ki], (output_n,), jnp.float32) * 0.01; ki += 1
    params += [w3.astype(jnp.bfloat16), b3.reshape(1, output_n)]
    return tuple(params)


def mlp_reference(x, params):
    """Pure-JAX reference with identical mixed-precision / quantization math."""
    (w1, s1, t1, w2, s2, t2, w3, b3) = params
    if w1.dtype == jnp.int8:
        x_q, row_scale = _quantize_rows(x)
        acc = jnp.dot(x_q.astype(jnp.int32), w1.astype(jnp.int32))  # exact int32 acc
        h = acc.astype(jnp.float32) * row_scale
    else:
        h = jnp.dot(x.astype(jnp.bfloat16), w1, preferred_element_type=jnp.float32)
    h = jnp.maximum(h * s1 + t1, 0.0)
    h = jnp.dot(h.astype(jnp.bfloat16), w2, preferred_element_type=jnp.float32)
    h = jnp.maximum(h * s2 + t2, 0.0)
    logits = jnp.dot(h.astype(jnp.bfloat16), w3, preferred_element_type=jnp.float32) + b3
    return jax.nn.softmax(logits, axis=1)


if __name__ == "__main__":
    layer_list = [768 * 3, 768, 64]   # module default
    sentiment_nums = 3                # args.sentiment_nums
    batch = 8

    key = jax.random.PRNGKey(0)
    kx, kp = jax.random.split(key)
    x = jax.random.normal(kx, (batch, layer_list[0]), jnp.float32)

    w1_int8 = _w1_is_int8()
    params = init_params(kp, layer_list, sentiment_nums, w1_int8)

    out = jax.block_until_ready(mlp_forward(x, params))
    ref = mlp_reference(x, params)

    assert out.shape == (batch, sentiment_nums)
    # Kernel and reference share the same quantization / mixed-precision math, so
    # only matmul accumulation-order differences remain.
    assert jnp.allclose(out, ref, atol=2e-3, rtol=2e-2)
    # Exact softmax denominator -> rows sum to 1 to f32 rounding.
    assert jnp.allclose(jnp.sum(out, axis=1), 1.0, atol=1e-3)

    print("KERNEL_OK")
</pallas_src>

<mosaic_0001>
module attributes {stable_mosaic.version = 11 : i64} {
  func.func @mlp_kernel(%arg0: memref<8x2304xf32, #tpu.memory_space<vmem>>, %arg1: memref<2304x768xbf16, #tpu.memory_space<vmem>>, %arg2: memref<1x768xf32, #tpu.memory_space<vmem>>, %arg3: memref<1x768xf32, #tpu.memory_space<vmem>>, %arg4: memref<768x64xbf16, #tpu.memory_space<vmem>>, %arg5: memref<1x64xf32, #tpu.memory_space<vmem>>, %arg6: memref<1x64xf32, #tpu.memory_space<vmem>>, %arg7: memref<64x3xbf16, #tpu.memory_space<vmem>>, %arg8: memref<1x3xf32, #tpu.memory_space<vmem>>, %arg9: memref<8x3xf32, #tpu.memory_space<vmem>>) attributes {dimension_semantics = [], scalar_prefetch = 0 : i64, scratch_operands = 0 : i64, tpu.core_type = #tpu.core_type<tc>} {
    %c0 = arith.constant 0 : index
    %c0_0 = arith.constant 0 : index
    %0 = vector.load %arg0[%c0, %c0_0] : memref<8x2304xf32, #tpu.memory_space<vmem>>, vector<8x2304xf32>
    %1 = arith.truncf %0 : vector<8x2304xf32> to vector<8x2304xbf16>
    %c0_1 = arith.constant 0 : index
    %c0_2 = arith.constant 0 : index
    %2 = vector.load %arg1[%c0_1, %c0_2] : memref<2304x768xbf16, #tpu.memory_space<vmem>>, vector<2304x768xbf16>
    %cst = arith.constant dense<0.000000e+00> : vector<8x768xf32>
    %3 = tpu.matmul %1, %2, %cst {dimension_numbers = #tpu.dot_dimension_numbers<[1], [0], [0], [1], [0, 0, 1, 1], [], []>} : vector<8x2304xbf16>, vector<2304x768xbf16>, vector<8x768xf32> -> vector<8x768xf32>
    %c0_3 = arith.constant 0 : index
    %c0_4 = arith.constant 0 : index
    %4 = vector.load %arg2[%c0_3, %c0_4] : memref<1x768xf32, #tpu.memory_space<vmem>>, vector<1x768xf32>
    %5 = vector.broadcast %4 : vector<1x768xf32> to vector<8x768xf32>
    %6 = arith.mulf %3, %5 : vector<8x768xf32>
    %c0_5 = arith.constant 0 : index
    %c0_6 = arith.constant 0 : index
    %7 = vector.load %arg3[%c0_5, %c0_6] : memref<1x768xf32, #tpu.memory_space<vmem>>, vector<1x768xf32>
    %8 = vector.broadcast %7 : vector<1x768xf32> to vector<8x768xf32>
    %9 = arith.addf %6, %8 : vector<8x768xf32>
    %cst_7 = arith.constant 0.000000e+00 : f32
    %10 = vector.broadcast %cst_7 : f32 to vector<8x768xf32>
    %11 = arith.maximumf %9, %10 : vector<8x768xf32>
    %12 = arith.truncf %11 : vector<8x768xf32> to vector<8x768xbf16>
    %c0_8 = arith.constant 0 : index
    %c0_9 = arith.constant 0 : index
    %13 = vector.load %arg4[%c0_8, %c0_9] : memref<768x64xbf16, #tpu.memory_space<vmem>>, vector<768x64xbf16>
    %cst_10 = arith.constant dense<0.000000e+00> : vector<8x64xf32>
    %14 = tpu.matmul %12, %13, %cst_10 {dimension_numbers = #tpu.dot_dimension_numbers<[1], [0], [0], [1], [0, 0, 1, 1], [], []>} : vector<8x768xbf16>, vector<768x64xbf16>, vector<8x64xf32> -> vector<8x64xf32>
    %c0_11 = arith.constant 0 : index
    %c0_12 = arith.constant 0 : index
    %15 = vector.load %arg5[%c0_11, %c0_12] : memref<1x64xf32, #tpu.memory_space<vmem>>, vector<1x64xf32>
    %16 = vector.broadcast %15 : vector<1x64xf32> to vector<8x64xf32>
    %17 = arith.mulf %14, %16 : vector<8x64xf32>
    %c0_13 = arith.constant 0 : index
    %c0_14 = arith.constant 0 : index
    %18 = vector.load %arg6[%c0_13, %c0_14] : memref<1x64xf32, #tpu.memory_space<vmem>>, vector<1x64xf32>
    %19 = vector.broadcast %18 : vector<1x64xf32> to vector<8x64xf32>
    %20 = arith.addf %17, %19 : vector<8x64xf32>
    %cst_15 = arith.constant 0.000000e+00 : f32
    %21 = vector.broadcast %cst_15 : f32 to vector<8x64xf32>
    %22 = arith.maximumf %20, %21 : vector<8x64xf32>
    %23 = arith.truncf %22 : vector<8x64xf32> to vector<8x64xbf16>
    %c0_16 = arith.constant 0 : index
    %c0_17 = arith.constant 0 : index
    %24 = vector.load %arg7[%c0_16, %c0_17] : memref<64x3xbf16, #tpu.memory_space<vmem>>, vector<64x3xbf16>
    %cst_18 = arith.constant dense<0.000000e+00> : vector<8x3xf32>
    %25 = tpu.matmul %23, %24, %cst_18 {dimension_numbers = #tpu.dot_dimension_numbers<[1], [0], [0], [1], [0, 0, 1, 1], [], []>} : vector<8x64xbf16>, vector<64x3xbf16>, vector<8x3xf32> -> vector<8x3xf32>
    %c0_19 = arith.constant 0 : index
    %c0_20 = arith.constant 0 : index
    %26 = vector.load %arg8[%c0_19, %c0_20] : memref<1x3xf32, #tpu.memory_space<vmem>>, vector<1x3xf32>
    %27 = vector.broadcast %26 : vector<1x3xf32> to vector<8x3xf32>
    %28 = arith.addf %25, %27 : vector<8x3xf32>
    %cst_21 = arith.constant dense<0xFF800000> : vector<8xf32>
    %29 = vector.multi_reduction <maximumf>, %28, %cst_21 [1] : vector<8x3xf32> to vector<8xf32>
    %30 = vector.shape_cast %29 : vector<8xf32> to vector<8x1xf32>
    %31 = vector.broadcast %30 : vector<8x1xf32> to vector<8x3xf32>
    %32 = arith.subf %28, %31 : vector<8x3xf32>
    %33 = math.exp %32 : vector<8x3xf32>
    %cst_22 = arith.constant dense<0.000000e+00> : vector<8xf32>
    %34 = vector.multi_reduction <add>, %33, %cst_22 [1] : vector<8x3xf32> to vector<8xf32>
    %35 = vector.shape_cast %34 : vector<8xf32> to vector<8x1xf32>
    %36 = vector.broadcast %35 : vector<8x1xf32> to vector<8x3xf32>
    %37 = arith.divf %33, %36 : vector<8x3xf32>
    %c0_23 = arith.constant 0 : index
    %c0_24 = arith.constant 0 : index
    %38 = vector.load %arg9[%c0_23, %c0_24] : memref<8x3xf32, #tpu.memory_space<vmem>>, vector<8x3xf32>
    tpu.vector_store %arg9[%c0_23, %c0_24], %37 {strides = array<i32>} : memref<8x3xf32, #tpu.memory_space<vmem>>, vector<8x3xf32>,
    return
  }
}

</mosaic_0001>

<llo_original>
// kernel: tpu_custom_call.1
$region0: #{tpu_custom_call.1}
  #allocation0 [shape = 'u32[]', space=smem, size = 0x4, offset = 0x4, fixed_abs, tag = 'smem constant byte address 0x4 - core index']
  #allocation1 [shape = 'u32[72,128]{1,0:T(1,128)}', space=vmem, size = 0x9000, scoped, tag = 'internal scratch']
  %s0 = inlined_call_operand.hbm [shape: f32[8,2304], index: 0, kind: input, shape index: {}]
  %s1 = inlined_call_operand.hbm [shape: bf16[2304,768], index: 1, kind: input, shape index: {}]
  %s2 = inlined_call_operand.hbm [shape: f32[1,768], index: 2, kind: input, shape index: {}]
  %s3 = inlined_call_operand.hbm [shape: f32[1,768], index: 3, kind: input, shape index: {}]
  %s4 = inlined_call_operand.vmem [shape: bf16[768,64], index: 4, kind: input, shape index: {}]
  %s5 = inlined_call_operand.hbm [shape: f32[1,64], index: 5, kind: input, shape index: {}]
  %s6 = inlined_call_operand.hbm [shape: f32[1,64], index: 6, kind: input, shape index: {}]
  %s7 = inlined_call_operand.vmem [shape: bf16[64,3], index: 7, kind: input, shape index: {}]
  %s8 = inlined_call_operand.hbm [shape: f32[1,3], index: 8, kind: input, shape index: {}]
  %s9 = inlined_call_operand.vmem [shape: f32[8,3], index: 9, kind: output, shape index: {}]
  %s10 = sld [smem:[#allocation0]]
  $region74: #{tpu_custom_call.1} parent=0
    _
  %s12 = ssub.s32 1, %s10
  %s13 = scalar_select 0, %s12, %s10
  $region1: #{tpu_custom_call.1} parent=0
    #allocation2 [shape = 'u8[73728]{0}', space=vmem, size = 0x12000, scoped, tag = 'input window, operand 0, single buffered']
    #allocation3 [shape = 's32[1]{0}', space=sflag, size = 0x4, scoped, tag = 'scoped memory for tpu_custom_call.1']
    #allocation4 [shape = 'u8[3538944]{0}', space=vmem, size = 0x360000, scoped, tag = 'input window, operand 1, single buffered']
    #allocation5 [shape = 's32[1]{0}', space=sflag, size = 0x4, scoped, tag = 'scoped memory for tpu_custom_call.1']
    #allocation6 [shape = 'u8[3072]{0}', space=vmem, size = 0xc00, scoped, tag = 'input window, operand 2, single buffered']
    #allocation7 [shape = 'u8[3072]{0}', space=vmem, size = 0xc00, scoped, tag = 'input window, operand 3, single buffered']
    #allocation8 [shape = 's32[1]{0}', space=sflag, size = 0x4, scoped, tag = 'scoped memory for tpu_custom_call.1']
    #allocation9 [shape = 'u8[512]{0}', space=vmem, size = 0x400, scoped, tag = 'input window, operand 5, single buffered']
    #allocation10 [shape = 'u8[512]{0}', space=vmem, size = 0x400, scoped, tag = 'input window, operand 6, single buffered']
    #allocation11 [shape = 's32[1]{0}', space=sflag, size = 0x4, scoped, tag = 'scoped memory for tpu_custom_call.1']
    #allocation12 [shape = 'u8[512]{0}', space=vmem, size = 0x400, scoped, tag = 'input window, operand 8, single buffered']
    %14 = vsyncpa [#allocation3], 0
    %15 = vsyncpa [#allocation5], 0
    %16 = vsyncpa [#allocation8], 0
    %17 = vsyncpa [#allocation11], 0
    // Predicated region
    $region2: #{tpu_custom_call.1} parent=1 // pred_check
      _
    $region3: #{tpu_custom_call.1} parent=1 // pred_check_branch
      %19 = sbr.rel (0) target = $region5
    $region4: #{tpu_custom_call.1} parent=1 // pred_region
      %21 = vsyncadd [#allocation3], 0
      %s23 = sshll.u32 %s0, 4
      %s24 = int_to_ptr.hbm [resolvable:$true] %s23
      %s25 = sshll.u32 [#allocation2], 4
      %s26 = int_to_ptr.vmem [resolvable:$true] %s25
      %28 = dma.hbm_to_vmem [thread:$0]  %s24, 2304, %s26, [#allocation3]
    $region5: #{tpu_custom_call.1} parent=1 // pred_fallthru
      _
    // Predicated region
    $region6: #{tpu_custom_call.1} parent=1 // pred_check
      _
    $region7: #{tpu_custom_call.1} parent=1 // pred_check_branch
      %30 = sbr.rel (0) target = $region9
    $region8: #{tpu_custom_call.1} parent=1 // pred_region
      %32 = vsyncadd [#allocation5], 0
      %s33 = sshll.u32 %s1, 4
      %s34 = int_to_ptr.hbm [resolvable:$true] %s33
      %s35 = sshll.u32 [#allocation4], 4
      %s36 = int_to_ptr.vmem [resolvable:$true] %s35
      %41 = dma.hbm_to_vmem [thread:$0]  %s34, 110592, %s36, [#allocation5], 384, 384, 24
    $region9: #{tpu_custom_call.1} parent=1 // pred_fallthru
      _
    // Predicated region
    $region10: #{tpu_custom_call.1} parent=1 // pred_check
      _
    $region11: #{tpu_custom_call.1} parent=1 // pred_check_branch
      %43 = sbr.rel (0) target = $region13
    $region12: #{tpu_custom_call.1} parent=1 // pred_region
      %45 = vsyncadd [#allocation5], 0
      %s47 = sshll.u32 %s2, 4
      %s48 = int_to_ptr.hbm [resolvable:$true] %s47
      %s49 = sshll.u32 [#allocation6], 4
      %s50 = int_to_ptr.vmem [resolvable:$true] %s49
      %52 = dma.hbm_to_vmem [thread:$0]  %s48, 96, %s50, [#allocation5]
    $region13: #{tpu_custom_call.1} parent=1 // pred_fallthru
      _
    // Predicated region
    $region14: #{tpu_custom_call.1} parent=1 // pred_check
      _
    $region15: #{tpu_custom_call.1} parent=1 // pred_check_branch
      %54 = sbr.rel (0) target = $region17
    $region16: #{tpu_custom_call.1} parent=1 // pred_region
      %56 = vsyncadd [#allocation8], 0
      %s58 = sshll.u32 %s3, 4
      %s59 = int_to_ptr.hbm [resolvable:$true] %s58
      %s60 = sshll.u32 [#allocation7], 4
      %s61 = int_to_ptr.vmem [resolvable:$true] %s60
      %63 = dma.hbm_to_vmem [thread:$0]  %s59, 96, %s61, [#allocation8]
    $region17: #{tpu_custom_call.1} parent=1 // pred_fallthru
      _
    // Predicated region
    $region18: #{tpu_custom_call.1} parent=1 // pred_check
      _
    $region19: #{tpu_custom_call.1} parent=1 // pred_check_branch
      %65 = sbr.rel (0) target = $region21
    $region20: #{tpu_custom_call.1} parent=1 // pred_region
      _
    $region21: #{tpu_custom_call.1} parent=1 // pred_fallthru
      _
    // Predicated region
    $region22: #{tpu_custom_call.1} parent=1 // pred_check
      _
    $region23: #{tpu_custom_call.1} parent=1 // pred_check_branch
      %67 = sbr.rel (0) target = $region25
    $region24: #{tpu_custom_call.1} parent=1 // pred_region
      %69 = vsyncadd [#allocation8], 0
      %s71 = sshll.u32 %s5, 4
      %s72 = int_to_ptr.hbm [resolvable:$true] %s71
      %s73 = sshll.u32 [#allocation9], 4
      %s74 = int_to_ptr.vmem [resolvable:$true] %s73
      %76 = dma.hbm_to_vmem [thread:$0]  %s72, 16, %s74, [#allocation8]
    $region25: #{tpu_custom_call.1} parent=1 // pred_fallthru
      _
    // Predicated region
    $region26: #{tpu_custom_call.1} parent=1 // pred_check
      _
    $region27: #{tpu_custom_call.1} parent=1 // pred_check_branch
      %78 = sbr.rel (0) target = $region29
    $region28: #{tpu_custom_call.1} parent=1 // pred_region
      %80 = vsyncadd [#allocation11], 0
      %s82 = sshll.u32 %s6, 4
      %s83 = int_to_ptr.hbm [resolvable:$true] %s82
      %s84 = sshll.u32 [#allocation10], 4
      %s85 = int_to_ptr.vmem [resolvable:$true] %s84
      %87 = dma.hbm_to_vmem [thread:$0]  %s83, 16, %s85, [#allocation11]
    $region29: #{tpu_custom_call.1} parent=1 // pred_fallthru
      _
    // Predicated region
    $region30: #{tpu_custom_call.1} parent=1 // pred_check
      _
    $region31: #{tpu_custom_call.1} parent=1 // pred_check_branch
      %89 = sbr.rel (0) target = $region33
    $region32: #{tpu_custom_call.1} parent=1 // pred_region
      _
    $region33: #{tpu_custom_call.1} parent=1 // pred_fallthru
      _
    // Predicated region
    $region34: #{tpu_custom_call.1} parent=1 // pred_check
      _
    $region35: #{tpu_custom_call.1} parent=1 // pred_check_branch
      %91 = sbr.rel (0) target = $region37
    $region36: #{tpu_custom_call.1} parent=1 // pred_region
      %93 = vsyncadd [#allocation11], 0
      %s95 = sshll.u32 %s8, 4
      %s96 = int_to_ptr.hbm [resolvable:$true] %s95
      %s97 = sshll.u32 [#allocation12], 4
      %s98 = int_to_ptr.vmem [resolvable:$true] %s97
      %100 = dma.hbm_to_vmem [thread:$0]  %s96, 16, %s98, [#allocation11]
    $region37: #{tpu_custom_call.1} parent=1 // pred_fallthru
      _
    // Predicated region
    $region38: #{tpu_custom_call.1} parent=1 // pred_check
      _
    $region39: #{tpu_custom_call.1} parent=1 // pred_check_branch
      %102 = sbr.rel (0) target = $region41
    $region40: #{tpu_custom_call.1} parent=1 // pred_region
      %104 = dma.done [#allocation3], 2304
    $region41: #{tpu_custom_call.1} parent=1 // pred_fallthru
      _
    // Predicated region
    $region42: #{tpu_custom_call.1} parent=1 // pred_check
      _
    $region43: #{tpu_custom_call.1} parent=1 // pred_check_branch
      %106 = sbr.rel (0) target = $region45
    $region44: #{tpu_custom_call.1} parent=1 // pred_region
      %108 = dma.done [#allocation5], 110592
    $region45: #{tpu_custom_call.1} parent=1 // pred_fallthru
      _
    // Predicated region
    $region46: #{tpu_custom_call.1} parent=1 // pred_check
      _
    $region47: #{tpu_custom_call.1} parent=1 // pred_check_branch
      %110 = sbr.rel (0) target = $region49
    $region48: #{tpu_custom_call.1} parent=1 // pred_region
      %112 = dma.done [#allocation5], 96
    $region49: #{tpu_custom_call.1} parent=1 // pred_fallthru
      _
    // Predicated region
    $region50: #{tpu_custom_call.1} parent=1 // pred_check
      _
    $region51: #{tpu_custom_call.1} parent=1 // pred_check_branch
      %114 = sbr.rel (0) target = $region53
    $region52: #{tpu_custom_call.1} parent=1 // pred_region
      %116 = dma.done [#allocation8], 96
    $region53: #{tpu_custom_call.1} parent=1 // pred_fallthru
      _
    // Predicated region
    $region54: #{tpu_custom_call.1} parent=1 // pred_check
      _
    $region55: #{tpu_custom_call.1} parent=1 // pred_check_branch
      %118 = sbr.rel (0) target = $region57
    $region56: #{tpu_custom_call.1} parent=1 // pred_region
      %120 = dma.done [#allocation8], 16
    $region57: #{tpu_custom_call.1} parent=1 // pred_fallthru
      _
    // Predicated region
    $region58: #{tpu_custom_call.1} parent=1 // pred_check
      _
    $region59: #{tpu_custom_call.1} parent=1 // pred_check_branch
      %122 = sbr.rel (0) target = $region61
    $region60: #{tpu_custom_call.1} parent=1 // pred_region
      %124 = dma.done [#allocation11], 16
    $region61: #{tpu_custom_call.1} parent=1 // pred_fallthru
      _
    // Predicated region
    $region62: #{tpu_custom_call.1} parent=1 // pred_check
      _
    $region63: #{tpu_custom_call.1} parent=1 // pred_check_branch
      %126 = sbr.rel (0) target = $region65
    $region64: #{tpu_custom_call.1} parent=1 // pred_region
      %128 = dma.done [#allocation11], 16
    $region65: #{tpu_custom_call.1} parent=1 // pred_fallthru
      _
    %v130 = vld [vmem:[#allocation2] sm:$0xff]
    %v131 = vld [vmem:[#allocation2 + $0x8] sm:$0xff]
    %v132 = vld [vmem:[#allocation2 + $0x10] sm:$0xff]
    %v133 = vld [vmem:[#allocation2 + $0x18] sm:$0xff]
    %v134 = vld [vmem:[#allocation2 + $0x20] sm:$0xff]
    %v135 = vld [vmem:[#allocation2 + $0x28] sm:$0xff]
    %v136 = vld [vmem:[#allocation2 + $0x30] sm:$0xff]
    %v137 = vld [vmem:[#allocation2 + $0x38] sm:$0xff]
    %v138 = vld [vmem:[#allocation2 + $0x40] sm:$0xff]
    %v139 = vld [vmem:[#allocation2 + $0x48] sm:$0xff]
    %v140 = vld [vmem:[#allocation2 + $0x50] sm:$0xff]
    %v141 = vld [vmem:[#allocation2 + $0x58] sm:$0xff]
    %v142 = vld [vmem:[#allocation2 + $0x60] sm:$0xff]
    %v143 = vld [vmem:[#allocation2 + $0x68] sm:$0xff]
    %v144 = vld [vmem:[#allocation2 + $0x70] sm:$0xff]
    %v145 = vld [vmem:[#allocation2 + $0x78] sm:$0xff]
    %v146 = vld [vmem:[#allocation2 + $0x80] sm:$0xff]
    %v147 = vld [vmem:[#allocation2 + $0x88] sm:$0xff]
    %v148 = vpack.c.bf16 %v130, %v130
    %v149 = vpack.c.bf16 %v131, %v131
    %v150 = vpack.c.bf16 %v132, %v132
    %v151 = vpack.c.bf16 %v133, %v133
    %v152 = vpack.c.bf16 %v134, %v134
    %v153 = vpack.c.bf16 %v135, %v135
    %v154 = vpack.c.bf16 %v136, %v136
    %v155 = vpack.c.bf16 %v137, %v137
    %v156 = vpack.c.bf16 %v138, %v138
    %v157 = vpack.c.bf16 %v139, %v139
    %v158 = vpack.c.bf16 %v140, %v140
    %v159 = vpack.c.bf16 %v141, %v141
    %v160 = vpack.c.bf16 %v142, %v142
    %v161 = vpack.c.bf16 %v143, %v143
    %v162 = vpack.c.bf16 %v144, %v144
    %v163 = vpack.c.bf16 %v145, %v145
    %v164 = vpack.c.bf16 %v146, %v146
    %v165 = vpack.c.bf16 %v147, %v147
    %v166 = vld [vmem:[#allocation4] sm:$0xff]
    %v167 = vld [vmem:[#allocation4 + $0x8] sm:$0xff]
    %v168 = vld [vmem:[#allocation4 + $0x10] sm:$0xff]
    %v169 = vld [vmem:[#allocation4 + $0x18] sm:$0xff]
    %v170 = vld [vmem:[#allocation4 + $0x20] sm:$0xff]
    %v171 = vld [vmem:[#allocation4 + $0x28] sm:$0xff]
    %v172 = vld [vmem:[#allocation4 + $0x30] sm:$0xff]
    %v173 = vld [vmem:[#allocation4 + $0x38] sm:$0xff]
    %v174 = vld [vmem:[#allocation4 + $0x40] sm:$0xff]
    %v175 = vld [vmem:[#allocation4 + $0x48] sm:$0xff]
    %v176 = vld [vmem:[#allocation4 + $0x50] sm:$0xff]
    %v177 = vld [vmem:[#allocation4 + $0x58] sm:$0xff]
    %v178 = vld [vmem:[#allocation4 + $0x60] sm:$0xff]
    %v179 = vld [vmem:[#allocation4 + $0x68] sm:$0xff]
    %v180 = vld [vmem:[#allocation4 + $0x70] sm:$0xff]
    %v181 = vld [vmem:[#allocation4 + $0x78] sm:$0xff]
    %v182 = vld [vmem:[#allocation4 + $0x80] sm:$0xff]
    %v183 = vld [vmem:[#allocation4 + $0x88] sm:$0xff]
    %v184 = vld [vmem:[#allocation4 + $0x90] sm:$0xff]
    %v185 = vld [vmem:[#allocation4 + $0x98] sm:$0xff]
    %v186 = vld [vmem:[#allocation4 + $0xa0] sm:$0xff]
    %v187 = vld [vmem:[#allocation4 + $0xa8] sm:$0xff]
    %v188 = vld [vmem:[#allocation4 + $0xb0] sm:$0xff]
    %v189 = vld [vmem:[#allocation4 + $0xb8] sm:$0xff]
    %v190 = vld [vmem:[#allocation4 + $0xc0] sm:$0xff]
    %v191 = vld [vmem:[#allocation4 + $0xc8] sm:$0xff]
    %v192 = vld [vmem:[#allocation4 + $0xd0] sm:$0xff]
    %v193 = vld [vmem:[#allocation4 + $0xd8] sm:$0xff]
    %v194 = vld [vmem:[#allocation4 + $0xe0] sm:$0xff]
    %v195 = vld [vmem:[#allocation4 + $0xe8] sm:$0xff]
    %v196 = vld [vmem:[#allocation4 + $0xf0] sm:$0xff]
    %v197 = vld [vmem:[#allocation4 + $0xf8] sm:$0xff]
    %v198 = vld [vmem:[#allocation4 + $0x100] sm:$0xff]
    %v199 = vld [vmem:[#allocation4 + $0x108] sm:$0xff]
    %v200 = vld [vmem:[#allocation4 + $0x110] sm:$0xff]
    %v201 = vld [vmem:[#allocation4 + $0x118] sm:$0xff]
    %v202 = vld [vmem:[#allocation4 + $0x120] sm:$0xff]
    %v203 = vld [vmem:[#allocation4 + $0x128] sm:$0xff]
    %v204 = vld [vmem:[#allocation4 + $0x130] sm:$0xff]
    %v205 = vld [vmem:[#allocation4 + $0x138] sm:$0xff]
    %v206 = vld [vmem:[#allocation4 + $0x140] sm:$0xff]
    %v207 = vld [vmem:[#allocation4 + $0x148] sm:$0xff]
    %v208 = vld [vmem:[#allocation4 + $0x150] sm:$0xff]
    %v209 = vld [vmem:[#allocation4 + $0x158] sm:$0xff]
    %v210 = vld [vmem:[#allocation4 + $0x160] sm:$0xff]
    %v211 = vld [vmem:[#allocation4 + $0x168] sm:$0xff]
    %v212 = vld [vmem:[#allocation4 + $0x170] sm:$0xff]
    %v213 = vld [vmem:[#allocation4 + $0x178] sm:$0xff]
    %v214 = vld [vmem:[#allocation4 + $0x180] sm:$0xff]
    %v215 = vld [vmem:[#allocation4 + $0x188] sm:$0xff]
    %v216 = vld [vmem:[#allocation4 + $0x190] sm:$0xff]
    %v217 = vld [vmem:[#allocation4 + $0x198] sm:$0xff]
    %v218 = vld [vmem:[#allocation4 + $0x1a0] sm:$0xff]
    %v219 = vld [vmem:[#allocation4 + $0x1a8] sm:$0xff]
    %v220 = vld [vmem:[#allocation4 + $0x1b0] sm:$0xff]
    %v221 = vld [vmem:[#allocation4 + $0x1b8] sm:$0xff]
    %v222 = vld [vmem:[#allocation4 + $0x1c0] sm:$0xff]
    %v223 = vld [vmem:[#allocation4 + $0x1c8] sm:$0xff]
    %v224 = vld [vmem:[#allocation4 + $0x1d0] sm:$0xff]
    %v225 = vld [vmem:[#allocation4 + $0x1d8] sm:$0xff]
    %v226 = vld [vmem:[#allocation4 + $0x1e0] sm:$0xff]
    %v227 = vld [vmem:[#allocation4 + $0x1e8] sm:$0xff]
    %v228 = vld [vmem:[#allocation4 + $0x1f0] sm:$0xff]
    %v229 = vld [vmem:[#allocation4 + $0x1f8] sm:$0xff]
    %v230 = vld [vmem:[#allocation4 + $0x200] sm:$0xff]
    %v231 = vld [vmem:[#allocation4 + $0x208] sm:$0xff]
    %v232 = vld [vmem:[#allocation4 + $0x210] sm:$0xff]
    %v233 = vld [vmem:[#allocation4 + $0x218] sm:$0xff]
    %v234 = vld [vmem:[#allocation4 + $0x220] sm:$0xff]
    %v235 = vld [vmem:[#allocation4 + $0x228] sm:$0xff]
    %v236 = vld [vmem:[#allocation4 + $0x230] sm:$0xff]
    %v237 = vld [vmem:[#allocation4 + $0x238] sm:$0xff]
    %v238 = vld [vmem:[#allocation4 + $0x240] sm:$0xff]
    %v239 = vld [vmem:[#allocation4 + $0x248] sm:$0xff]
    %v240 = vld [vmem:[#allocation4 + $0x250] sm:$0xff]
    %v241 = vld [vmem:[#allocation4 + $0x258] sm:$0xff]
    %v242 = vld [vmem:[#allocation4 + $0x260] sm:$0xff]
    %v243 = vld [vmem:[#allocation4 + $0x268] sm:$0xff]
    %v244 = vld [vmem:[#allocation4 + $0x270] sm:$0xff]
    %v245 = vld [vmem:[#allocation4 + $0x278] sm:$0xff]
    %v246 = vld [vmem:[#allocation4 + $0x280] sm:$0xff]
    %v247 = vld [vmem:[#allocation4 + $0x288] sm:$0xff]
    %v248 = vld [vmem:[#allocation4 + $0x290] sm:$0xff]
    %v249 = vld [vmem:[#allocation4 + $0x298] sm:$0xff]
    %v250 = vld [vmem:[#allocation4 + $0x2a0] sm:$0xff]
    %v251 = vld [vmem:[#allocation4 + $0x2a8] sm:$0xff]
    %v252 = vld [vmem:[#allocation4 + $0x2b0] sm:$0xff]
    %v253 = vld [vmem:[#allocation4 + $0x2b8] sm:$0xff]
    %v254 = vld [vmem:[#allocation4 + $0x2c0] sm:$0xff]
    %v255 = vld [vmem:[#allocation4 + $0x2c8] sm:$0xff]
    %v256 = vld [vmem:[#allocation4 + $0x2d0] sm:$0xff]
    %v257 = vld [vmem:[#allocation4 + $0x2d8] sm:$0xff]
    %v258 = vld [vmem:[#allocation4 + $0x2e0] sm:$0xff]
    %v259 = vld [vmem:[#allocation4 + $0x2e8] sm:$0xff]
    %v260 = vld [vmem:[#allocation4 + $0x2f0] sm:$0xff]
    %v261 = vld [vmem:[#allocation4 + $0x2f8] sm:$0xff]
    %v262 = vld [vmem:[#allocation4 + $0x300] sm:$0xff]
    %v263 = vld [vmem:[#allocation4 + $0x308] sm:$0xff]
    %v264 = vld [vmem:[#allocation4 + $0x310] sm:$0xff]
    %v265 = vld [vmem:[#allocation4 + $0x318] sm:$0xff]
    %v266 = vld [vmem:[#allocation4 + $0x320] sm:$0xff]
    %v267 = vld [vmem:[#allocation4 + $0x328] sm:$0xff]
    %v268 = vld [vmem:[#allocation4 + $0x330] sm:$0xff]
    %v269 = vld [vmem:[#allocation4 + $0x338] sm:$0xff]
    %v270 = vld [vmem:[#allocation4 + $0x340] sm:$0xff]
    %v271 = vld [vmem:[#allocation4 + $0x348] sm:$0xff]
    %v272 = vld [vmem:[#allocation4 + $0x350] sm:$0xff]
    %v273 = vld [vmem:[#allocation4 + $0x358] sm:$0xff]
    %v274 = vld [vmem:[#allocation4 + $0x360] sm:$0xff]
    %v275 = vld [vmem:[#allocation4 + $0x368] sm:$0xff]
    %v276 = vld [vmem:[#allocation4 + $0x370] sm:$0xff]
    %v277 = vld [vmem:[#allocation4 + $0x378] sm:$0xff]
    %v278 = vld [vmem:[#allocation4 + $0x380] sm:$0xff]
    %v279 = vld [vmem:[#allocation4 + $0x388] sm:$0xff]
    %v280 = vld [vmem:[#allocation4 + $0x390] sm:$0xff]
    %v281 = vld [vmem:[#allocation4 + $0x398] sm:$0xff]
    %v282 = vld [vmem:[#allocation4 + $0x3a0] sm:$0xff]
    %v283 = vld [vmem:[#allocation4 + $0x3a8] sm:$0xff]
    %v284 = vld [vmem:[#allocation4 + $0x3b0] sm:$0xff]
    %v285 = vld [vmem:[#allocation4 + $0x3b8] sm:$0xff]
    %v286 = vld [vmem:[#allocation4 + $0x3c0] sm:$0xff]
    %v287 = vld [vmem:[#allocation4 + $0x3c8] sm:$0xff]
    %v288 = vld [vmem:[#allocation4 + $0x3d0] sm:$0xff]
    %v289 = vld [vmem:[#allocation4 + $0x3d8] sm:$0xff]
    %v290 = vld [vmem:[#allocation4 + $0x3e0] sm:$0xff]
    %v291 = vld [vmem:[#allocation4 + $0x3e8] sm:$0xff]
    %v292 = vld [vmem:[#allocation4 + $0x3f0] sm:$0xff]
    %v293 = vld [vmem:[#allocation4 + $0x3f8] sm:$0xff]
    %v294 = vld [vmem:[#allocation4 + $0x400] sm:$0xff]
    %v295 = vld [vmem:[#allocation4 + $0x408] sm:$0xff]
    %v296 = vld [vmem:[#allocation4 + $0x410] sm:$0xff]
    %v297 = vld [vmem:[#allocation4 + $0x418] sm:$0xff]
    %v298 = vld [vmem:[#allocation4 + $0x420] sm:$0xff]
    %v299 = vld [vmem:[#allocation4 + $0x428] sm:$0xff]
    %v300 = vld [vmem:[#allocation4 + $0x430] sm:$0xff]
    %v301 = vld [vmem:[#allocation4 + $0x438] sm:$0xff]
    %v302 = vld [vmem:[#allocation4 + $0x440] sm:$0xff]
    %v303 = vld [vmem:[#allocation4 + $0x448] sm:$0xff]
    %v304 = vld [vmem:[#allocation4 + $0x450] sm:$0xff]
    %v305 = vld [vmem:[#allocation4 + $0x458] sm:$0xff]
    %v306 = vld [vmem:[#allocation4 + $0x460] sm:$0xff]
    %v307 = vld [vmem:[#allocation4 + $0x468] sm:$0xff]
    %v308 = vld [vmem:[#allocation4 + $0x470] sm:$0xff]
    %v309 = vld [vmem:[#allocation4 + $0x478] sm:$0xff]
    %v310 = vld [vmem:[#allocation4 + $0x480] sm:$0xff]
    %v311 = vld [vmem:[#allocation4 + $0x488] sm:$0xff]
    %v312 = vld [vmem:[#allocation4 + $0x490] sm:$0xff]
    %v313 = vld [vmem:[#allocation4 + $0x498] sm:$0xff]
    %v314 = vld [vmem:[#allocation4 + $0x4a0] sm:$0xff]
    %v315 = vld [vmem:[#allocation4 + $0x4a8] sm:$0xff]
    %v316 = vld [vmem:[#allocation4 + $0x4b0] sm:$0xff]
    %v317 = vld [vmem:[#allocation4 + $0x4b8] sm:$0xff]
    %v318 = vld [vmem:[#allocation4 + $0x4c0] sm:$0xff]
    %v319 = vld [vmem:[#allocation4 + $0x4c8] sm:$0xff]
    %v320 = vld [vmem:[#allocation4 + $0x4d0] sm:$0xff]
    %v321 = vld [vmem:[#allocation4 + $0x4d8] sm:$0xff]
    %v322 = vld [vmem:[#allocation4 + $0x4e0] sm:$0xff]
    %v323 = vld [vmem:[#allocation4 + $0x4e8] sm:$0xff]
    %v324 = vld [vmem:[#allocation4 + $0x4f0] sm:$0xff]
    %v325 = vld [vmem:[#allocation4 + $0x4f8] sm:$0xff]
    %v326 = vld [vmem:[#allocation4 + $0x500] sm:$0xff]
    %v327 = vld [vmem:[#allocation4 + $0x508] sm:$0xff]
    %v328 = vld [vmem:[#allocation4 + $0x510] sm:$0xff]
    %v329 = vld [vmem:[#allocation4 + $0x518] sm:$0xff]
    %v330 = vld [vmem:[#allocation4 + $0x520] sm:$0xff]
    %v331 = vld [vmem:[#allocation4 + $0x528] sm:$0xff]
    %v332 = vld [vmem:[#allocation4 + $0x530] sm:$0xff]
    %v333 = vld [vmem:[#allocation4 + $0x538] sm:$0xff]
    %v334 = vld [vmem:[#allocation4 + $0x540] sm:$0xff]
    %v335 = vld [vmem:[#allocation4 + $0x548] sm:$0xff]
    %v336 = vld [vmem:[#allocation4 + $0x550] sm:$0xff]
    %v337 = vld [vmem:[#allocation4 + $0x558] sm:$0xff]
    %v338 = vld [vmem:[#allocation4 + $0x560] sm:$0xff]
    %v339 = vld [vmem:[#allocation4 + $0x568] sm:$0xff]
    %v340 = vld [vmem:[#allocation4 + $0x570] sm:$0xff]
    %v341 = vld [vmem:[#allocation4 + $0x578] sm:$0xff]
    %v342 = vld [vmem:[#allocation4 + $0x580] sm:$0xff]
    %v343 = vld [vmem:[#allocation4 + $0x588] sm:$0xff]
    %v344 = vld [vmem:[#allocation4 + $0x590] sm:$0xff]
    %v345 = vld [vmem:[#allocation4 + $0x598] sm:$0xff]
    %v346 = vld [vmem:[#allocation4 + $0x5a0] sm:$0xff]
    %v347 = vld [vmem:[#allocation4 + $0x5a8] sm:$0xff]
    %v348 = vld [vmem:[#allocation4 + $0x5b0] sm:$0xff]
    %v349 = vld [vmem:[#allocation4 + $0x5b8] sm:$0xff]
    %v350 = vld [vmem:[#allocation4 + $0x5c0] sm:$0xff]
    %v351 = vld [vmem:[#allocation4 + $0x5c8] sm:$0xff]
    %v352 = vld [vmem:[#allocation4 + $0x5d0] sm:$0xff]
    %v353 = vld [vmem:[#allocation4 + $0x5d8] sm:$0xff]
    %v354 = vld [vmem:[#allocation4 + $0x5e0] sm:$0xff]
    %v355 = vld [vmem:[#allocation4 + $0x5e8] sm:$0xff]
    %v356 = vld [vmem:[#allocation4 + $0x5f0] sm:$0xff]
    %v357 = vld [vmem:[#allocation4 + $0x5f8] sm:$0xff]
    %v358 = vld [vmem:[#allocation4 + $0x600] sm:$0xff]
    %v359 = vld [vmem:[#allocation4 + $0x608] sm:$0xff]
    %v360 = vld [vmem:[#allocation4 + $0x610] sm:$0xff]
    %v361 = vld [vmem:[#allocation4 + $0x618] sm:$0xff]
    %v362 = vld [vmem:[#allocation4 + $0x620] sm:$0xff]
    %v363 = vld [vmem:[#allocation4 + $0x628] sm:$0xff]
    %v364 = vld [vmem:[#allocation4 + $0x630] sm:$0xff]
    %v365 = vld [vmem:[#allocation4 + $0x638] sm:$0xff]
    %v366 = vld [vmem:[#allocation4 + $0x640] sm:$0xff]
    %v367 = vld [vmem:[#allocation4 + $0x648] sm:$0xff]
    %v368 = vld [vmem:[#allocation4 + $0x650] sm:$0xff]
    %v369 = vld [vmem:[#allocation4 + $0x658] sm:$0xff]
    %v370 = vld [vmem:[#allocation4 + $0x660] sm:$0xff]
    %v371 = vld [vmem:[#allocation4 + $0x668] sm:$0xff]
    %v372 = vld [vmem:[#allocation4 + $0x670] sm:$0xff]
    %v373 = vld [vmem:[#allocation4 + $0x678] sm:$0xff]
    %v374 = vld [vmem:[#allocation4 + $0x680] sm:$0xff]
    %v375 = vld [vmem:[#allocation4 + $0x688] sm:$0xff]
    %v376 = vld [vmem:[#allocation4 + $0x690] sm:$0xff]
    %v377 = vld [vmem:[#allocation4 + $0x698] sm:$0xff]
    %v378 = vld [vmem:[#allocation4 + $0x6a0] sm:$0xff]
    %v379 = vld [vmem:[#allocation4 + $0x6a8] sm:$0xff]
    %v380 = vld [vmem:[#allocation4 + $0x6b0] sm:$0xff]
    %v381 = vld [vmem:[#allocation4 + $0x6b8] sm:$0xff]
    %v382 = vld [vmem:[#allocation4 + $0x6c0] sm:$0xff]
    %v383 = vld [vmem:[#allocation4 + $0x6c8] sm:$0xff]
    %v384 = vld [vmem:[#allocation4 + $0x6d0] sm:$0xff]
    %v385 = vld [vmem:[#allocation4 + $0x6d8] sm:$0xff]
    %v386 = vld [vmem:[#allocation4 + $0x6e0] sm:$0xff]
    %v387 = vld [vmem:[#allocation4 + $0x6e8] sm:$0xff]
    %v388 = vld [vmem:[#allocation4 + $0x6f0] sm:$0xff]
    %v389 = vld [vmem:[#allocation4 + $0x6f8] sm:$0xff]
    %v390 = vld [vmem:[#allocation4 + $0x700] sm:$0xff]
    %v391 = vld [vmem:[#allocation4 + $0x708] sm:$0xff]
    %v392 = vld [vmem:[#allocation4 + $0x710] sm:$0xff]
    %v393 = vld [vmem:[#allocation4 + $0x718] sm:$0xff]
    %v394 = vld [vmem:[#allocation4 + $0x720] sm:$0xff]
    %v395 = vld [vmem:[#allocation4 + $0x728] sm:$0xff]
    %v396 = vld [vmem:[#allocation4 + $0x730] sm:$0xff]
    %v397 = vld [vmem:[#allocation4 + $0x738] sm:$0xff]
    %v398 = vld [vmem:[#allocation4 + $0x740] sm:$0xff]
    %v399 = vld [vmem:[#allocation4 + $0x748] sm:$0xff]
    %v400 = vld [vmem:[#allocation4 + $0x750] sm:$0xff]
    %v401 = vld [vmem:[#allocation4 + $0x758] sm:$0xff]
    %v402 = vld [vmem:[#allocation4 + $0x760] sm:$0xff]
    %v403 = vld [vmem:[#allocation4 + $0x768] sm:$0xff]
    %v404 = vld [vmem:[#allocation4 + $0x770] sm:$0xff]
    %v405 = vld [vmem:[#allocation4 + $0x778] sm:$0xff]
    %v406 = vld [vmem:[#allocation4 + $0x780] sm:$0xff]
    %v407 = vld [vmem:[#allocation4 + $0x788] sm:$0xff]
    %v408 = vld [vmem:[#allocation4 + $0x790] sm:$0xff]
    %v409 = vld [vmem:[#allocation4 + $0x798] sm:$0xff]
    %v410 = vld [vmem:[#allocation4 + $0x7a0] sm:$0xff]
    %v411 = vld [vmem:[#allocation4 + $0x7a8] sm:$0xff]
    %v412 = vld [vmem:[#allocation4 + $0x7b0] sm:$0xff]
    %v413 = vld [vmem:[#allocation4 + $0x7b8] sm:$0xff]
    %v414 = vld [vmem:[#allocation4 + $0x7c0] sm:$0xff]
    %v415 = vld [vmem:[#allocation4 + $0x7c8] sm:$0xff]
    %v416 = vld [vmem:[#allocation4 + $0x7d0] sm:$0xff]
    %v417 = vld [vmem:[#allocation4 + $0x7d8] sm:$0xff]
    %v418 = vld [vmem:[#allocation4 + $0x7e0] sm:$0xff]
    %v419 = vld [vmem:[#allocation4 + $0x7e8] sm:$0xff]
    %v420 = vld [vmem:[#allocation4 + $0x7f0] sm:$0xff]
    %v421 = vld [vmem:[#allocation4 + $0x7f8] sm:$0xff]
    %v422 = vld [vmem:[#allocation4 + $0x800] sm:$0xff]
    %v423 = vld [vmem:[#allocation4 + $0x808] sm:$0xff]
    %v424 = vld [vmem:[#allocation4 + $0x810] sm:$0xff]
    %v425 = vld [vmem:[#allocation4 + $0x818] sm:$0xff]
    %v426 = vld [vmem:[#allocation4 + $0x820] sm:$0xff]
    %v427 = vld [vmem:[#allocation4 + $0x828] sm:$0xff]
    %v428 = vld [vmem:[#allocation4 + $0x830] sm:$0xff]
    %v429 = vld [vmem:[#allocation4 + $0x838] sm:$0xff]
    %v430 = vld [vmem:[#allocation4 + $0x840] sm:$0xff]
    %v431 = vld [vmem:[#allocation4 + $0x848] sm:$0xff]
    %v432 = vld [vmem:[#allocation4 + $0x850] sm:$0xff]
    %v433 = vld [vmem:[#allocation4 + $0x858] sm:$0xff]
    %v434 = vld [vmem:[#allocation4 + $0x860] sm:$0xff]
    %v435 = vld [vmem:[#allocation4 + $0x868] sm:$0xff]
    %v436 = vld [vmem:[#allocation4 + $0x870] sm:$0xff]
    %v437 = vld [vmem:[#allocation4 + $0x878] sm:$0xff]
    %v438 = vld [vmem:[#allocation4 + $0x880] sm:$0xff]
    %v439 = vld [vmem:[#allocation4 + $0x888] sm:$0xff]
    %v440 = vld [vmem:[#allocation4 + $0x890] sm:$0xff]
    %v441 = vld [vmem:[#allocation4 + $0x898] sm:$0xff]
    %v442 = vld [vmem:[#allocation4 + $0x8a0] sm:$0xff]
    %v443 = vld [vmem:[#allocation4 + $0x8a8] sm:$0xff]
    %v444 = vld [vmem:[#allocation4 + $0x8b0] sm:$0xff]
    %v445 = vld [vmem:[#allocation4 + $0x8b8] sm:$0xff]
    %v446 = vld [vmem:[#allocation4 + $0x8c0] sm:$0xff]
    %v447 = vld [vmem:[#allocation4 + $0x8c8] sm:$0xff]
    %v448 = vld [vmem:[#allocation4 + $0x8d0] sm:$0xff]
    %v449 = vld [vmem:[#allocation4 + $0x8d8] sm:$0xff]
    %v450 = vld [vmem:[#allocation4 + $0x8e0] sm:$0xff]
    %v451 = vld [vmem:[#allocation4 + $0x8e8] sm:$0xff]
    %v452 = vld [vmem:[#allocation4 + $0x8f0] sm:$0xff]
    %v453 = vld [vmem:[#allocation4 + $0x8f8] sm:$0xff]
    %v454 = vld [vmem:[#allocation4 + $0x900] sm:$0xff]
    %v455 = vld [vmem:[#allocation4 + $0x908] sm:$0xff]
    %v456 = vld [vmem:[#allocation4 + $0x910] sm:$0xff]
    %v457 = vld [vmem:[#allocation4 + $0x918] sm:$0xff]
    %v458 = vld [vmem:[#allocation4 + $0x920] sm:$0xff]
    %v459 = vld [vmem:[#allocation4 + $0x928] sm:$0xff]
    %v460 = vld [vmem:[#allocation4 + $0x930] sm:$0xff]
    %v461 = vld [vmem:[#allocation4 + $0x938] sm:$0xff]
    %v462 = vld [vmem:[#allocation4 + $0x940] sm:$0xff]
    %v463 = vld [vmem:[#allocation4 + $0x948] sm:$0xff]
    %v464 = vld [vmem:[#allocation4 + $0x950] sm:$0xff]
    %v465 = vld [vmem:[#allocation4 + $0x958] sm:$0xff]
    %v466 = vld [vmem:[#allocation4 + $0x960] sm:$0xff]
    %v467 = vld [vmem:[#allocation4 + $0x968] sm:$0xff]
    %v468 = vld [vmem:[#allocation4 + $0x970] sm:$0xff]
    %v469 = vld [vmem:[#allocation4 + $0x978] sm:$0xff]
    %v470 = vld [vmem:[#allocation4 + $0x980] sm:$0xff]
    %v471 = vld [vmem:[#allocation4 + $0x988] sm:$0xff]
    %v472 = vld [vmem:[#allocation4 + $0x990] sm:$0xff]
    %v473 = vld [vmem:[#allocation4 + $0x998] sm:$0xff]
    %v474 = vld [vmem:[#allocation4 + $0x9a0] sm:$0xff]
    %v475 = vld [vmem:[#allocation4 + $0x9a8] sm:$0xff]
    %v476 = vld [vmem:[#allocation4 + $0x9b0] sm:$0xff]
    %v477 = vld [vmem:[#allocation4 + $0x9b8] sm:$0xff]
    %v478 = vld [vmem:[#allocation4 + $0x9c0] sm:$0xff]
    %v479 = vld [vmem:[#allocation4 + $0x9c8] sm:$0xff]
    %v480 = vld [vmem:[#allocation4 + $0x9d0] sm:$0xff]
    %v481 = vld [vmem:[#allocation4 + $0x9d8] sm:$0xff]
    %v482 = vld [vmem:[#allocation4 + $0x9e0] sm:$0xff]
    %v483 = vld [vmem:[#allocation4 + $0x9e8] sm:$0xff]
    %v484 = vld [vmem:[#allocation4 + $0x9f0] sm:$0xff]
    %v485 = vld [vmem:[#allocation4 + $0x9f8] sm:$0xff]
    %v486 = vld [vmem:[#allocation4 + $0xa00] sm:$0xff]
    %v487 = vld [vmem:[#allocation4 + $0xa08] sm:$0xff]
    %v488 = vld [vmem:[#allocation4 + $0xa10] sm:$0xff]
    %v489 = vld [vmem:[#allocation4 + $0xa18] sm:$0xff]
    %v490 = vld [vmem:[#allocation4 + $0xa20] sm:$0xff]
    %v491 = vld [vmem:[#allocation4 + $0xa28] sm:$0xff]
    %v492 = vld [vmem:[#allocation4 + $0xa30] sm:$0xff]
    %v493 = vld [vmem:[#allocation4 + $0xa38] sm:$0xff]
    %v494 = vld [vmem:[#allocation4 + $0xa40] sm:$0xff]
    %v495 = vld [vmem:[#allocation4 + $0xa48] sm:$0xff]
    %v496 = vld [vmem:[#allocation4 + $0xa50] sm:$0xff]
    %v497 = vld [vmem:[#allocation4 + $0xa58] sm:$0xff]
    %v498 = vld [vmem:[#allocation4 + $0xa60] sm:$0xff]
    %v499 = vld [vmem:[#allocation4 + $0xa68] sm:$0xff]
    %v500 = vld [vmem:[#allocation4 + $0xa70] sm:$0xff]
    %v501 = vld [vmem:[#allocation4 + $0xa78] sm:$0xff]
    %v502 = vld [vmem:[#allocation4 + $0xa80] sm:$0xff]
    %v503 = vld [vmem:[#allocation4 + $0xa88] sm:$0xff]
    %v504 = vld [vmem:[#allocation4 + $0xa90] sm:$0xff]
    %v505 = vld [vmem:[#allocation4 + $0xa98] sm:$0xff]
    %v506 = vld [vmem:[#allocation4 + $0xaa0] sm:$0xff]
    %v507 = vld [vmem:[#allocation4 + $0xaa8] sm:$0xff]
    %v508 = vld [vmem:[#allocation4 + $0xab0] sm:$0xff]
    %v509 = vld [vmem:[#allocation4 + $0xab8] sm:$0xff]
    %v510 = vld [vmem:[#allocation4 + $0xac0] sm:$0xff]
    %v511 = vld [vmem:[#allocation4 + $0xac8] sm:$0xff]
    %v512 = vld [vmem:[#allocation4 + $0xad0] sm:$0xff]
    %v513 = vld [vmem:[#allocation4 + $0xad8] sm:$0xff]
    %v514 = vld [vmem:[#allocation4 + $0xae0] sm:$0xff]
    %v515 = vld [vmem:[#allocation4 + $0xae8] sm:$0xff]
    %v516 = vld [vmem:[#allocation4 + $0xaf0] sm:$0xff]
    %v517 = vld [vmem:[#allocation4 + $0xaf8] sm:$0xff]
    %v518 = vld [vmem:[#allocation4 + $0xb00] sm:$0xff]
    %v519 = vld [vmem:[#allocation4 + $0xb08] sm:$0xff]
    %v520 = vld [vmem:[#allocation4 + $0xb10] sm:$0xff]
    %v521 = vld [vmem:[#allocation4 + $0xb18] sm:$0xff]
    %v522 = vld [vmem:[#allocation4 + $0xb20] sm:$0xff]
    %v523 = vld [vmem:[#allocation4 + $0xb28] sm:$0xff]
    %v524 = vld [vmem:[#allocation4 + $0xb30] sm:$0xff]
    %v525 = vld [vmem:[#allocation4 + $0xb38] sm:$0xff]
    %v526 = vld [vmem:[#allocation4 + $0xb40] sm:$0xff]
    %v527 = vld [vmem:[#allocation4 + $0xb48] sm:$0xff]
    %v528 = vld [vmem:[#allocation4 + $0xb50] sm:$0xff]
    %v529 = vld [vmem:[#allocation4 + $0xb58] sm:$0xff]
    %v530 = vld [vmem:[#allocation4 + $0xb60] sm:$0xff]
    %v531 = vld [vmem:[#allocation4 + $0xb68] sm:$0xff]
    %v532 = vld [vmem:[#allocation4 + $0xb70] sm:$0xff]
    %v533 = vld [vmem:[#allocation4 + $0xb78] sm:$0xff]
    %v534 = vld [vmem:[#allocation4 + $0xb80] sm:$0xff]
    %v535 = vld [vmem:[#allocation4 + $0xb88] sm:$0xff]
    %v536 = vld [vmem:[#allocation4 + $0xb90] sm:$0xff]
    %v537 = vld [vmem:[#allocation4 + $0xb98] sm:$0xff]
    %v538 = vld [vmem:[#allocation4 + $0xba0] sm:$0xff]
    %v539 = vld [vmem:[#allocation4 + $0xba8] sm:$0xff]
    %v540 = vld [vmem:[#allocation4 + $0xbb0] sm:$0xff]
    %v541 = vld [vmem:[#allocation4 + $0xbb8] sm:$0xff]
    %v542 = vld [vmem:[#allocation4 + $0xbc0] sm:$0xff]
    %v543 = vld [vmem:[#allocation4 + $0xbc8] sm:$0xff]
    %v544 = vld [vmem:[#allocation4 + $0xbd0] sm:$0xff]
    %v545 = vld [vmem:[#allocation4 + $0xbd8] sm:$0xff]
    %v546 = vld [vmem:[#allocation4 + $0xbe0] sm:$0xff]
    %v547 = vld [vmem:[#allocation4 + $0xbe8] sm:$0xff]
    %v548 = vld [vmem:[#allocation4 + $0xbf0] sm:$0xff]
    %v549 = vld [vmem:[#allocation4 + $0xbf8] sm:$0xff]
    %v550 = vld [vmem:[#allocation4 + $0xc00] sm:$0xff]
    %v551 = vld [vmem:[#allocation4 + $0xc08] sm:$0xff]
    %v552 = vld [vmem:[#allocation4 + $0xc10] sm:$0xff]
    %v553 = vld [vmem:[#allocation4 + $0xc18] sm:$0xff]
    %v554 = vld [vmem:[#allocation4 + $0xc20] sm:$0xff]
    %v555 = vld [vmem:[#allocation4 + $0xc28] sm:$0xff]
    %v556 = vld [vmem:[#allocation4 + $0xc30] sm:$0xff]
    %v557 = vld [vmem:[#allocation4 + $0xc38] sm:$0xff]
    %v558 = vld [vmem:[#allocation4 + $0xc40] sm:$0xff]
    %v559 = vld [vmem:[#allocation4 + $0xc48] sm:$0xff]
    %v560 = vld [vmem:[#allocation4 + $0xc50] sm:$0xff]
    %v561 = vld [vmem:[#allocation4 + $0xc58] sm:$0xff]
    %v562 = vld [vmem:[#allocation4 + $0xc60] sm:$0xff]
    %v563 = vld [vmem:[#allocation4 + $0xc68] sm:$0xff]
    %v564 = vld [vmem:[#allocation4 + $0xc70] sm:$0xff]
    %v565 = vld [vmem:[#allocation4 + $0xc78] sm:$0xff]
    %v566 = vld [vmem:[#allocation4 + $0xc80] sm:$0xff]
    %v567 = vld [vmem:[#allocation4 + $0xc88] sm:$0xff]
    %v568 = vld [vmem:[#allocation4 + $0xc90] sm:$0xff]
    %v569 = vld [vmem:[#allocation4 + $0xc98] sm:$0xff]
    %v570 = vld [vmem:[#allocation4 + $0xca0] sm:$0xff]
    %v571 = vld [vmem:[#allocation4 + $0xca8] sm:$0xff]
    %v572 = vld [vmem:[#allocation4 + $0xcb0] sm:$0xff]
    %v573 = vld [vmem:[#allocation4 + $0xcb8] sm:$0xff]
    %v574 = vld [vmem:[#allocation4 + $0xcc0] sm:$0xff]
    %v575 = vld [vmem:[#allocation4 + $0xcc8] sm:$0xff]
    %v576 = vld [vmem:[#allocation4 + $0xcd0] sm:$0xff]
    %v577 = vld [vmem:[#allocation4 + $0xcd8] sm:$0xff]
    %v578 = vld [vmem:[#allocation4 + $0xce0] sm:$0xff]
    %v579 = vld [vmem:[#allocation4 + $0xce8] sm:$0xff]
    %v580 = vld [vmem:[#allocation4 + $0xcf0] sm:$0xff]
    %v581 = vld [vmem:[#allocation4 + $0xcf8] sm:$0xff]
    %v582 = vld [vmem:[#allocation4 + $0xd00] sm:$0xff]
    %v583 = vld [vmem:[#allocation4 + $0xd08] sm:$0xff]
    %v584 = vld [vmem:[#allocation4 + $0xd10] sm:$0xff]
    %v585 = vld [vmem:[#allocation4 + $0xd18] sm:$0xff]
    %v586 = vld [vmem:[#allocation4 + $0xd20] sm:$0xff]
    %v587 = vld [vmem:[#allocation4 + $0xd28] sm:$0xff]
    %v588 = vld [vmem:[#allocation4 + $0xd30] sm:$0xff]
    %v589 = vld [vmem:[#allocation4 + $0xd38] sm:$0xff]
    %v590 = vld [vmem:[#allocation4 + $0xd40] sm:$0xff]
    %v591 = vld [vmem:[#allocation4 + $0xd48] sm:$0xff]
    %v592 = vld [vmem:[#allocation4 + $0xd50] sm:$0xff]
    %v593 = vld [vmem:[#allocation4 + $0xd58] sm:$0xff]
    %v594 = vld [vmem:[#allocation4 + $0xd60] sm:$0xff]
    %v595 = vld [vmem:[#allocation4 + $0xd68] sm:$0xff]
    %v596 = vld [vmem:[#allocation4 + $0xd70] sm:$0xff]
    %v597 = vld [vmem:[#allocation4 + $0xd78] sm:$0xff]
    %v598 = vld [vmem:[#allocation4 + $0xd80] sm:$0xff]
    %v599 = vld [vmem:[#allocation4 + $0xd88] sm:$0xff]
    %v600 = vld [vmem:[#allocation4 + $0xd90] sm:$0xff]
    %v601 = vld [vmem:[#allocation4 + $0xd98] sm:$0xff]
    %v602 = vld [vmem:[#allocation4 + $0xda0] sm:$0xff]
    %v603 = vld [vmem:[#allocation4 + $0xda8] sm:$0xff]
    %v604 = vld [vmem:[#allocation4 + $0xdb0] sm:$0xff]
    %v605 = vld [vmem:[#allocation4 + $0xdb8] sm:$0xff]
    %v606 = vld [vmem:[#allocation4 + $0xdc0] sm:$0xff]
    %v607 = vld [vmem:[#allocation4 + $0xdc8] sm:$0xff]
    %v608 = vld [vmem:[#allocation4 + $0xdd0] sm:$0xff]
    %v609 = vld [vmem:[#allocation4 + $0xdd8] sm:$0xff]
    %v610 = vld [vmem:[#allocation4 + $0xde0] sm:$0xff]
    %v611 = vld [vmem:[#allocation4 + $0xde8] sm:$0xff]
    %v612 = vld [vmem:[#allocation4 + $0xdf0] sm:$0xff]
    %v613 = vld [vmem:[#allocation4 + $0xdf8] sm:$0xff]
    %v614 = vld [vmem:[#allocation4 + $0xe00] sm:$0xff]
    %v615 = vld [vmem:[#allocation4 + $0xe08] sm:$0xff]
    %v616 = vld [vmem:[#allocation4 + $0xe10] sm:$0xff]
    %v617 = vld [vmem:[#allocation4 + $0xe18] sm:$0xff]
    %v618 = vld [vmem:[#allocation4 + $0xe20] sm:$0xff]
    %v619 = vld [vmem:[#allocation4 + $0xe28] sm:$0xff]
    %v620 = vld [vmem:[#allocation4 + $0xe30] sm:$0xff]
    %v621 = vld [vmem:[#allocation4 + $0xe38] sm:$0xff]
    %v622 = vld [vmem:[#allocation4 + $0xe40] sm:$0xff]
    %v623 = vld [vmem:[#allocation4 + $0xe48] sm:$0xff]
    %v624 = vld [vmem:[#allocation4 + $0xe50] sm:$0xff]
    %v625 = vld [vmem:[#allocation4 + $0xe58] sm:$0xff]
    %v626 = vld [vmem:[#allocation4 + $0xe60] sm:$0xff]
    %v627 = vld [vmem:[#allocation4 + $0xe68] sm:$0xff]
    %v628 = vld [vmem:[#allocation4 + $0xe70] sm:$0xff]
    %v629 = vld [vmem:[#allocation4 + $0xe78] sm:$0xff]
    %v630 = vld [vmem:[#allocation4 + $0xe80] sm:$0xff]
    %v631 = vld [vmem:[#allocation4 + $0xe88] sm:$0xff]
    %v632 = vld [vmem:[#allocation4 + $0xe90] sm:$0xff]
    %v633 = vld [vmem:[#allocation4 + $0xe98] sm:$0xff]
    %v634 = vld [vmem:[#allocation4 + $0xea0] sm:$0xff]
    %v635 = vld [vmem:[#allocation4 + $0xea8] sm:$0xff]
    %v636 = vld [vmem:[#allocation4 + $0xeb0] sm:$0xff]
    %v637 = vld [vmem:[#allocation4 + $0xeb8] sm:$0xff]
    %v638 = vld [vmem:[#allocation4 + $0xec0] sm:$0xff]
    %v639 = vld [vmem:[#allocation4 + $0xec8] sm:$0xff]
    %v640 = vld [vmem:[#allocation4 + $0xed0] sm:$0xff]
    %v641 = vld [vmem:[#allocation4 + $0xed8] sm:$0xff]
    %v642 = vld [vmem:[#allocation4 + $0xee0] sm:$0xff]
    %v643 = vld [vmem:[#allocation4 + $0xee8] sm:$0xff]
    %v644 = vld [vmem:[#allocation4 + $0xef0] sm:$0xff]
    %v645 = vld [vmem:[#allocation4 + $0xef8] sm:$0xff]
    %v646 = vld [vmem:[#allocation4 + $0xf00] sm:$0xff]
    %v647 = vld [vmem:[#allocation4 + $0xf08] sm:$0xff]
    %v648 = vld [vmem:[#allocation4 + $0xf10] sm:$0xff]
    %v649 = vld [vmem:[#allocation4 + $0xf18] sm:$0xff]
    %v650 = vld [vmem:[#allocation4 + $0xf20] sm:$0xff]
    %v651 = vld [vmem:[#allocation4 + $0xf28] sm:$0xff]
    %v652 = vld [vmem:[#allocation4 + $0xf30] sm:$0xff]
    %v653 = vld [vmem:[#allocation4 + $0xf38] sm:$0xff]
    %v654 = vld [vmem:[#allocation4 + $0xf40] sm:$0xff]
    %v655 = vld [vmem:[#allocation4 + $0xf48] sm:$0xff]
    %v656 = vld [vmem:[#allocation4 + $0xf50] sm:$0xff]
    %v657 = vld [vmem:[#allocation4 + $0xf58] sm:$0xff]
    %v658 = vld [vmem:[#allocation4 + $0xf60] sm:$0xff]
    %v659 = vld [vmem:[#allocation4 + $0xf68] sm:$0xff]
    %v660 = vld [vmem:[#allocation4 + $0xf70] sm:$0xff]
    %v661 = vld [vmem:[#allocation4 + $0xf78] sm:$0xff]
    %v662 = vld [vmem:[#allocation4 + $0xf80] sm:$0xff]
    %v663 = vld [vmem:[#allocation4 + $0xf88] sm:$0xff]
    %v664 = vld [vmem:[#allocation4 + $0xf90] sm:$0xff]
    %v665 = vld [vmem:[#allocation4 + $0xf98] sm:$0xff]
    %v666 = vld [vmem:[#allocation4 + $0xfa0] sm:$0xff]
    %v667 = vld [vmem:[#allocation4 + $0xfa8] sm:$0xff]
    %v668 = vld [vmem:[#allocation4 + $0xfb0] sm:$0xff]
    %v669 = vld [vmem:[#allocation4 + $0xfb8] sm:$0xff]
    %v670 = vld [vmem:[#allocation4 + $0xfc0] sm:$0xff]
    %v671 = vld [vmem:[#allocation4 + $0xfc8] sm:$0xff]
    %v672 = vld [vmem:[#allocation4 + $0xfd0] sm:$0xff]
    %v673 = vld [vmem:[#allocation4 + $0xfd8] sm:$0xff]
    %v674 = vld [vmem:[#allocation4 + $0xfe0] sm:$0xff]
    %v675 = vld [vmem:[#allocation4 + $0xfe8] sm:$0xff]
    %v676 = vld [vmem:[#allocation4 + $0xff0] sm:$0xff]
    %v677 = vld [vmem:[#allocation4 + $0xff8] sm:$0xff]
    %v678 = vld [vmem:[#allocation4 + $0x1000] sm:$0xff]
    %v679 = vld [vmem:[#allocation4 + $0x1008] sm:$0xff]
    %v680 = vld [vmem:[#allocation4 + $0x1010] sm:$0xff]
    %v681 = vld [vmem:[#allocation4 + $0x1018] sm:$0xff]
    %v682 = vld [vmem:[#allocation4 + $0x1020] sm:$0xff]
    %v683 = vld [vmem:[#allocation4 + $0x1028] sm:$0xff]
    %v684 = vld [vmem:[#allocation4 + $0x1030] sm:$0xff]
    %v685 = vld [vmem:[#allocation4 + $0x1038] sm:$0xff]
    %v686 = vld [vmem:[#allocation4 + $0x1040] sm:$0xff]
    %v687 = vld [vmem:[#allocation4 + $0x1048] sm:$0xff]
    %v688 = vld [vmem:[#allocation4 + $0x1050] sm:$0xff]
    %v689 = vld [vmem:[#allocation4 + $0x1058] sm:$0xff]
    %v690 = vld [vmem:[#allocation4 + $0x1060] sm:$0xff]
    %v691 = vld [vmem:[#allocation4 + $0x1068] sm:$0xff]
    %v692 = vld [vmem:[#allocation4 + $0x1070] sm:$0xff]
    %v693 = vld [vmem:[#allocation4 + $0x1078] sm:$0xff]
    %v694 = vld [vmem:[#allocation4 + $0x1080] sm:$0xff]
    %v695 = vld [vmem:[#allocation4 + $0x1088] sm:$0xff]
    %v696 = vld [vmem:[#allocation4 + $0x1090] sm:$0xff]
    %v697 = vld [vmem:[#allocation4 + $0x1098] sm:$0xff]
    %v698 = vld [vmem:[#allocation4 + $0x10a0] sm:$0xff]
    %v699 = vld [vmem:[#allocation4 + $0x10a8] sm:$0xff]
    %v700 = vld [vmem:[#allocation4 + $0x10b0] sm:$0xff]
    %v701 = vld [vmem:[#allocation4 + $0x10b8] sm:$0xff]
    %v702 = vld [vmem:[#allocation4 + $0x10c0] sm:$0xff]
    %v703 = vld [vmem:[#allocation4 + $0x10c8] sm:$0xff]
    %v704 = vld [vmem:[#allocation4 + $0x10d0] sm:$0xff]
    %v705 = vld [vmem:[#allocation4 + $0x10d8] sm:$0xff]
    %v706 = vld [vmem:[#allocation4 + $0x10e0] sm:$0xff]
    %v707 = vld [vmem:[#allocation4 + $0x10e8] sm:$0xff]
    %v708 = vld [vmem:[#allocation4 + $0x10f0] sm:$0xff]
    %v709 = vld [vmem:[#allocation4 + $0x10f8] sm:$0xff]
    %v710 = vld [vmem:[#allocation4 + $0x1100] sm:$0xff]
    %v711 = vld [vmem:[#allocation4 + $0x1108] sm:$0xff]
    %v712 = vld [vmem:[#allocation4 + $0x1110] sm:$0xff]
    %v713 = vld [vmem:[#allocation4 + $0x1118] sm:$0xff]
    %v714 = vld [vmem:[#allocation4 + $0x1120] sm:$0xff]
    %v715 = vld [vmem:[#allocation4 + $0x1128] sm:$0xff]
    %v716 = vld [vmem:[#allocation4 + $0x1130] sm:$0xff]
    %v717 = vld [vmem:[#allocation4 + $0x1138] sm:$0xff]
    %v718 = vld [vmem:[#allocation4 + $0x1140] sm:$0xff]
    %v719 = vld [vmem:[#allocation4 + $0x1148] sm:$0xff]
    %v720 = vld [vmem:[#allocation4 + $0x1150] sm:$0xff]
    %v721 = vld [vmem:[#allocation4 + $0x1158] sm:$0xff]
    %v722 = vld [vmem:[#allocation4 + $0x1160] sm:$0xff]
    %v723 = vld [vmem:[#allocation4 + $0x1168] sm:$0xff]
    %v724 = vld [vmem:[#allocation4 + $0x1170] sm:$0xff]
    %v725 = vld [vmem:[#allocation4 + $0x1178] sm:$0xff]
    %v726 = vld [vmem:[#allocation4 + $0x1180] sm:$0xff]
    %v727 = vld [vmem:[#allocation4 + $0x1188] sm:$0xff]
    %v728 = vld [vmem:[#allocation4 + $0x1190] sm:$0xff]
    %v729 = vld [vmem:[#allocation4 + $0x1198] sm:$0xff]
    %v730 = vld [vmem:[#allocation4 + $0x11a0] sm:$0xff]
    %v731 = vld [vmem:[#allocation4 + $0x11a8] sm:$0xff]
    %v732 = vld [vmem:[#allocation4 + $0x11b0] sm:$0xff]
    %v733 = vld [vmem:[#allocation4 + $0x11b8] sm:$0xff]
    %v734 = vld [vmem:[#allocation4 + $0x11c0] sm:$0xff]
    %v735 = vld [vmem:[#allocation4 + $0x11c8] sm:$0xff]
    %v736 = vld [vmem:[#allocation4 + $0x11d0] sm:$0xff]
    %v737 = vld [vmem:[#allocation4 + $0x11d8] sm:$0xff]
    %v738 = vld [vmem:[#allocation4 + $0x11e0] sm:$0xff]
    %v739 = vld [vmem:[#allocation4 + $0x11e8] sm:$0xff]
    %v740 = vld [vmem:[#allocation4 + $0x11f0] sm:$0xff]
    %v741 = vld [vmem:[#allocation4 + $0x11f8] sm:$0xff]
    %v742 = vld [vmem:[#allocation4 + $0x1200] sm:$0xff]
    %v743 = vld [vmem:[#allocation4 + $0x1208] sm:$0xff]
    %v744 = vld [vmem:[#allocation4 + $0x1210] sm:$0xff]
    %v745 = vld [vmem:[#allocation4 + $0x1218] sm:$0xff]
    %v746 = vld [vmem:[#allocation4 + $0x1220] sm:$0xff]
    %v747 = vld [vmem:[#allocation4 + $0x1228] sm:$0xff]
    %v748 = vld [vmem:[#allocation4 + $0x1230] sm:$0xff]
    %v749 = vld [vmem:[#allocation4 + $0x1238] sm:$0xff]
    %v750 = vld [vmem:[#allocation4 + $0x1240] sm:$0xff]
    %v751 = vld [vmem:[#allocation4 + $0x1248] sm:$0xff]
    %v752 = vld [vmem:[#allocation4 + $0x1250] sm:$0xff]
    %v753 = vld [vmem:[#allocation4 + $0x1258] sm:$0xff]
    %v754 = vld [vmem:[#allocation4 + $0x1260] sm:$0xff]
    %v755 = vld [vmem:[#allocation4 + $0x1268] sm:$0xff]
    %v756 = vld [vmem:[#allocation4 + $0x1270] sm:$0xff]
    %v757 = vld [vmem:[#allocation4 + $0x1278] sm:$0xff]
    %v758 = vld [vmem:[#allocation4 + $0x1280] sm:$0xff]
    %v759 = vld [vmem:[#allocation4 + $0x1288] sm:$0xff]
    %v760 = vld [vmem:[#allocation4 + $0x1290] sm:$0xff]
    %v761 = vld [vmem:[#allocation4 + $0x1298] sm:$0xff]
    %v762 = vld [vmem:[#allocation4 + $0x12a0] sm:$0xff]
    %v763 = vld [vmem:[#allocation4 + $0x12a8] sm:$0xff]
    %v764 = vld [vmem:[#allocation4 + $0x12b0] sm:$0xff]
    %v765 = vld [vmem:[#allocation4 + $0x12b8] sm:$0xff]
    %v766 = vld [vmem:[#allocation4 + $0x12c0] sm:$0xff]
    %v767 = vld [vmem:[#allocation4 + $0x12c8] sm:$0xff]
    %v768 = vld [vmem:[#allocation4 + $0x12d0] sm:$0xff]
    %v769 = vld [vmem:[#allocation4 + $0x12d8] sm:$0xff]
    %v770 = vld [vmem:[#allocation4 + $0x12e0] sm:$0xff]
    %v771 = vld [vmem:[#allocation4 + $0x12e8] sm:$0xff]
    %v772 = vld [vmem:[#allocation4 + $0x12f0] sm:$0xff]
    %v773 = vld [vmem:[#allocation4 + $0x12f8] sm:$0xff]
    %v774 = vld [vmem:[#allocation4 + $0x1300] sm:$0xff]
    %v775 = vld [vmem:[#allocation4 + $0x1308] sm:$0xff]
    %v776 = vld [vmem:[#allocation4 + $0x1310] sm:$0xff]
    %v777 = vld [vmem:[#allocation4 + $0x1318] sm:$0xff]
    %v778 = vld [vmem:[#allocation4 + $0x1320] sm:$0xff]
    %v779 = vld [vmem:[#allocation4 + $0x1328] sm:$0xff]
    %v780 = vld [vmem:[#allocation4 + $0x1330] sm:$0xff]
    %v781 = vld [vmem:[#allocation4 + $0x1338] sm:$0xff]
    %v782 = vld [vmem:[#allocation4 + $0x1340] sm:$0xff]
    %v783 = vld [vmem:[#allocation4 + $0x1348] sm:$0xff]
    %v784 = vld [vmem:[#allocation4 + $0x1350] sm:$0xff]
    %v785 = vld [vmem:[#allocation4 + $0x1358] sm:$0xff]
    %v786 = vld [vmem:[#allocation4 + $0x1360] sm:$0xff]
    %v787 = vld [vmem:[#allocation4 + $0x1368] sm:$0xff]
    %v788 = vld [vmem:[#allocation4 + $0x1370] sm:$0xff]
    %v789 = vld [vmem:[#allocation4 + $0x1378] sm:$0xff]
    %v790 = vld [vmem:[#allocation4 + $0x1380] sm:$0xff]
    %v791 = vld [vmem:[#allocation4 + $0x1388] sm:$0xff]
    %v792 = vld [vmem:[#allocation4 + $0x1390] sm:$0xff]
    %v793 = vld [vmem:[#allocation4 + $0x1398] sm:$0xff]
    %v794 = vld [vmem:[#allocation4 + $0x13a0] sm:$0xff]
    %v795 = vld [vmem:[#allocation4 + $0x13a8] sm:$0xff]
    %v796 = vld [vmem:[#allocation4 + $0x13b0] sm:$0xff]
    %v797 = vld [vmem:[#allocation4 + $0x13b8] sm:$0xff]
    %v798 = vld [vmem:[#allocation4 + $0x13c0] sm:$0xff]
    %v799 = vld [vmem:[#allocation4 + $0x13c8] sm:$0xff]
    %v800 = vld [vmem:[#allocation4 + $0x13d0] sm:$0xff]
    %v801 = vld [vmem:[#allocation4 + $0x13d8] sm:$0xff]
    %v802 = vld [vmem:[#allocation4 + $0x13e0] sm:$0xff]
    %v803 = vld [vmem:[#allocation4 + $0x13e8] sm:$0xff]
    %v804 = vld [vmem:[#allocation4 + $0x13f0] sm:$0xff]
    %v805 = vld [vmem:[#allocation4 + $0x13f8] sm:$0xff]
    %v806 = vld [vmem:[#allocation4 + $0x1400] sm:$0xff]
    %v807 = vld [vmem:[#allocation4 + $0x1408] sm:$0xff]
    %v808 = vld [vmem:[#allocation4 + $0x1410] sm:$0xff]
    %v809 = vld [vmem:[#allocation4 + $0x1418] sm:$0xff]
    %v810 = vld [vmem:[#allocation4 + $0x1420] sm:$0xff]
    %v811 = vld [vmem:[#allocation4 + $0x1428] sm:$0xff]
    %v812 = vld [vmem:[#allocation4 + $0x1430] sm:$0xff]
    %v813 = vld [vmem:[#allocation4 + $0x1438] sm:$0xff]
    %v814 = vld [vmem:[#allocation4 + $0x1440] sm:$0xff]
    %v815 = vld [vmem:[#allocation4 + $0x1448] sm:$0xff]
    %v816 = vld [vmem:[#allocation4 + $0x1450] sm:$0xff]
    %v817 = vld [vmem:[#allocation4 + $0x1458] sm:$0xff]
    %v818 = vld [vmem:[#allocation4 + $0x1460] sm:$0xff]
    %v819 = vld [vmem:[#allocation4 + $0x1468] sm:$0xff]
    %v820 = vld [vmem:[#allocation4 + $0x1470] sm:$0xff]
    %v821 = vld [vmem:[#allocation4 + $0x1478] sm:$0xff]
    %v822 = vld [vmem:[#allocation4 + $0x1480] sm:$0xff]
    %v823 = vld [vmem:[#allocation4 + $0x1488] sm:$0xff]
    %v824 = vld [vmem:[#allocation4 + $0x1490] sm:$0xff]
    %v825 = vld [vmem:[#allocation4 + $0x1498] sm:$0xff]
    %v826 = vld [vmem:[#allocation4 + $0x14a0] sm:$0xff]
    %v827 = vld [vmem:[#allocation4 + $0x14a8] sm:$0xff]
    %v828 = vld [vmem:[#allocation4 + $0x14b0] sm:$0xff]
    %v829 = vld [vmem:[#allocation4 + $0x14b8] sm:$0xff]
    %v830 = vld [vmem:[#allocation4 + $0x14c0] sm:$0xff]
    %v831 = vld [vmem:[#allocation4 + $0x14c8] sm:$0xff]
    %v832 = vld [vmem:[#allocation4 + $0x14d0] sm:$0xff]
    %v833 = vld [vmem:[#allocation4 + $0x14d8] sm:$0xff]
    %v834 = vld [vmem:[#allocation4 + $0x14e0] sm:$0xff]
    %v835 = vld [vmem:[#allocation4 + $0x14e8] sm:$0xff]
    %v836 = vld [vmem:[#allocation4 + $0x14f0] sm:$0xff]
    %v837 = vld [vmem:[#allocation4 + $0x14f8] sm:$0xff]
    %v838 = vld [vmem:[#allocation4 + $0x1500] sm:$0xff]
    %v839 = vld [vmem:[#allocation4 + $0x1508] sm:$0xff]
    %v840 = vld [vmem:[#allocation4 + $0x1510] sm:$0xff]
    %v841 = vld [vmem:[#allocation4 + $0x1518] sm:$0xff]
    %v842 = vld [vmem:[#allocation4 + $0x1520] sm:$0xff]
    %v843 = vld [vmem:[#allocation4 + $0x1528] sm:$0xff]
    %v844 = vld [vmem:[#allocation4 + $0x1530] sm:$0xff]
    %v845 = vld [vmem:[#allocation4 + $0x1538] sm:$0xff]
    %v846 = vld [vmem:[#allocation4 + $0x1540] sm:$0xff]
    %v847 = vld [vmem:[#allocation4 + $0x1548] sm:$0xff]
    %v848 = vld [vmem:[#allocation4 + $0x1550] sm:$0xff]
    %v849 = vld [vmem:[#allocation4 + $0x1558] sm:$0xff]
    %v850 = vld [vmem:[#allocation4 + $0x1560] sm:$0xff]
    %v851 = vld [vmem:[#allocation4 + $0x1568] sm:$0xff]
    %v852 = vld [vmem:[#allocation4 + $0x1570] sm:$0xff]
    %v853 = vld [vmem:[#allocation4 + $0x1578] sm:$0xff]
    %v854 = vld [vmem:[#allocation4 + $0x1580] sm:$0xff]
    %v855 = vld [vmem:[#allocation4 + $0x1588] sm:$0xff]
    %v856 = vld [vmem:[#allocation4 + $0x1590] sm:$0xff]
    %v857 = vld [vmem:[#allocation4 + $0x1598] sm:$0xff]
    %v858 = vld [vmem:[#allocation4 + $0x15a0] sm:$0xff]
    %v859 = vld [vmem:[#allocation4 + $0x15a8] sm:$0xff]
    %v860 = vld [vmem:[#allocation4 + $0x15b0] sm:$0xff]
    %v861 = vld [vmem:[#allocation4 + $0x15b8] sm:$0xff]
    %v862 = vld [vmem:[#allocation4 + $0x15c0] sm:$0xff]
    %v863 = vld [vmem:[#allocation4 + $0x15c8] sm:$0xff]
    %v864 = vld [vmem:[#allocation4 + $0x15d0] sm:$0xff]
    %v865 = vld [vmem:[#allocation4 + $0x15d8] sm:$0xff]
    %v866 = vld [vmem:[#allocation4 + $0x15e0] sm:$0xff]
    %v867 = vld [vmem:[#allocation4 + $0x15e8] sm:$0xff]
    %v868 = vld [vmem:[#allocation4 + $0x15f0] sm:$0xff]
    %v869 = vld [vmem:[#allocation4 + $0x15f8] sm:$0xff]
    %v870 = vld [vmem:[#allocation4 + $0x1600] sm:$0xff]
    %v871 = vld [vmem:[#allocation4 + $0x1608] sm:$0xff]
    %v872 = vld [vmem:[#allocation4 + $0x1610] sm:$0xff]
    %v873 = vld [vmem:[#allocation4 + $0x1618] sm:$0xff]
    %v874 = vld [vmem:[#allocation4 + $0x1620] sm:$0xff]
    %v875 = vld [vmem:[#allocation4 + $0x1628] sm:$0xff]
    %v876 = vld [vmem:[#allocation4 + $0x1630] sm:$0xff]
    %v877 = vld [vmem:[#allocation4 + $0x1638] sm:$0xff]
    %v878 = vld [vmem:[#allocation4 + $0x1640] sm:$0xff]
    %v879 = vld [vmem:[#allocation4 + $0x1648] sm:$0xff]
    %v880 = vld [vmem:[#allocation4 + $0x1650] sm:$0xff]
    %v881 = vld [vmem:[#allocation4 + $0x1658] sm:$0xff]
    %v882 = vld [vmem:[#allocation4 + $0x1660] sm:$0xff]
    %v883 = vld [vmem:[#allocation4 + $0x1668] sm:$0xff]
    %v884 = vld [vmem:[#allocation4 + $0x1670] sm:$0xff]
    %v885 = vld [vmem:[#allocation4 + $0x1678] sm:$0xff]
    %v886 = vld [vmem:[#allocation4 + $0x1680] sm:$0xff]
    %v887 = vld [vmem:[#allocation4 + $0x1688] sm:$0xff]
    %v888 = vld [vmem:[#allocation4 + $0x1690] sm:$0xff]
    %v889 = vld [vmem:[#allocation4 + $0x1698] sm:$0xff]
    %v890 = vld [vmem:[#allocation4 + $0x16a0] sm:$0xff]
    %v891 = vld [vmem:[#allocation4 + $0x16a8] sm:$0xff]
    %v892 = vld [vmem:[#allocation4 + $0x16b0] sm:$0xff]
    %v893 = vld [vmem:[#allocation4 + $0x16b8] sm:$0xff]
    %v894 = vld [vmem:[#allocation4 + $0x16c0] sm:$0xff]
    %v895 = vld [vmem:[#allocation4 + $0x16c8] sm:$0xff]
    %v896 = vld [vmem:[#allocation4 + $0x16d0] sm:$0xff]
    %v897 = vld [vmem:[#allocation4 + $0x16d8] sm:$0xff]
    %v898 = vld [vmem:[#allocation4 + $0x16e0] sm:$0xff]
    %v899 = vld [vmem:[#allocation4 + $0x16e8] sm:$0xff]
    %v900 = vld [vmem:[#allocation4 + $0x16f0] sm:$0xff]
    %v901 = vld [vmem:[#allocation4 + $0x16f8] sm:$0xff]
    %v902 = vld [vmem:[#allocation4 + $0x1700] sm:$0xff]
    %v903 = vld [vmem:[#allocation4 + $0x1708] sm:$0xff]
    %v904 = vld [vmem:[#allocation4 + $0x1710] sm:$0xff]
    %v905 = vld [vmem:[#allocation4 + $0x1718] sm:$0xff]
    %v906 = vld [vmem:[#allocation4 + $0x1720] sm:$0xff]
    %v907 = vld [vmem:[#allocation4 + $0x1728] sm:$0xff]
    %v908 = vld [vmem:[#allocation4 + $0x1730] sm:$0xff]
    %v909 = vld [vmem:[#allocation4 + $0x1738] sm:$0xff]
    %v910 = vld [vmem:[#allocation4 + $0x1740] sm:$0xff]
    %v911 = vld [vmem:[#allocation4 + $0x1748] sm:$0xff]
    %v912 = vld [vmem:[#allocation4 + $0x1750] sm:$0xff]
    %v913 = vld [vmem:[#allocation4 + $0x1758] sm:$0xff]
    %v914 = vld [vmem:[#allocation4 + $0x1760] sm:$0xff]
    %v915 = vld [vmem:[#allocation4 + $0x1768] sm:$0xff]
    %v916 = vld [vmem:[#allocation4 + $0x1770] sm:$0xff]
    %v917 = vld [vmem:[#allocation4 + $0x1778] sm:$0xff]
    %v918 = vld [vmem:[#allocation4 + $0x1780] sm:$0xff]
    %v919 = vld [vmem:[#allocation4 + $0x1788] sm:$0xff]
    %v920 = vld [vmem:[#allocation4 + $0x1790] sm:$0xff]
    %v921 = vld [vmem:[#allocation4 + $0x1798] sm:$0xff]
    %v922 = vld [vmem:[#allocation4 + $0x17a0] sm:$0xff]
    %v923 = vld [vmem:[#allocation4 + $0x17a8] sm:$0xff]
    %v924 = vld [vmem:[#allocation4 + $0x17b0] sm:$0xff]
    %v925 = vld [vmem:[#allocation4 + $0x17b8] sm:$0xff]
    %v926 = vld [vmem:[#allocation4 + $0x17c0] sm:$0xff]
    %v927 = vld [vmem:[#allocation4 + $0x17c8] sm:$0xff]
    %v928 = vld [vmem:[#allocation4 + $0x17d0] sm:$0xff]
    %v929 = vld [vmem:[#allocation4 + $0x17d8] sm:$0xff]
    %v930 = vld [vmem:[#allocation4 + $0x17e0] sm:$0xff]
    %v931 = vld [vmem:[#allocation4 + $0x17e8] sm:$0xff]
    %v932 = vld [vmem:[#allocation4 + $0x17f0] sm:$0xff]
    %v933 = vld [vmem:[#allocation4 + $0x17f8] sm:$0xff]
    %v934 = vld [vmem:[#allocation4 + $0x1800] sm:$0xff]
    %v935 = vld [vmem:[#allocation4 + $0x1808] sm:$0xff]
    %v936 = vld [vmem:[#allocation4 + $0x1810] sm:$0xff]
    %v937 = vld [vmem:[#allocation4 + $0x1818] sm:$0xff]
    %v938 = vld [vmem:[#allocation4 + $0x1820] sm:$0xff]
    %v939 = vld [vmem:[#allocation4 + $0x1828] sm:$0xff]
    %v940 = vld [vmem:[#allocation4 + $0x1830] sm:$0xff]
    %v941 = vld [vmem:[#allocation4 + $0x1838] sm:$0xff]
    %v942 = vld [vmem:[#allocation4 + $0x1840] sm:$0xff]
    %v943 = vld [vmem:[#allocation4 + $0x1848] sm:$0xff]
    %v944 = vld [vmem:[#allocation4 + $0x1850] sm:$0xff]
    %v945 = vld [vmem:[#allocation4 + $0x1858] sm:$0xff]
    %v946 = vld [vmem:[#allocation4 + $0x1860] sm:$0xff]
    %v947 = vld [vmem:[#allocation4 + $0x1868] sm:$0xff]
    %v948 = vld [vmem:[#allocation4 + $0x1870] sm:$0xff]
    %v949 = vld [vmem:[#allocation4 + $0x1878] sm:$0xff]
    %v950 = vld [vmem:[#allocation4 + $0x1880] sm:$0xff]
    %v951 = vld [vmem:[#allocation4 + $0x1888] sm:$0xff]
    %v952 = vld [vmem:[#allocation4 + $0x1890] sm:$0xff]
    %v953 = vld [vmem:[#allocation4 + $0x1898] sm:$0xff]
    %v954 = vld [vmem:[#allocation4 + $0x18a0] sm:$0xff]
    %v955 = vld [vmem:[#allocation4 + $0x18a8] sm:$0xff]
    %v956 = vld [vmem:[#allocation4 + $0x18b0] sm:$0xff]
    %v957 = vld [vmem:[#allocation4 + $0x18b8] sm:$0xff]
    %v958 = vld [vmem:[#allocation4 + $0x18c0] sm:$0xff]
    %v959 = vld [vmem:[#allocation4 + $0x18c8] sm:$0xff]
    %v960 = vld [vmem:[#allocation4 + $0x18d0] sm:$0xff]
    %v961 = vld [vmem:[#allocation4 + $0x18d8] sm:$0xff]
    %v962 = vld [vmem:[#allocation4 + $0x18e0] sm:$0xff]
    %v963 = vld [vmem:[#allocation4 + $0x18e8] sm:$0xff]
    %v964 = vld [vmem:[#allocation4 + $0x18f0] sm:$0xff]
    %v965 = vld [vmem:[#allocation4 + $0x18f8] sm:$0xff]
    %v966 = vld [vmem:[#allocation4 + $0x1900] sm:$0xff]
    %v967 = vld [vmem:[#allocation4 + $0x1908] sm:$0xff]
    %v968 = vld [vmem:[#allocation4 + $0x1910] sm:$0xff]
    %v969 = vld [vmem:[#allocation4 + $0x1918] sm:$0xff]
    %v970 = vld [vmem:[#allocation4 + $0x1920] sm:$0xff]
    %v971 = vld [vmem:[#allocation4 + $0x1928] sm:$0xff]
    %v972 = vld [vmem:[#allocation4 + $0x1930] sm:$0xff]
    %v973 = vld [vmem:[#allocation4 + $0x1938] sm:$0xff]
    %v974 = vld [vmem:[#allocation4 + $0x1940] sm:$0xff]
    %v975 = vld [vmem:[#allocation4 + $0x1948] sm:$0xff]
    %v976 = vld [vmem:[#allocation4 + $0x1950] sm:$0xff]
    %v977 = vld [vmem:[#allocation4 + $0x1958] sm:$0xff]
    %v978 = vld [vmem:[#allocation4 + $0x1960] sm:$0xff]
    %v979 = vld [vmem:[#allocation4 + $0x1968] sm:$0xff]
    %v980 = vld [vmem:[#allocation4 + $0x1970] sm:$0xff]
    %v981 = vld [vmem:[#allocation4 + $0x1978] sm:$0xff]
    %v982 = vld [vmem:[#allocation4 + $0x1980] sm:$0xff]
    %v983 = vld [vmem:[#allocation4 + $0x1988] sm:$0xff]
    %v984 = vld [vmem:[#allocation4 + $0x1990] sm:$0xff]
    %v985 = vld [vmem:[#allocation4 + $0x1998] sm:$0xff]
    %v986 = vld [vmem:[#allocation4 + $0x19a0] sm:$0xff]
    %v987 = vld [vmem:[#allocation4 + $0x19a8] sm:$0xff]
    %v988 = vld [vmem:[#allocation4 + $0x19b0] sm:$0xff]
    %v989 = vld [vmem:[#allocation4 + $0x19b8] sm:$0xff]
    %v990 = vld [vmem:[#allocation4 + $0x19c0] sm:$0xff]
    %v991 = vld [vmem:[#allocation4 + $0x19c8] sm:$0xff]
    %v992 = vld [vmem:[#allocation4 + $0x19d0] sm:$0xff]
    %v993 = vld [vmem:[#allocation4 + $0x19d8] sm:$0xff]
    %v994 = vld [vmem:[#allocation4 + $0x19e0] sm:$0xff]
    %v995 = vld [vmem:[#allocation4 + $0x19e8] sm:$0xff]
    %v996 = vld [vmem:[#allocation4 + $0x19f0] sm:$0xff]
    %v997 = vld [vmem:[#allocation4 + $0x19f8] sm:$0xff]
    %v998 = vld [vmem:[#allocation4 + $0x1a00] sm:$0xff]
    %v999 = vld [vmem:[#allocation4 + $0x1a08] sm:$0xff]
    %v1000 = vld [vmem:[#allocation4 + $0x1a10] sm:$0xff]
    %v1001 = vld [vmem:[#allocation4 + $0x1a18] sm:$0xff]
    %v1002 = vld [vmem:[#allocation4 + $0x1a20] sm:$0xff]
    %v1003 = vld [vmem:[#allocation4 + $0x1a28] sm:$0xff]
    %v1004 = vld [vmem:[#allocation4 + $0x1a30] sm:$0xff]
    %v1005 = vld [vmem:[#allocation4 + $0x1a38] sm:$0xff]
    %v1006 = vld [vmem:[#allocation4 + $0x1a40] sm:$0xff]
    %v1007 = vld [vmem:[#allocation4 + $0x1a48] sm:$0xff]
    %v1008 = vld [vmem:[#allocation4 + $0x1a50] sm:$0xff]
    %v1009 = vld [vmem:[#allocation4 + $0x1a58] sm:$0xff]
    %v1010 = vld [vmem:[#allocation4 + $0x1a60] sm:$0xff]
    %v1011 = vld [vmem:[#allocation4 + $0x1a68] sm:$0xff]
    %v1012 = vld [vmem:[#allocation4 + $0x1a70] sm:$0xff]
    %v1013 = vld [vmem:[#allocation4 + $0x1a78] sm:$0xff]
    %v1014 = vld [vmem:[#allocation4 + $0x1a80] sm:$0xff]
    %v1015 = vld [vmem:[#allocation4 + $0x1a88] sm:$0xff]
    %v1016 = vld [vmem:[#allocation4 + $0x1a90] sm:$0xff]
    %v1017 = vld [vmem:[#allocation4 + $0x1a98] sm:$0xff]
    %v1018 = vld [vmem:[#allocation4 + $0x1aa0] sm:$0xff]
    %v1019 = vld [vmem:[#allocation4 + $0x1aa8] sm:$0xff]
    %v1020 = vld [vmem:[#allocation4 + $0x1ab0] sm:$0xff]
    %v1021 = vld [vmem:[#allocation4 + $0x1ab8] sm:$0xff]
    %v1022 = vld [vmem:[#allocation4 + $0x1ac0] sm:$0xff]
    %v1023 = vld [vmem:[#allocation4 + $0x1ac8] sm:$0xff]
    %v1024 = vld [vmem:[#allocation4 + $0x1ad0] sm:$0xff]
    %v1025 = vld [vmem:[#allocation4 + $0x1ad8] sm:$0xff]
    %v1026 = vld [vmem:[#allocation4 + $0x1ae0] sm:$0xff]
    %v1027 = vld [vmem:[#allocation4 + $0x1ae8] sm:$0xff]
    %v1028 = vld [vmem:[#allocation4 + $0x1af0] sm:$0xff]
    %v1029 = vld [vmem:[#allocation4 + $0x1af8] sm:$0xff]
    %v1894 = vunpack.c.l.b16 %v166
    %v1895 = vunpack.c.h.b16 %v166
    %v1896 = vunpack.c.l.b16 %v167
    %v1897 = vunpack.c.h.b16 %v167
    %v1898 = vunpack.c.l.b16 %v168
    %v1899 = vunpack.c.h.b16 %v168
    %v1900 = vunpack.c.l.b16 %v169
    %v1901 = vunpack.c.h.b16 %v169
    %v1902 = vunpack.c.l.b16 %v170
    %v1903 = vunpack.c.h.b16 %v170
    %v1904 = vunpack.c.l.b16 %v171
    %v1905 = vunpack.c.h.b16 %v171
    %v1906 = vunpack.c.l.b16 %v172
    %v1907 = vunpack.c.h.b16 %v172
    %v1908 = vunpack.c.l.b16 %v173
    %v1909 = vunpack.c.h.b16 %v173
    %v1910 = vunpack.c.l.b16 %v174
    %v1911 = vunpack.c.h.b16 %v174
    %v1912 = vunpack.c.l.b16 %v175
    %v1913 = vunpack.c.h.b16 %v175
    %v1914 = vunpack.c.l.b16 %v176
    %v1915 = vunpack.c.h.b16 %v176
    %v1916 = vunpack.c.l.b16 %v177
    %v1917 = vunpack.c.h.b16 %v177
    %v1918 = vunpack.c.l.b16 %v178
    %v1919 = vunpack.c.h.b16 %v178
    %v1920 = vunpack.c.l.b16 %v179
    %v1921 = vunpack.c.h.b16 %v179
    %v1922 = vunpack.c.l.b16 %v180
    %v1923 = vunpack.c.h.b16 %v180
    %v1924 = vunpack.c.l.b16 %v181
    %v1925 = vunpack.c.h.b16 %v181
    %v1926 = vunpack.c.l.b16 %v182
    %v1927 = vunpack.c.h.b16 %v182
    %v1928 = vunpack.c.l.b16 %v183
    %v1929 = vunpack.c.h.b16 %v183
    %v1930 = vunpack.c.l.b16 %v184
    %v1931 = vunpack.c.h.b16 %v184
    %v1932 = vunpack.c.l.b16 %v185
    %v1933 = vunpack.c.h.b16 %v185
    %v1934 = vunpack.c.l.b16 %v186
    %v1935 = vunpack.c.h.b16 %v186
    %v1936 = vunpack.c.l.b16 %v187
    %v1937 = vunpack.c.h.b16 %v187
    %v1938 = vunpack.c.l.b16 %v188
    %v1939 = vunpack.c.h.b16 %v188
    %v1940 = vunpack.c.l.b16 %v189
    %v1941 = vunpack.c.h.b16 %v189
    %v1942 = vunpack.c.l.b16 %v190
    %v1943 = vunpack.c.h.b16 %v190
    %v1944 = vunpack.c.l.b16 %v191
    %v1945 = vunpack.c.h.b16 %v191
    %v1946 = vunpack.c.l.b16 %v192
    %v1947 = vunpack.c.h.b16 %v192
    %v1948 = vunpack.c.l.b16 %v193
    %v1949 = vunpack.c.h.b16 %v193
    %v1950 = vunpack.c.l.b16 %v194
    %v1951 = vunpack.c.h.b16 %v194
    %v1952 = vunpack.c.l.b16 %v195
    %v1953 = vunpack.c.h.b16 %v195
    %v1954 = vunpack.c.l.b16 %v196
    %v1955 = vunpack.c.h.b16 %v196
    %v1956 = vunpack.c.l.b16 %v197
    %v1957 = vunpack.c.h.b16 %v197
    %v1958 = vunpack.c.l.b16 %v198
    %v1959 = vunpack.c.h.b16 %v198
    %v1960 = vunpack.c.l.b16 %v199
    %v1961 = vunpack.c.h.b16 %v199
    %v1962 = vunpack.c.l.b16 %v200
    %v1963 = vunpack.c.h.b16 %v200
    %v1964 = vunpack.c.l.b16 %v201
    %v1965 = vunpack.c.h.b16 %v201
    %v1966 = vunpack.c.l.b16 %v202
    %v1967 = vunpack.c.h.b16 %v202
    %v1968 = vunpack.c.l.b16 %v203
    %v1969 = vunpack.c.h.b16 %v203
    %v1970 = vunpack.c.l.b16 %v204
    %v1971 = vunpack.c.h.b16 %v204
    %v1972 = vunpack.c.l.b16 %v205
    %v1973 = vunpack.c.h.b16 %v205
    %v1974 = vunpack.c.l.b16 %v206
    %v1975 = vunpack.c.h.b16 %v206
    %v1976 = vunpack.c.l.b16 %v207
    %v1977 = vunpack.c.h.b16 %v207
    %v1978 = vunpack.c.l.b16 %v208
    %v1979 = vunpack.c.h.b16 %v208
    %v1980 = vunpack.c.l.b16 %v209
    %v1981 = vunpack.c.h.b16 %v209
    %v1982 = vunpack.c.l.b16 %v210
    %v1983 = vunpack.c.h.b16 %v210
    %v1984 = vunpack.c.l.b16 %v211
    %v1985 = vunpack.c.h.b16 %v211
    %v1986 = vunpack.c.l.b16 %v212
    %v1987 = vunpack.c.h.b16 %v212
    %v1988 = vunpack.c.l.b16 %v213
    %v1989 = vunpack.c.h.b16 %v213
    %v1990 = vunpack.c.l.b16 %v214
    %v1991 = vunpack.c.h.b16 %v214
    %v1992 = vunpack.c.l.b16 %v215
    %v1993 = vunpack.c.h.b16 %v215
    %v1994 = vunpack.c.l.b16 %v216
    %v1995 = vunpack.c.h.b16 %v216
    %v1996 = vunpack.c.l.b16 %v217
    %v1997 = vunpack.c.h.b16 %v217
    %v1998 = vunpack.c.l.b16 %v218
    %v1999 = vunpack.c.h.b16 %v218
    %v2000 = vunpack.c.l.b16 %v219
    %v2001 = vunpack.c.h.b16 %v219
    %v2002 = vunpack.c.l.b16 %v220
    %v2003 = vunpack.c.h.b16 %v220
    %v2004 = vunpack.c.l.b16 %v221
    %v2005 = vunpack.c.h.b16 %v221
    %v2006 = vunpack.c.l.b16 %v222
    %v2007 = vunpack.c.h.b16 %v222
    %v2008 = vunpack.c.l.b16 %v223
    %v2009 = vunpack.c.h.b16 %v223
    %v2010 = vunpack.c.l.b16 %v224
    %v2011 = vunpack.c.h.b16 %v224
    %v2012 = vunpack.c.l.b16 %v225
    %v2013 = vunpack.c.h.b16 %v225
    %v2014 = vunpack.c.l.b16 %v226
    %v2015 = vunpack.c.h.b16 %v226
    %v2016 = vunpack.c.l.b16 %v227
    %v2017 = vunpack.c.h.b16 %v227
    %v2018 = vunpack.c.l.b16 %v228
    %v2019 = vunpack.c.h.b16 %v228
    %v2020 = vunpack.c.l.b16 %v229
    %v2021 = vunpack.c.h.b16 %v229
    %v2022 = vunpack.c.l.b16 %v230
    %v2023 = vunpack.c.h.b16 %v230
    %v2024 = vunpack.c.l.b16 %v231
    %v2025 = vunpack.c.h.b16 %v231
    %v2026 = vunpack.c.l.b16 %v232
    %v2027 = vunpack.c.h.b16 %v232
    %v2028 = vunpack.c.l.b16 %v233
    %v2029 = vunpack.c.h.b16 %v233
    %v2030 = vunpack.c.l.b16 %v234
    %v2031 = vunpack.c.h.b16 %v234
    %v2032 = vunpack.c.l.b16 %v235
    %v2033 = vunpack.c.h.b16 %v235
    %v2034 = vunpack.c.l.b16 %v236
    %v2035 = vunpack.c.h.b16 %v236
    %v2036 = vunpack.c.l.b16 %v237
    %v2037 = vunpack.c.h.b16 %v237
    %v2038 = vunpack.c.l.b16 %v238
    %v2039 = vunpack.c.h.b16 %v238
    %v2040 = vunpack.c.l.b16 %v239
    %v2041 = vunpack.c.h.b16 %v239
    %v2042 = vunpack.c.l.b16 %v240
    %v2043 = vunpack.c.h.b16 %v240
    %v2044 = vunpack.c.l.b16 %v241
    %v2045 = vunpack.c.h.b16 %v241
    %v2046 = vunpack.c.l.b16 %v242
    %v2047 = vunpack.c.h.b16 %v242
    %v2048 = vunpack.c.l.b16 %v243
    %v2049 = vunpack.c.h.b16 %v243
    %v2050 = vunpack.c.l.b16 %v244
    %v2051 = vunpack.c.h.b16 %v244
    %v2052 = vunpack.c.l.b16 %v245
    %v2053 = vunpack.c.h.b16 %v245
    %v2054 = vunpack.c.l.b16 %v246
    %v2055 = vunpack.c.h.b16 %v246
    %v2056 = vunpack.c.l.b16 %v247
    %v2057 = vunpack.c.h.b16 %v247
    %v2058 = vunpack.c.l.b16 %v248
    %v2059 = vunpack.c.h.b16 %v248
    %v2060 = vunpack.c.l.b16 %v249
    %v2061 = vunpack.c.h.b16 %v249
    %v2062 = vunpack.c.l.b16 %v250
    %v2063 = vunpack.c.h.b16 %v250
    %v2064 = vunpack.c.l.b16 %v251
    %v2065 = vunpack.c.h.b16 %v251
    %v2066 = vunpack.c.l.b16 %v252
    %v2067 = vunpack.c.h.b16 %v252
    %v2068 = vunpack.c.l.b16 %v253
    %v2069 = vunpack.c.h.b16 %v253
    %v2070 = vunpack.c.l.b16 %v254
    %v2071 = vunpack.c.h.b16 %v254
    %v2072 = vunpack.c.l.b16 %v255
    %v2073 = vunpack.c.h.b16 %v255
    %v2074 = vunpack.c.l.b16 %v256
    %v2075 = vunpack.c.h.b16 %v256
    %v2076 = vunpack.c.l.b16 %v257
    %v2077 = vunpack.c.h.b16 %v257
    %v2078 = vunpack.c.l.b16 %v258
    %v2079 = vunpack.c.h.b16 %v258
    %v2080 = vunpack.c.l.b16 %v259
    %v2081 = vunpack.c.h.b16 %v259
    %v2082 = vunpack.c.l.b16 %v260
    %v2083 = vunpack.c.h.b16 %v260
    %v2084 = vunpack.c.l.b16 %v261
    %v2085 = vunpack.c.h.b16 %v261
    %v2086 = vunpack.c.l.b16 %v262
    %v2087 = vunpack.c.h.b16 %v262
    %v2088 = vunpack.c.l.b16 %v263
    %v2089 = vunpack.c.h.b16 %v263
    %v2090 = vunpack.c.l.b16 %v264
    %v2091 = vunpack.c.h.b16 %v264
    %v2092 = vunpack.c.l.b16 %v265
    %v2093 = vunpack.c.h.b16 %v265
    %v2094 = vunpack.c.l.b16 %v266
    %v2095 = vunpack.c.h.b16 %v266
    %v2096 = vunpack.c.l.b16 %v267
    %v2097 = vunpack.c.h.b16 %v267
    %v2098 = vunpack.c.l.b16 %v268
    %v2099 = vunpack.c.h.b16 %v268
    %v2100 = vunpack.c.l.b16 %v269
    %v2101 = vunpack.c.h.b16 %v269
    %v2102 = vunpack.c.l.b16 %v270
    %v2103 = vunpack.c.h.b16 %v270
    %v2104 = vunpack.c.l.b16 %v271
    %v2105 = vunpack.c.h.b16 %v271
    %v2106 = vunpack.c.l.b16 %v272
    %v2107 = vunpack.c.h.b16 %v272
    %v2108 = vunpack.c.l.b16 %v273
    %v2109 = vunpack.c.h.b16 %v273
    %v2110 = vunpack.c.l.b16 %v274
    %v2111 = vunpack.c.h.b16 %v274
    %v2112 = vunpack.c.l.b16 %v275
    %v2113 = vunpack.c.h.b16 %v275
    %v2114 = vunpack.c.l.b16 %v276
    %v2115 = vunpack.c.h.b16 %v276
    %v2116 = vunpack.c.l.b16 %v277
    %v2117 = vunpack.c.h.b16 %v277
    %v2118 = vunpack.c.l.b16 %v278
    %v2119 = vunpack.c.h.b16 %v278
    %v2120 = vunpack.c.l.b16 %v279
    %v2121 = vunpack.c.h.b16 %v279
    %v2122 = vunpack.c.l.b16 %v280
    %v2123 = vunpack.c.h.b16 %v280
    %v2124 = vunpack.c.l.b16 %v281
    %v2125 = vunpack.c.h.b16 %v281
    %v2126 = vunpack.c.l.b16 %v282
    %v2127 = vunpack.c.h.b16 %v282
    %v2128 = vunpack.c.l.b16 %v283
    %v2129 = vunpack.c.h.b16 %v283
    %v2130 = vunpack.c.l.b16 %v284
    %v2131 = vunpack.c.h.b16 %v284
    %v2132 = vunpack.c.l.b16 %v285
    %v2133 = vunpack.c.h.b16 %v285
    %v2134 = vunpack.c.l.b16 %v286
    %v2135 = vunpack.c.h.b16 %v286
    %v2136 = vunpack.c.l.b16 %v287
    %v2137 = vunpack.c.h.b16 %v287
    %v2138 = vunpack.c.l.b16 %v288
    %v2139 = vunpack.c.h.b16 %v288
    %v2140 = vunpack.c.l.b16 %v289
    %v2141 = vunpack.c.h.b16 %v289
    %v2142 = vunpack.c.l.b16 %v290
    %v2143 = vunpack.c.h.b16 %v290
    %v2144 = vunpack.c.l.b16 %v291
    %v2145 = vunpack.c.h.b16 %v291
    %v2146 = vunpack.c.l.b16 %v292
    %v2147 = vunpack.c.h.b16 %v292
    %v2148 = vunpack.c.l.b16 %v293
    %v2149 = vunpack.c.h.b16 %v293
    %v2150 = vunpack.c.l.b16 %v294
    %v2151 = vunpack.c.h.b16 %v294
    %v2152 = vunpack.c.l.b16 %v295
    %v2153 = vunpack.c.h.b16 %v295
    %v2154 = vunpack.c.l.b16 %v296
    %v2155 = vunpack.c.h.b16 %v296
    %v2156 = vunpack.c.l.b16 %v297
    %v2157 = vunpack.c.h.b16 %v297
    %v2158 = vunpack.c.l.b16 %v298
    %v2159 = vunpack.c.h.b16 %v298
    %v2160 = vunpack.c.l.b16 %v299
    %v2161 = vunpack.c.h.b16 %v299
    %v2162 = vunpack.c.l.b16 %v300
    %v2163 = vunpack.c.h.b16 %v300
    %v2164 = vunpack.c.l.b16 %v301
    %v2165 = vunpack.c.h.b16 %v301
    %v2166 = vunpack.c.l.b16 %v302
    %v2167 = vunpack.c.h.b16 %v302
    %v2168 = vunpack.c.l.b16 %v303
    %v2169 = vunpack.c.h.b16 %v303
    %v2170 = vunpack.c.l.b16 %v304
    %v2171 = vunpack.c.h.b16 %v304
    %v2172 = vunpack.c.l.b16 %v305
    %v2173 = vunpack.c.h.b16 %v305
    %v2174 = vunpack.c.l.b16 %v306
    %v2175 = vunpack.c.h.b16 %v306
    %v2176 = vunpack.c.l.b16 %v307
    %v2177 = vunpack.c.h.b16 %v307
    %v2178 = vunpack.c.l.b16 %v308
    %v2179 = vunpack.c.h.b16 %v308
    %v2180 = vunpack.c.l.b16 %v309
    %v2181 = vunpack.c.h.b16 %v309
    %v2182 = vunpack.c.l.b16 %v310
    %v2183 = vunpack.c.h.b16 %v310
    %v2184 = vunpack.c.l.b16 %v311
    %v2185 = vunpack.c.h.b16 %v311
    %v2186 = vunpack.c.l.b16 %v312
    %v2187 = vunpack.c.h.b16 %v312
    %v2188 = vunpack.c.l.b16 %v313
    %v2189 = vunpack.c.h.b16 %v313
    %v2190 = vunpack.c.l.b16 %v314
    %v2191 = vunpack.c.h.b16 %v314
    %v2192 = vunpack.c.l.b16 %v315
    %v2193 = vunpack.c.h.b16 %v315
    %v2194 = vunpack.c.l.b16 %v316
    %v2195 = vunpack.c.h.b16 %v316
    %v2196 = vunpack.c.l.b16 %v317
    %v2197 = vunpack.c.h.b16 %v317
    %v2198 = vunpack.c.l.b16 %v318
    %v2199 = vunpack.c.h.b16 %v318
    %v2200 = vunpack.c.l.b16 %v319
    %v2201 = vunpack.c.h.b16 %v319
    %v2202 = vunpack.c.l.b16 %v320
    %v2203 = vunpack.c.h.b16 %v320
    %v2204 = vunpack.c.l.b16 %v321
    %v2205 = vunpack.c.h.b16 %v321
    %v2206 = vunpack.c.l.b16 %v322
    %v2207 = vunpack.c.h.b16 %v322
    %v2208 = vunpack.c.l.b16 %v323
    %v2209 = vunpack.c.h.b16 %v323
    %v2210 = vunpack.c.l.b16 %v324
    %v2211 = vunpack.c.h.b16 %v324
    %v2212 = vunpack.c.l.b16 %v325
    %v2213 = vunpack.c.h.b16 %v325
    %v2214 = vunpack.c.l.b16 %v326
    %v2215 = vunpack.c.h.b16 %v326
    %v2216 = vunpack.c.l.b16 %v327
    %v2217 = vunpack.c.h.b16 %v327
    %v2218 = vunpack.c.l.b16 %v328
    %v2219 = vunpack.c.h.b16 %v328
    %v2220 = vunpack.c.l.b16 %v329
    %v2221 = vunpack.c.h.b16 %v329
    %v2222 = vunpack.c.l.b16 %v330
    %v2223 = vunpack.c.h.b16 %v330
    %v2224 = vunpack.c.l.b16 %v331
    %v2225 = vunpack.c.h.b16 %v331
    %v2226 = vunpack.c.l.b16 %v332
    %v2227 = vunpack.c.h.b16 %v332
    %v2228 = vunpack.c.l.b16 %v333
    %v2229 = vunpack.c.h.b16 %v333
    %v2230 = vunpack.c.l.b16 %v334
    %v2231 = vunpack.c.h.b16 %v334
    %v2232 = vunpack.c.l.b16 %v335
    %v2233 = vunpack.c.h.b16 %v335
    %v2234 = vunpack.c.l.b16 %v336
    %v2235 = vunpack.c.h.b16 %v336
    %v2236 = vunpack.c.l.b16 %v337
    %v2237 = vunpack.c.h.b16 %v337
    %v2238 = vunpack.c.l.b16 %v338
    %v2239 = vunpack.c.h.b16 %v338
    %v2240 = vunpack.c.l.b16 %v339
    %v2241 = vunpack.c.h.b16 %v339
    %v2242 = vunpack.c.l.b16 %v340
    %v2243 = vunpack.c.h.b16 %v340
    %v2244 = vunpack.c.l.b16 %v341
    %v2245 = vunpack.c.h.b16 %v341
    %v2246 = vunpack.c.l.b16 %v342
    %v2247 = vunpack.c.h.b16 %v342
    %v2248 = vunpack.c.l.b16 %v343
    %v2249 = vunpack.c.h.b16 %v343
    %v2250 = vunpack.c.l.b16 %v344
    %v2251 = vunpack.c.h.b16 %v344
    %v2252 = vunpack.c.l.b16 %v345
    %v2253 = vunpack.c.h.b16 %v345
    %v2254 = vunpack.c.l.b16 %v346
    %v2255 = vunpack.c.h.b16 %v346
    %v2256 = vunpack.c.l.b16 %v347
    %v2257 = vunpack.c.h.b16 %v347
    %v2258 = vunpack.c.l.b16 %v348
    %v2259 = vunpack.c.h.b16 %v348
    %v2260 = vunpack.c.l.b16 %v349
    %v2261 = vunpack.c.h.b16 %v349
    %v2262 = vunpack.c.l.b16 %v350
    %v2263 = vunpack.c.h.b16 %v350
    %v2264 = vunpack.c.l.b16 %v351
    %v2265 = vunpack.c.h.b16 %v351
    %v2266 = vunpack.c.l.b16 %v352
    %v2267 = vunpack.c.h.b16 %v352
    %v2268 = vunpack.c.l.b16 %v353
    %v2269 = vunpack.c.h.b16 %v353
    %v2270 = vunpack.c.l.b16 %v354
    %v2271 = vunpack.c.h.b16 %v354
    %v2272 = vunpack.c.l.b16 %v355
    %v2273 = vunpack.c.h.b16 %v355
    %v2274 = vunpack.c.l.b16 %v356
    %v2275 = vunpack.c.h.b16 %v356
    %v2276 = vunpack.c.l.b16 %v357
    %v2277 = vunpack.c.h.b16 %v357
    %v2278 = vunpack.c.l.b16 %v358
    %v2279 = vunpack.c.h.b16 %v358
    %v2280 = vunpack.c.l.b16 %v359
    %v2281 = vunpack.c.h.b16 %v359
    %v2282 = vunpack.c.l.b16 %v360
    %v2283 = vunpack.c.h.b16 %v360
    %v2284 = vunpack.c.l.b16 %v361
    %v2285 = vunpack.c.h.b16 %v361
    %v2286 = vunpack.c.l.b16 %v362
    %v2287 = vunpack.c.h.b16 %v362
    %v2288 = vunpack.c.l.b16 %v363
    %v2289 = vunpack.c.h.b16 %v363
    %v2290 = vunpack.c.l.b16 %v364
    %v2291 = vunpack.c.h.b16 %v364
    %v2292 = vunpack.c.l.b16 %v365
    %v2293 = vunpack.c.h.b16 %v365
    %v2294 = vunpack.c.l.b16 %v366
    %v2295 = vunpack.c.h.b16 %v366
    %v2296 = vunpack.c.l.b16 %v367
    %v2297 = vunpack.c.h.b16 %v367
    %v2298 = vunpack.c.l.b16 %v368
    %v2299 = vunpack.c.h.b16 %v368
    %v2300 = vunpack.c.l.b16 %v369
    %v2301 = vunpack.c.h.b16 %v369
    %v2302 = vunpack.c.l.b16 %v370
    %v2303 = vunpack.c.h.b16 %v370
    %v2304 = vunpack.c.l.b16 %v371
    %v2305 = vunpack.c.h.b16 %v371
    %v2306 = vunpack.c.l.b16 %v372
    %v2307 = vunpack.c.h.b16 %v372
    %v2308 = vunpack.c.l.b16 %v373
    %v2309 = vunpack.c.h.b16 %v373
    %v2310 = vunpack.c.l.b16 %v374
    %v2311 = vunpack.c.h.b16 %v374
    %v2312 = vunpack.c.l.b16 %v375
    %v2313 = vunpack.c.h.b16 %v375
    %v2314 = vunpack.c.l.b16 %v376
    %v2315 = vunpack.c.h.b16 %v376
    %v2316 = vunpack.c.l.b16 %v377
    %v2317 = vunpack.c.h.b16 %v377
    %v2318 = vunpack.c.l.b16 %v378
    %v2319 = vunpack.c.h.b16 %v378
    %v2320 = vunpack.c.l.b16 %v379
    %v2321 = vunpack.c.h.b16 %v379
    %v2322 = vunpack.c.l.b16 %v380
    %v2323 = vunpack.c.h.b16 %v380
    %v2324 = vunpack.c.l.b16 %v381
    %v2325 = vunpack.c.h.b16 %v381
    %v2326 = vunpack.c.l.b16 %v382
    %v2327 = vunpack.c.h.b16 %v382
    %v2328 = vunpack.c.l.b16 %v383
    %v2329 = vunpack.c.h.b16 %v383
    %v2330 = vunpack.c.l.b16 %v384
    %v2331 = vunpack.c.h.b16 %v384
    %v2332 = vunpack.c.l.b16 %v385
    %v2333 = vunpack.c.h.b16 %v385
    %v2334 = vunpack.c.l.b16 %v386
    %v2335 = vunpack.c.h.b16 %v386
    %v2336 = vunpack.c.l.b16 %v387
    %v2337 = vunpack.c.h.b16 %v387
    %v2338 = vunpack.c.l.b16 %v388
    %v2339 = vunpack.c.h.b16 %v388
    %v2340 = vunpack.c.l.b16 %v389
    %v2341 = vunpack.c.h.b16 %v389
    %v2342 = vunpack.c.l.b16 %v390
    %v2343 = vunpack.c.h.b16 %v390
    %v2344 = vunpack.c.l.b16 %v391
    %v2345 = vunpack.c.h.b16 %v391
    %v2346 = vunpack.c.l.b16 %v392
    %v2347 = vunpack.c.h.b16 %v392
    %v2348 = vunpack.c.l.b16 %v393
    %v2349 = vunpack.c.h.b16 %v393
    %v2350 = vunpack.c.l.b16 %v394
    %v2351 = vunpack.c.h.b16 %v394
    %v2352 = vunpack.c.l.b16 %v395
    %v2353 = vunpack.c.h.b16 %v395
    %v2354 = vunpack.c.l.b16 %v396
    %v2355 = vunpack.c.h.b16 %v396
    %v2356 = vunpack.c.l.b16 %v397
    %v2357 = vunpack.c.h.b16 %v397
    %v2358 = vunpack.c.l.b16 %v398
    %v2359 = vunpack.c.h.b16 %v398
    %v2360 = vunpack.c.l.b16 %v399
    %v2361 = vunpack.c.h.b16 %v399
    %v2362 = vunpack.c.l.b16 %v400
    %v2363 = vunpack.c.h.b16 %v400
    %v2364 = vunpack.c.l.b16 %v401
    %v2365 = vunpack.c.h.b16 %v401
    %v2366 = vunpack.c.l.b16 %v402
    %v2367 = vunpack.c.h.b16 %v402
    %v2368 = vunpack.c.l.b16 %v403
    %v2369 = vunpack.c.h.b16 %v403
    %v2370 = vunpack.c.l.b16 %v404
    %v2371 = vunpack.c.h.b16 %v404
    %v2372 = vunpack.c.l.b16 %v405
    %v2373 = vunpack.c.h.b16 %v405
    %v2374 = vunpack.c.l.b16 %v406
    %v2375 = vunpack.c.h.b16 %v406
    %v2376 = vunpack.c.l.b16 %v407
    %v2377 = vunpack.c.h.b16 %v407
    %v2378 = vunpack.c.l.b16 %v408
    %v2379 = vunpack.c.h.b16 %v408
    %v2380 = vunpack.c.l.b16 %v409
    %v2381 = vunpack.c.h.b16 %v409
    %v2382 = vunpack.c.l.b16 %v410
    %v2383 = vunpack.c.h.b16 %v410
    %v2384 = vunpack.c.l.b16 %v411
    %v2385 = vunpack.c.h.b16 %v411
    %v2386 = vunpack.c.l.b16 %v412
    %v2387 = vunpack.c.h.b16 %v412
    %v2388 = vunpack.c.l.b16 %v413
    %v2389 = vunpack.c.h.b16 %v413
    %v2390 = vunpack.c.l.b16 %v414
    %v2391 = vunpack.c.h.b16 %v414
    %v2392 = vunpack.c.l.b16 %v415
    %v2393 = vunpack.c.h.b16 %v415
    %v2394 = vunpack.c.l.b16 %v416
    %v2395 = vunpack.c.h.b16 %v416
    %v2396 = vunpack.c.l.b16 %v417
    %v2397 = vunpack.c.h.b16 %v417
    %v2398 = vunpack.c.l.b16 %v418
    %v2399 = vunpack.c.h.b16 %v418
    %v2400 = vunpack.c.l.b16 %v419
    %v2401 = vunpack.c.h.b16 %v419
    %v2402 = vunpack.c.l.b16 %v420
    %v2403 = vunpack.c.h.b16 %v420
    %v2404 = vunpack.c.l.b16 %v421
    %v2405 = vunpack.c.h.b16 %v421
    %v2406 = vunpack.c.l.b16 %v422
    %v2407 = vunpack.c.h.b16 %v422
    %v2408 = vunpack.c.l.b16 %v423
    %v2409 = vunpack.c.h.b16 %v423
    %v2410 = vunpack.c.l.b16 %v424
    %v2411 = vunpack.c.h.b16 %v424
    %v2412 = vunpack.c.l.b16 %v425
    %v2413 = vunpack.c.h.b16 %v425
    %v2414 = vunpack.c.l.b16 %v426
    %v2415 = vunpack.c.h.b16 %v426
    %v2416 = vunpack.c.l.b16 %v427
    %v2417 = vunpack.c.h.b16 %v427
    %v2418 = vunpack.c.l.b16 %v428
    %v2419 = vunpack.c.h.b16 %v428
    %v2420 = vunpack.c.l.b16 %v429
    %v2421 = vunpack.c.h.b16 %v429
    %v2422 = vunpack.c.l.b16 %v430
    %v2423 = vunpack.c.h.b16 %v430
    %v2424 = vunpack.c.l.b16 %v431
    %v2425 = vunpack.c.h.b16 %v431
    %v2426 = vunpack.c.l.b16 %v432
    %v2427 = vunpack.c.h.b16 %v432
    %v2428 = vunpack.c.l.b16 %v433
    %v2429 = vunpack.c.h.b16 %v433
    %v2430 = vunpack.c.l.b16 %v434
    %v2431 = vunpack.c.h.b16 %v434
    %v2432 = vunpack.c.l.b16 %v435
    %v2433 = vunpack.c.h.b16 %v435
    %v2434 = vunpack.c.l.b16 %v436
    %v2435 = vunpack.c.h.b16 %v436
    %v2436 = vunpack.c.l.b16 %v437
    %v2437 = vunpack.c.h.b16 %v437
    %v2438 = vunpack.c.l.b16 %v438
    %v2439 = vunpack.c.h.b16 %v438
    %v2440 = vunpack.c.l.b16 %v439
    %v2441 = vunpack.c.h.b16 %v439
    %v2442 = vunpack.c.l.b16 %v440
    %v2443 = vunpack.c.h.b16 %v440
    %v2444 = vunpack.c.l.b16 %v441
    %v2445 = vunpack.c.h.b16 %v441
    %v2446 = vunpack.c.l.b16 %v442
    %v2447 = vunpack.c.h.b16 %v442
    %v2448 = vunpack.c.l.b16 %v443
    %v2449 = vunpack.c.h.b16 %v443
    %v2450 = vunpack.c.l.b16 %v444
    %v2451 = vunpack.c.h.b16 %v444
    %v2452 = vunpack.c.l.b16 %v445
    %v2453 = vunpack.c.h.b16 %v445
    %v2454 = vunpack.c.l.b16 %v446
    %v2455 = vunpack.c.h.b16 %v446
    %v2456 = vunpack.c.l.b16 %v447
    %v2457 = vunpack.c.h.b16 %v447
    %v2458 = vunpack.c.l.b16 %v448
    %v2459 = vunpack.c.h.b16 %v448
    %v2460 = vunpack.c.l.b16 %v449
    %v2461 = vunpack.c.h.b16 %v449
    %v2462 = vunpack.c.l.b16 %v450
    %v2463 = vunpack.c.h.b16 %v450
    %v2464 = vunpack.c.l.b16 %v451
    %v2465 = vunpack.c.h.b16 %v451
    %v2466 = vunpack.c.l.b16 %v452
    %v2467 = vunpack.c.h.b16 %v452
    %v2468 = vunpack.c.l.b16 %v453
    %v2469 = vunpack.c.h.b16 %v453
    %v2470 = vunpack.c.l.b16 %v454
    %v2471 = vunpack.c.h.b16 %v454
    %v2472 = vunpack.c.l.b16 %v455
    %v2473 = vunpack.c.h.b16 %v455
    %v2474 = vunpack.c.l.b16 %v456
    %v2475 = vunpack.c.h.b16 %v456
    %v2476 = vunpack.c.l.b16 %v457
    %v2477 = vunpack.c.h.b16 %v457
    %v2478 = vunpack.c.l.b16 %v458
    %v2479 = vunpack.c.h.b16 %v458
    %v2480 = vunpack.c.l.b16 %v459
    %v2481 = vunpack.c.h.b16 %v459
    %v2482 = vunpack.c.l.b16 %v460
    %v2483 = vunpack.c.h.b16 %v460
    %v2484 = vunpack.c.l.b16 %v461
    %v2485 = vunpack.c.h.b16 %v461
    %v2486 = vunpack.c.l.b16 %v462
    %v2487 = vunpack.c.h.b16 %v462
    %v2488 = vunpack.c.l.b16 %v463
    %v2489 = vunpack.c.h.b16 %v463
    %v2490 = vunpack.c.l.b16 %v464
    %v2491 = vunpack.c.h.b16 %v464
    %v2492 = vunpack.c.l.b16 %v465
    %v2493 = vunpack.c.h.b16 %v465
    %v2494 = vunpack.c.l.b16 %v466
    %v2495 = vunpack.c.h.b16 %v466
    %v2496 = vunpack.c.l.b16 %v467
    %v2497 = vunpack.c.h.b16 %v467
    %v2498 = vunpack.c.l.b16 %v468
    %v2499 = vunpack.c.h.b16 %v468
    %v2500 = vunpack.c.l.b16 %v469
    %v2501 = vunpack.c.h.b16 %v469
    %v2502 = vunpack.c.l.b16 %v470
    %v2503 = vunpack.c.h.b16 %v470
    %v2504 = vunpack.c.l.b16 %v471
    %v2505 = vunpack.c.h.b16 %v471
    %v2506 = vunpack.c.l.b16 %v472
    %v2507 = vunpack.c.h.b16 %v472
    %v2508 = vunpack.c.l.b16 %v473
    %v2509 = vunpack.c.h.b16 %v473
    %v2510 = vunpack.c.l.b16 %v474
    %v2511 = vunpack.c.h.b16 %v474
    %v2512 = vunpack.c.l.b16 %v475
    %v2513 = vunpack.c.h.b16 %v475
    %v2514 = vunpack.c.l.b16 %v476
    %v2515 = vunpack.c.h.b16 %v476
    %v2516 = vunpack.c.l.b16 %v477
    %v2517 = vunpack.c.h.b16 %v477
    %v2518 = vunpack.c.l.b16 %v478
    %v2519 = vunpack.c.h.b16 %v478
    %v2520 = vunpack.c.l.b16 %v479
    %v2521 = vunpack.c.h.b16 %v479
    %v2522 = vunpack.c.l.b16 %v480
    %v2523 = vunpack.c.h.b16 %v480
    %v2524 = vunpack.c.l.b16 %v481
    %v2525 = vunpack.c.h.b16 %v481
    %v2526 = vunpack.c.l.b16 %v482
    %v2527 = vunpack.c.h.b16 %v482
    %v2528 = vunpack.c.l.b16 %v483
    %v2529 = vunpack.c.h.b16 %v483
    %v2530 = vunpack.c.l.b16 %v484
    %v2531 = vunpack.c.h.b16 %v484
    %v2532 = vunpack.c.l.b16 %v485
    %v2533 = vunpack.c.h.b16 %v485
    %v2534 = vunpack.c.l.b16 %v486
    %v2535 = vunpack.c.h.b16 %v486
    %v2536 = vunpack.c.l.b16 %v487
    %v2537 = vunpack.c.h.b16 %v487
    %v2538 = vunpack.c.l.b16 %v488
    %v2539 = vunpack.c.h.b16 %v488
    %v2540 = vunpack.c.l.b16 %v489
    %v2541 = vunpack.c.h.b16 %v489
    %v2542 = vunpack.c.l.b16 %v490
    %v2543 = vunpack.c.h.b16 %v490
    %v2544 = vunpack.c.l.b16 %v491
    %v2545 = vunpack.c.h.b16 %v491
    %v2546 = vunpack.c.l.b16 %v492
    %v2547 = vunpack.c.h.b16 %v492
    %v2548 = vunpack.c.l.b16 %v493
    %v2549 = vunpack.c.h.b16 %v493
    %v2550 = vunpack.c.l.b16 %v494
    %v2551 = vunpack.c.h.b16 %v494
    %v2552 = vunpack.c.l.b16 %v495
    %v2553 = vunpack.c.h.b16 %v495
    %v2554 = vunpack.c.l.b16 %v496
    %v2555 = vunpack.c.h.b16 %v496
    %v2556 = vunpack.c.l.b16 %v497
    %v2557 = vunpack.c.h.b16 %v497
    %v2558 = vunpack.c.l.b16 %v498
    %v2559 = vunpack.c.h.b16 %v498
    %v2560 = vunpack.c.l.b16 %v499
    %v2561 = vunpack.c.h.b16 %v499
    %v2562 = vunpack.c.l.b16 %v500
    %v2563 = vunpack.c.h.b16 %v500
    %v2564 = vunpack.c.l.b16 %v501
    %v2565 = vunpack.c.h.b16 %v501
    %v2566 = vunpack.c.l.b16 %v502
    %v2567 = vunpack.c.h.b16 %v502
    %v2568 = vunpack.c.l.b16 %v503
    %v2569 = vunpack.c.h.b16 %v503
    %v2570 = vunpack.c.l.b16 %v504
    %v2571 = vunpack.c.h.b16 %v504
    %v2572 = vunpack.c.l.b16 %v505
    %v2573 = vunpack.c.h.b16 %v505
    %v2574 = vunpack.c.l.b16 %v506
    %v2575 = vunpack.c.h.b16 %v506
    %v2576 = vunpack.c.l.b16 %v507
    %v2577 = vunpack.c.h.b16 %v507
    %v2578 = vunpack.c.l.b16 %v508
    %v2579 = vunpack.c.h.b16 %v508
    %v2580 = vunpack.c.l.b16 %v509
    %v2581 = vunpack.c.h.b16 %v509
    %v2582 = vunpack.c.l.b16 %v510
    %v2583 = vunpack.c.h.b16 %v510
    %v2584 = vunpack.c.l.b16 %v511
    %v2585 = vunpack.c.h.b16 %v511
    %v2586 = vunpack.c.l.b16 %v512
    %v2587 = vunpack.c.h.b16 %v512
    %v2588 = vunpack.c.l.b16 %v513
    %v2589 = vunpack.c.h.b16 %v513
    %v2590 = vunpack.c.l.b16 %v514
    %v2591 = vunpack.c.h.b16 %v514
    %v2592 = vunpack.c.l.b16 %v515
    %v2593 = vunpack.c.h.b16 %v515
    %v2594 = vunpack.c.l.b16 %v516
    %v2595 = vunpack.c.h.b16 %v516
    %v2596 = vunpack.c.l.b16 %v517
    %v2597 = vunpack.c.h.b16 %v517
    %v2598 = vunpack.c.l.b16 %v518
    %v2599 = vunpack.c.h.b16 %v518
    %v2600 = vunpack.c.l.b16 %v519
    %v2601 = vunpack.c.h.b16 %v519
    %v2602 = vunpack.c.l.b16 %v520
    %v2603 = vunpack.c.h.b16 %v520
    %v2604 = vunpack.c.l.b16 %v521
    %v2605 = vunpack.c.h.b16 %v521
    %v2606 = vunpack.c.l.b16 %v522
    %v2607 = vunpack.c.h.b16 %v522
    %v2608 = vunpack.c.l.b16 %v523
    %v2609 = vunpack.c.h.b16 %v523
    %v2610 = vunpack.c.l.b16 %v524
    %v2611 = vunpack.c.h.b16 %v524
    %v2612 = vunpack.c.l.b16 %v525
    %v2613 = vunpack.c.h.b16 %v525
    %v2614 = vunpack.c.l.b16 %v526
    %v2615 = vunpack.c.h.b16 %v526
    %v2616 = vunpack.c.l.b16 %v527
    %v2617 = vunpack.c.h.b16 %v527
    %v2618 = vunpack.c.l.b16 %v528
    %v2619 = vunpack.c.h.b16 %v528
    %v2620 = vunpack.c.l.b16 %v529
    %v2621 = vunpack.c.h.b16 %v529
    %v2622 = vunpack.c.l.b16 %v530
    %v2623 = vunpack.c.h.b16 %v530
    %v2624 = vunpack.c.l.b16 %v531
    %v2625 = vunpack.c.h.b16 %v531
    %v2626 = vunpack.c.l.b16 %v532
    %v2627 = vunpack.c.h.b16 %v532
    %v2628 = vunpack.c.l.b16 %v533
    %v2629 = vunpack.c.h.b16 %v533
    %v2630 = vunpack.c.l.b16 %v534
    %v2631 = vunpack.c.h.b16 %v534
    %v2632 = vunpack.c.l.b16 %v535
    %v2633 = vunpack.c.h.b16 %v535
    %v2634 = vunpack.c.l.b16 %v536
    %v2635 = vunpack.c.h.b16 %v536
    %v2636 = vunpack.c.l.b16 %v537
    %v2637 = vunpack.c.h.b16 %v537
    %v2638 = vunpack.c.l.b16 %v538
    %v2639 = vunpack.c.h.b16 %v538
    %v2640 = vunpack.c.l.b16 %v539
    %v2641 = vunpack.c.h.b16 %v539
    %v2642 = vunpack.c.l.b16 %v540
    %v2643 = vunpack.c.h.b16 %v540
    %v2644 = vunpack.c.l.b16 %v541
    %v2645 = vunpack.c.h.b16 %v541
    %v2646 = vunpack.c.l.b16 %v542
    %v2647 = vunpack.c.h.b16 %v542
    %v2648 = vunpack.c.l.b16 %v543
    %v2649 = vunpack.c.h.b16 %v543
    %v2650 = vunpack.c.l.b16 %v544
    %v2651 = vunpack.c.h.b16 %v544
    %v2652 = vunpack.c.l.b16 %v545
    %v2653 = vunpack.c.h.b16 %v545
    %v2654 = vunpack.c.l.b16 %v546
    %v2655 = vunpack.c.h.b16 %v546
    %v2656 = vunpack.c.l.b16 %v547
    %v2657 = vunpack.c.h.b16 %v547
    %v2658 = vunpack.c.l.b16 %v548
    %v2659 = vunpack.c.h.b16 %v548
    %v2660 = vunpack.c.l.b16 %v549
    %v2661 = vunpack.c.h.b16 %v549
    %v2662 = vunpack.c.l.b16 %v550
    %v2663 = vunpack.c.h.b16 %v550
    %v2664 = vunpack.c.l.b16 %v551
    %v2665 = vunpack.c.h.b16 %v551
    %v2666 = vunpack.c.l.b16 %v552
    %v2667 = vunpack.c.h.b16 %v552
    %v2668 = vunpack.c.l.b16 %v553
    %v2669 = vunpack.c.h.b16 %v553
    %v2670 = vunpack.c.l.b16 %v554
    %v2671 = vunpack.c.h.b16 %v554
    %v2672 = vunpack.c.l.b16 %v555
    %v2673 = vunpack.c.h.b16 %v555
    %v2674 = vunpack.c.l.b16 %v556
    %v2675 = vunpack.c.h.b16 %v556
    %v2676 = vunpack.c.l.b16 %v557
    %v2677 = vunpack.c.h.b16 %v557
    %v2678 = vunpack.c.l.b16 %v558
    %v2679 = vunpack.c.h.b16 %v558
    %v2680 = vunpack.c.l.b16 %v559
    %v2681 = vunpack.c.h.b16 %v559
    %v2682 = vunpack.c.l.b16 %v560
    %v2683 = vunpack.c.h.b16 %v560
    %v2684 = vunpack.c.l.b16 %v561
    %v2685 = vunpack.c.h.b16 %v561
    %v2686 = vunpack.c.l.b16 %v562
    %v2687 = vunpack.c.h.b16 %v562
    %v2688 = vunpack.c.l.b16 %v563
    %v2689 = vunpack.c.h.b16 %v563
    %v2690 = vunpack.c.l.b16 %v564
    %v2691 = vunpack.c.h.b16 %v564
    %v2692 = vunpack.c.l.b16 %v565
    %v2693 = vunpack.c.h.b16 %v565
    %v2694 = vunpack.c.l.b16 %v566
    %v2695 = vunpack.c.h.b16 %v566
    %v2696 = vunpack.c.l.b16 %v567
    %v2697 = vunpack.c.h.b16 %v567
    %v2698 = vunpack.c.l.b16 %v568
    %v2699 = vunpack.c.h.b16 %v568
    %v2700 = vunpack.c.l.b16 %v569
    %v2701 = vunpack.c.h.b16 %v569
    %v2702 = vunpack.c.l.b16 %v570
    %v2703 = vunpack.c.h.b16 %v570
    %v2704 = vunpack.c.l.b16 %v571
    %v2705 = vunpack.c.h.b16 %v571
    %v2706 = vunpack.c.l.b16 %v572
    %v2707 = vunpack.c.h.b16 %v572
    %v2708 = vunpack.c.l.b16 %v573
    %v2709 = vunpack.c.h.b16 %v573
    %v2710 = vunpack.c.l.b16 %v574
    %v2711 = vunpack.c.h.b16 %v574
    %v2712 = vunpack.c.l.b16 %v575
    %v2713 = vunpack.c.h.b16 %v575
    %v2714 = vunpack.c.l.b16 %v576
    %v2715 = vunpack.c.h.b16 %v576
    %v2716 = vunpack.c.l.b16 %v577
    %v2717 = vunpack.c.h.b16 %v577
    %v2718 = vunpack.c.l.b16 %v578
    %v2719 = vunpack.c.h.b16 %v578
    %v2720 = vunpack.c.l.b16 %v579
    %v2721 = vunpack.c.h.b16 %v579
    %v2722 = vunpack.c.l.b16 %v580
    %v2723 = vunpack.c.h.b16 %v580
    %v2724 = vunpack.c.l.b16 %v581
    %v2725 = vunpack.c.h.b16 %v581
    %v2726 = vunpack.c.l.b16 %v582
    %v2727 = vunpack.c.h.b16 %v582
    %v2728 = vunpack.c.l.b16 %v583
    %v2729 = vunpack.c.h.b16 %v583
    %v2730 = vunpack.c.l.b16 %v584
    %v2731 = vunpack.c.h.b16 %v584
    %v2732 = vunpack.c.l.b16 %v585
    %v2733 = vunpack.c.h.b16 %v585
    %v2734 = vunpack.c.l.b16 %v586
    %v2735 = vunpack.c.h.b16 %v586
    %v2736 = vunpack.c.l.b16 %v587
    %v2737 = vunpack.c.h.b16 %v587
    %v2738 = vunpack.c.l.b16 %v588
    %v2739 = vunpack.c.h.b16 %v588
    %v2740 = vunpack.c.l.b16 %v589
    %v2741 = vunpack.c.h.b16 %v589
    %v2742 = vunpack.c.l.b16 %v590
    %v2743 = vunpack.c.h.b16 %v590
    %v2744 = vunpack.c.l.b16 %v591
    %v2745 = vunpack.c.h.b16 %v591
    %v2746 = vunpack.c.l.b16 %v592
    %v2747 = vunpack.c.h.b16 %v592
    %v2748 = vunpack.c.l.b16 %v593
    %v2749 = vunpack.c.h.b16 %v593
    %v2750 = vunpack.c.l.b16 %v594
    %v2751 = vunpack.c.h.b16 %v594
    %v2752 = vunpack.c.l.b16 %v595
    %v2753 = vunpack.c.h.b16 %v595
    %v2754 = vunpack.c.l.b16 %v596
    %v2755 = vunpack.c.h.b16 %v596
    %v2756 = vunpack.c.l.b16 %v597
    %v2757 = vunpack.c.h.b16 %v597
    %v2758 = vunpack.c.l.b16 %v598
    %v2759 = vunpack.c.h.b16 %v598
    %v2760 = vunpack.c.l.b16 %v599
    %v2761 = vunpack.c.h.b16 %v599
    %v2762 = vunpack.c.l.b16 %v600
    %v2763 = vunpack.c.h.b16 %v600
    %v2764 = vunpack.c.l.b16 %v601
    %v2765 = vunpack.c.h.b16 %v601
    %v2766 = vunpack.c.l.b16 %v602
    %v2767 = vunpack.c.h.b16 %v602
    %v2768 = vunpack.c.l.b16 %v603
    %v2769 = vunpack.c.h.b16 %v603
    %v2770 = vunpack.c.l.b16 %v604
    %v2771 = vunpack.c.h.b16 %v604
    %v2772 = vunpack.c.l.b16 %v605
    %v2773 = vunpack.c.h.b16 %v605
    %v2774 = vunpack.c.l.b16 %v606
    %v2775 = vunpack.c.h.b16 %v606
    %v2776 = vunpack.c.l.b16 %v607
    %v2777 = vunpack.c.h.b16 %v607
    %v2778 = vunpack.c.l.b16 %v608
    %v2779 = vunpack.c.h.b16 %v608
    %v2780 = vunpack.c.l.b16 %v609
    %v2781 = vunpack.c.h.b16 %v609
    %v2782 = vunpack.c.l.b16 %v610
    %v2783 = vunpack.c.h.b16 %v610
    %v2784 = vunpack.c.l.b16 %v611
    %v2785 = vunpack.c.h.b16 %v611
    %v2786 = vunpack.c.l.b16 %v612
    %v2787 = vunpack.c.h.b16 %v612
    %v2788 = vunpack.c.l.b16 %v613
    %v2789 = vunpack.c.h.b16 %v613
    %v2790 = vunpack.c.l.b16 %v614
    %v2791 = vunpack.c.h.b16 %v614
    %v2792 = vunpack.c.l.b16 %v615
    %v2793 = vunpack.c.h.b16 %v615
    %v2794 = vunpack.c.l.b16 %v616
    %v2795 = vunpack.c.h.b16 %v616
    %v2796 = vunpack.c.l.b16 %v617
    %v2797 = vunpack.c.h.b16 %v617
    %v2798 = vunpack.c.l.b16 %v618
    %v2799 = vunpack.c.h.b16 %v618
    %v2800 = vunpack.c.l.b16 %v619
    %v2801 = vunpack.c.h.b16 %v619
    %v2802 = vunpack.c.l.b16 %v620
    %v2803 = vunpack.c.h.b16 %v620
    %v2804 = vunpack.c.l.b16 %v621
    %v2805 = vunpack.c.h.b16 %v621
    %v2806 = vunpack.c.l.b16 %v622
    %v2807 = vunpack.c.h.b16 %v622
    %v2808 = vunpack.c.l.b16 %v623
    %v2809 = vunpack.c.h.b16 %v623
    %v2810 = vunpack.c.l.b16 %v624
    %v2811 = vunpack.c.h.b16 %v624
    %v2812 = vunpack.c.l.b16 %v625
    %v2813 = vunpack.c.h.b16 %v625
    %v2814 = vunpack.c.l.b16 %v626
    %v2815 = vunpack.c.h.b16 %v626
    %v2816 = vunpack.c.l.b16 %v627
    %v2817 = vunpack.c.h.b16 %v627
    %v2818 = vunpack.c.l.b16 %v628
    %v2819 = vunpack.c.h.b16 %v628
    %v2820 = vunpack.c.l.b16 %v629
    %v2821 = vunpack.c.h.b16 %v629
    %v2822 = vunpack.c.l.b16 %v630
    %v2823 = vunpack.c.h.b16 %v630
    %v2824 = vunpack.c.l.b16 %v631
    %v2825 = vunpack.c.h.b16 %v631
    %v2826 = vunpack.c.l.b16 %v632
    %v2827 = vunpack.c.h.b16 %v632
    %v2828 = vunpack.c.l.b16 %v633
    %v2829 = vunpack.c.h.b16 %v633
    %v2830 = vunpack.c.l.b16 %v634
    %v2831 = vunpack.c.h.b16 %v634
    %v2832 = vunpack.c.l.b16 %v635
    %v2833 = vunpack.c.h.b16 %v635
    %v2834 = vunpack.c.l.b16 %v636
    %v2835 = vunpack.c.h.b16 %v636
    %v2836 = vunpack.c.l.b16 %v637
    %v2837 = vunpack.c.h.b16 %v637
    %v2838 = vunpack.c.l.b16 %v638
    %v2839 = vunpack.c.h.b16 %v638
    %v2840 = vunpack.c.l.b16 %v639
    %v2841 = vunpack.c.h.b16 %v639
    %v2842 = vunpack.c.l.b16 %v640
    %v2843 = vunpack.c.h.b16 %v640
    %v2844 = vunpack.c.l.b16 %v641
    %v2845 = vunpack.c.h.b16 %v641
    %v2846 = vunpack.c.l.b16 %v642
    %v2847 = vunpack.c.h.b16 %v642
    %v2848 = vunpack.c.l.b16 %v643
    %v2849 = vunpack.c.h.b16 %v643
    %v2850 = vunpack.c.l.b16 %v644
    %v2851 = vunpack.c.h.b16 %v644
    %v2852 = vunpack.c.l.b16 %v645
    %v2853 = vunpack.c.h.b16 %v645
    %v2854 = vunpack.c.l.b16 %v646
    %v2855 = vunpack.c.h.b16 %v646
    %v2856 = vunpack.c.l.b16 %v647
    %v2857 = vunpack.c.h.b16 %v647
    %v2858 = vunpack.c.l.b16 %v648
    %v2859 = vunpack.c.h.b16 %v648
    %v2860 = vunpack.c.l.b16 %v649
    %v2861 = vunpack.c.h.b16 %v649
    %v2862 = vunpack.c.l.b16 %v650
    %v2863 = vunpack.c.h.b16 %v650
    %v2864 = vunpack.c.l.b16 %v651
    %v2865 = vunpack.c.h.b16 %v651
    %v2866 = vunpack.c.l.b16 %v652
    %v2867 = vunpack.c.h.b16 %v652
    %v2868 = vunpack.c.l.b16 %v653
    %v2869 = vunpack.c.h.b16 %v653
    %v2870 = vunpack.c.l.b16 %v654
    %v2871 = vunpack.c.h.b16 %v654
    %v2872 = vunpack.c.l.b16 %v655
    %v2873 = vunpack.c.h.b16 %v655
    %v2874 = vunpack.c.l.b16 %v656
    %v2875 = vunpack.c.h.b16 %v656
    %v2876 = vunpack.c.l.b16 %v657
    %v2877 = vunpack.c.h.b16 %v657
    %v2878 = vunpack.c.l.b16 %v658
    %v2879 = vunpack.c.h.b16 %v658
    %v2880 = vunpack.c.l.b16 %v659
    %v2881 = vunpack.c.h.b16 %v659
    %v2882 = vunpack.c.l.b16 %v660
    %v2883 = vunpack.c.h.b16 %v660
    %v2884 = vunpack.c.l.b16 %v661
    %v2885 = vunpack.c.h.b16 %v661
    %v2886 = vunpack.c.l.b16 %v662
    %v2887 = vunpack.c.h.b16 %v662
    %v2888 = vunpack.c.l.b16 %v663
    %v2889 = vunpack.c.h.b16 %v663
    %v2890 = vunpack.c.l.b16 %v664
    %v2891 = vunpack.c.h.b16 %v664
    %v2892 = vunpack.c.l.b16 %v665
    %v2893 = vunpack.c.h.b16 %v665
    %v2894 = vunpack.c.l.b16 %v666
    %v2895 = vunpack.c.h.b16 %v666
    %v2896 = vunpack.c.l.b16 %v667
    %v2897 = vunpack.c.h.b16 %v667
    %v2898 = vunpack.c.l.b16 %v668
    %v2899 = vunpack.c.h.b16 %v668
    %v2900 = vunpack.c.l.b16 %v669
    %v2901 = vunpack.c.h.b16 %v669
    %v2902 = vunpack.c.l.b16 %v670
    %v2903 = vunpack.c.h.b16 %v670
    %v2904 = vunpack.c.l.b16 %v671
    %v2905 = vunpack.c.h.b16 %v671
    %v2906 = vunpack.c.l.b16 %v672
    %v2907 = vunpack.c.h.b16 %v672
    %v2908 = vunpack.c.l.b16 %v673
    %v2909 = vunpack.c.h.b16 %v673
    %v2910 = vunpack.c.l.b16 %v674
    %v2911 = vunpack.c.h.b16 %v674
    %v2912 = vunpack.c.l.b16 %v675
    %v2913 = vunpack.c.h.b16 %v675
    %v2914 = vunpack.c.l.b16 %v676
    %v2915 = vunpack.c.h.b16 %v676
    %v2916 = vunpack.c.l.b16 %v677
    %v2917 = vunpack.c.h.b16 %v677
    %v2918 = vunpack.c.l.b16 %v678
    %v2919 = vunpack.c.h.b16 %v678
    %v2920 = vunpack.c.l.b16 %v679
    %v2921 = vunpack.c.h.b16 %v679
    %v2922 = vunpack.c.l.b16 %v680
    %v2923 = vunpack.c.h.b16 %v680
    %v2924 = vunpack.c.l.b16 %v681
    %v2925 = vunpack.c.h.b16 %v681
    %v2926 = vunpack.c.l.b16 %v682
    %v2927 = vunpack.c.h.b16 %v682
    %v2928 = vunpack.c.l.b16 %v683
    %v2929 = vunpack.c.h.b16 %v683
    %v2930 = vunpack.c.l.b16 %v684
    %v2931 = vunpack.c.h.b16 %v684
    %v2932 = vunpack.c.l.b16 %v685
    %v2933 = vunpack.c.h.b16 %v685
    %v2934 = vunpack.c.l.b16 %v686
    %v2935 = vunpack.c.h.b16 %v686
    %v2936 = vunpack.c.l.b16 %v687
    %v2937 = vunpack.c.h.b16 %v687
    %v2938 = vunpack.c.l.b16 %v688
    %v2939 = vunpack.c.h.b16 %v688
    %v2940 = vunpack.c.l.b16 %v689
    %v2941 = vunpack.c.h.b16 %v689
    %v2942 = vunpack.c.l.b16 %v690
    %v2943 = vunpack.c.h.b16 %v690
    %v2944 = vunpack.c.l.b16 %v691
    %v2945 = vunpack.c.h.b16 %v691
    %v2946 = vunpack.c.l.b16 %v692
    %v2947 = vunpack.c.h.b16 %v692
    %v2948 = vunpack.c.l.b16 %v693
    %v2949 = vunpack.c.h.b16 %v693
    %v2950 = vunpack.c.l.b16 %v694
    %v2951 = vunpack.c.h.b16 %v694
    %v2952 = vunpack.c.l.b16 %v695
    %v2953 = vunpack.c.h.b16 %v695
    %v2954 = vunpack.c.l.b16 %v696
    %v2955 = vunpack.c.h.b16 %v696
    %v2956 = vunpack.c.l.b16 %v697
    %v2957 = vunpack.c.h.b16 %v697
    %v2958 = vunpack.c.l.b16 %v698
    %v2959 = vunpack.c.h.b16 %v698
    %v2960 = vunpack.c.l.b16 %v699
    %v2961 = vunpack.c.h.b16 %v699
    %v2962 = vunpack.c.l.b16 %v700
    %v2963 = vunpack.c.h.b16 %v700
    %v2964 = vunpack.c.l.b16 %v701
    %v2965 = vunpack.c.h.b16 %v701
    %v2966 = vunpack.c.l.b16 %v702
    %v2967 = vunpack.c.h.b16 %v702
    %v2968 = vunpack.c.l.b16 %v703
    %v2969 = vunpack.c.h.b16 %v703
    %v2970 = vunpack.c.l.b16 %v704
    %v2971 = vunpack.c.h.b16 %v704
    %v2972 = vunpack.c.l.b16 %v705
    %v2973 = vunpack.c.h.b16 %v705
    %v2974 = vunpack.c.l.b16 %v706
    %v2975 = vunpack.c.h.b16 %v706
    %v2976 = vunpack.c.l.b16 %v707
    %v2977 = vunpack.c.h.b16 %v707
    %v2978 = vunpack.c.l.b16 %v708
    %v2979 = vunpack.c.h.b16 %v708
    %v2980 = vunpack.c.l.b16 %v709
    %v2981 = vunpack.c.h.b16 %v709
    %v2982 = vunpack.c.l.b16 %v710
    %v2983 = vunpack.c.h.b16 %v710
    %v2984 = vunpack.c.l.b16 %v711
    %v2985 = vunpack.c.h.b16 %v711
    %v2986 = vunpack.c.l.b16 %v712
    %v2987 = vunpack.c.h.b16 %v712
    %v2988 = vunpack.c.l.b16 %v713
    %v2989 = vunpack.c.h.b16 %v713
    %v2990 = vunpack.c.l.b16 %v714
    %v2991 = vunpack.c.h.b16 %v714
    %v2992 = vunpack.c.l.b16 %v715
    %v2993 = vunpack.c.h.b16 %v715
    %v2994 = vunpack.c.l.b16 %v716
    %v2995 = vunpack.c.h.b16 %v716
    %v2996 = vunpack.c.l.b16 %v717
    %v2997 = vunpack.c.h.b16 %v717
    %v2998 = vunpack.c.l.b16 %v718
    %v2999 = vunpack.c.h.b16 %v718
    %v3000 = vunpack.c.l.b16 %v719
    %v3001 = vunpack.c.h.b16 %v719
    %v3002 = vunpack.c.l.b16 %v720
    %v3003 = vunpack.c.h.b16 %v720
    %v3004 = vunpack.c.l.b16 %v721
    %v3005 = vunpack.c.h.b16 %v721
    %v3006 = vunpack.c.l.b16 %v722
    %v3007 = vunpack.c.h.b16 %v722
    %v3008 = vunpack.c.l.b16 %v723
    %v3009 = vunpack.c.h.b16 %v723
    %v3010 = vunpack.c.l.b16 %v724
    %v3011 = vunpack.c.h.b16 %v724
    %v3012 = vunpack.c.l.b16 %v725
    %v3013 = vunpack.c.h.b16 %v725
    %v3014 = vunpack.c.l.b16 %v726
    %v3015 = vunpack.c.h.b16 %v726
    %v3016 = vunpack.c.l.b16 %v727
    %v3017 = vunpack.c.h.b16 %v727
    %v3018 = vunpack.c.l.b16 %v728
    %v3019 = vunpack.c.h.b16 %v728
    %v3020 = vunpack.c.l.b16 %v729
    %v3021 = vunpack.c.h.b16 %v729
    %v3022 = vunpack.c.l.b16 %v730
    %v3023 = vunpack.c.h.b16 %v730
    %v3024 = vunpack.c.l.b16 %v731
    %v3025 = vunpack.c.h.b16 %v731
    %v3026 = vunpack.c.l.b16 %v732
    %v3027 = vunpack.c.h.b16 %v732
    %v3028 = vunpack.c.l.b16 %v733
    %v3029 = vunpack.c.h.b16 %v733
    %v3030 = vunpack.c.l.b16 %v734
    %v3031 = vunpack.c.h.b16 %v734
    %v3032 = vunpack.c.l.b16 %v735
    %v3033 = vunpack.c.h.b16 %v735
    %v3034 = vunpack.c.l.b16 %v736
    %v3035 = vunpack.c.h.b16 %v736
    %v3036 = vunpack.c.l.b16 %v737
    %v3037 = vunpack.c.h.b16 %v737
    %v3038 = vunpack.c.l.b16 %v738
    %v3039 = vunpack.c.h.b16 %v738
    %v3040 = vunpack.c.l.b16 %v739
    %v3041 = vunpack.c.h.b16 %v739
    %v3042 = vunpack.c.l.b16 %v740
    %v3043 = vunpack.c.h.b16 %v740
    %v3044 = vunpack.c.l.b16 %v741
    %v3045 = vunpack.c.h.b16 %v741
    %v3046 = vunpack.c.l.b16 %v742
    %v3047 = vunpack.c.h.b16 %v742
    %v3048 = vunpack.c.l.b16 %v743
    %v3049 = vunpack.c.h.b16 %v743
    %v3050 = vunpack.c.l.b16 %v744
    %v3051 = vunpack.c.h.b16 %v744
    %v3052 = vunpack.c.l.b16 %v745
    %v3053 = vunpack.c.h.b16 %v745
    %v3054 = vunpack.c.l.b16 %v746
    %v3055 = vunpack.c.h.b16 %v746
    %v3056 = vunpack.c.l.b16 %v747
    %v3057 = vunpack.c.h.b16 %v747
    %v3058 = vunpack.c.l.b16 %v748
    %v3059 = vunpack.c.h.b16 %v748
    %v3060 = vunpack.c.l.b16 %v749
    %v3061 = vunpack.c.h.b16 %v749
    %v3062 = vunpack.c.l.b16 %v750
    %v3063 = vunpack.c.h.b16 %v750
    %v3064 = vunpack.c.l.b16 %v751
    %v3065 = vunpack.c.h.b16 %v751
    %v3066 = vunpack.c.l.b16 %v752
    %v3067 = vunpack.c.h.b16 %v752
    %v3068 = vunpack.c.l.b16 %v753
    %v3069 = vunpack.c.h.b16 %v753
    %v3070 = vunpack.c.l.b16 %v754
    %v3071 = vunpack.c.h.b16 %v754
    %v3072 = vunpack.c.l.b16 %v755
    %v3073 = vunpack.c.h.b16 %v755
    %v3074 = vunpack.c.l.b16 %v756
    %v3075 = vunpack.c.h.b16 %v756
    %v3076 = vunpack.c.l.b16 %v757
    %v3077 = vunpack.c.h.b16 %v757
    %v3078 = vunpack.c.l.b16 %v758
    %v3079 = vunpack.c.h.b16 %v758
    %v3080 = vunpack.c.l.b16 %v759
    %v3081 = vunpack.c.h.b16 %v759
    %v3082 = vunpack.c.l.b16 %v760
    %v3083 = vunpack.c.h.b16 %v760
    %v3084 = vunpack.c.l.b16 %v761
    %v3085 = vunpack.c.h.b16 %v761
    %v3086 = vunpack.c.l.b16 %v762
    %v3087 = vunpack.c.h.b16 %v762
    %v3088 = vunpack.c.l.b16 %v763
    %v3089 = vunpack.c.h.b16 %v763
    %v3090 = vunpack.c.l.b16 %v764
    %v3091 = vunpack.c.h.b16 %v764
    %v3092 = vunpack.c.l.b16 %v765
    %v3093 = vunpack.c.h.b16 %v765
    %v3094 = vunpack.c.l.b16 %v766
    %v3095 = vunpack.c.h.b16 %v766
    %v3096 = vunpack.c.l.b16 %v767
    %v3097 = vunpack.c.h.b16 %v767
    %v3098 = vunpack.c.l.b16 %v768
    %v3099 = vunpack.c.h.b16 %v768
    %v3100 = vunpack.c.l.b16 %v769
    %v3101 = vunpack.c.h.b16 %v769
    %v3102 = vunpack.c.l.b16 %v770
    %v3103 = vunpack.c.h.b16 %v770
    %v3104 = vunpack.c.l.b16 %v771
    %v3105 = vunpack.c.h.b16 %v771
    %v3106 = vunpack.c.l.b16 %v772
    %v3107 = vunpack.c.h.b16 %v772
    %v3108 = vunpack.c.l.b16 %v773
    %v3109 = vunpack.c.h.b16 %v773
    %v3110 = vunpack.c.l.b16 %v774
    %v3111 = vunpack.c.h.b16 %v774
    %v3112 = vunpack.c.l.b16 %v775
    %v3113 = vunpack.c.h.b16 %v775
    %v3114 = vunpack.c.l.b16 %v776
    %v3115 = vunpack.c.h.b16 %v776
    %v3116 = vunpack.c.l.b16 %v777
    %v3117 = vunpack.c.h.b16 %v777
    %v3118 = vunpack.c.l.b16 %v778
    %v3119 = vunpack.c.h.b16 %v778
    %v3120 = vunpack.c.l.b16 %v779
    %v3121 = vunpack.c.h.b16 %v779
    %v3122 = vunpack.c.l.b16 %v780
    %v3123 = vunpack.c.h.b16 %v780
    %v3124 = vunpack.c.l.b16 %v781
    %v3125 = vunpack.c.h.b16 %v781
    %v3126 = vunpack.c.l.b16 %v782
    %v3127 = vunpack.c.h.b16 %v782
    %v3128 = vunpack.c.l.b16 %v783
    %v3129 = vunpack.c.h.b16 %v783
    %v3130 = vunpack.c.l.b16 %v784
    %v3131 = vunpack.c.h.b16 %v784
    %v3132 = vunpack.c.l.b16 %v785
    %v3133 = vunpack.c.h.b16 %v785
    %v3134 = vunpack.c.l.b16 %v786
    %v3135 = vunpack.c.h.b16 %v786
    %v3136 = vunpack.c.l.b16 %v787
    %v3137 = vunpack.c.h.b16 %v787
    %v3138 = vunpack.c.l.b16 %v788
    %v3139 = vunpack.c.h.b16 %v788
    %v3140 = vunpack.c.l.b16 %v789
    %v3141 = vunpack.c.h.b16 %v789
    %v3142 = vunpack.c.l.b16 %v790
    %v3143 = vunpack.c.h.b16 %v790
    %v3144 = vunpack.c.l.b16 %v791
    %v3145 = vunpack.c.h.b16 %v791
    %v3146 = vunpack.c.l.b16 %v792
    %v3147 = vunpack.c.h.b16 %v792
    %v3148 = vunpack.c.l.b16 %v793
    %v3149 = vunpack.c.h.b16 %v793
    %v3150 = vunpack.c.l.b16 %v794
    %v3151 = vunpack.c.h.b16 %v794
    %v3152 = vunpack.c.l.b16 %v795
    %v3153 = vunpack.c.h.b16 %v795
    %v3154 = vunpack.c.l.b16 %v796
    %v3155 = vunpack.c.h.b16 %v796
    %v3156 = vunpack.c.l.b16 %v797
    %v3157 = vunpack.c.h.b16 %v797
    %v3158 = vunpack.c.l.b16 %v798
    %v3159 = vunpack.c.h.b16 %v798
    %v3160 = vunpack.c.l.b16 %v799
    %v3161 = vunpack.c.h.b16 %v799
    %v3162 = vunpack.c.l.b16 %v800
    %v3163 = vunpack.c.h.b16 %v800
    %v3164 = vunpack.c.l.b16 %v801
    %v3165 = vunpack.c.h.b16 %v801
    %v3166 = vunpack.c.l.b16 %v802
    %v3167 = vunpack.c.h.b16 %v802
    %v3168 = vunpack.c.l.b16 %v803
    %v3169 = vunpack.c.h.b16 %v803
    %v3170 = vunpack.c.l.b16 %v804
    %v3171 = vunpack.c.h.b16 %v804
    %v3172 = vunpack.c.l.b16 %v805
    %v3173 = vunpack.c.h.b16 %v805
    %v3174 = vunpack.c.l.b16 %v806
    %v3175 = vunpack.c.h.b16 %v806
    %v3176 = vunpack.c.l.b16 %v807
    %v3177 = vunpack.c.h.b16 %v807
    %v3178 = vunpack.c.l.b16 %v808
    %v3179 = vunpack.c.h.b16 %v808
    %v3180 = vunpack.c.l.b16 %v809
    %v3181 = vunpack.c.h.b16 %v809
    %v3182 = vunpack.c.l.b16 %v810
    %v3183 = vunpack.c.h.b16 %v810
    %v3184 = vunpack.c.l.b16 %v811
    %v3185 = vunpack.c.h.b16 %v811
    %v3186 = vunpack.c.l.b16 %v812
    %v3187 = vunpack.c.h.b16 %v812
    %v3188 = vunpack.c.l.b16 %v813
    %v3189 = vunpack.c.h.b16 %v813
    %v3190 = vunpack.c.l.b16 %v814
    %v3191 = vunpack.c.h.b16 %v814
    %v3192 = vunpack.c.l.b16 %v815
    %v3193 = vunpack.c.h.b16 %v815
    %v3194 = vunpack.c.l.b16 %v816
    %v3195 = vunpack.c.h.b16 %v816
    %v3196 = vunpack.c.l.b16 %v817
    %v3197 = vunpack.c.h.b16 %v817
    %v3198 = vunpack.c.l.b16 %v818
    %v3199 = vunpack.c.h.b16 %v818
    %v3200 = vunpack.c.l.b16 %v819
    %v3201 = vunpack.c.h.b16 %v819
    %v3202 = vunpack.c.l.b16 %v820
    %v3203 = vunpack.c.h.b16 %v820
    %v3204 = vunpack.c.l.b16 %v821
    %v3205 = vunpack.c.h.b16 %v821
    %v3206 = vunpack.c.l.b16 %v822
    %v3207 = vunpack.c.h.b16 %v822
    %v3208 = vunpack.c.l.b16 %v823
    %v3209 = vunpack.c.h.b16 %v823
    %v3210 = vunpack.c.l.b16 %v824
    %v3211 = vunpack.c.h.b16 %v824
    %v3212 = vunpack.c.l.b16 %v825
    %v3213 = vunpack.c.h.b16 %v825
    %v3214 = vunpack.c.l.b16 %v826
    %v3215 = vunpack.c.h.b16 %v826
    %v3216 = vunpack.c.l.b16 %v827
    %v3217 = vunpack.c.h.b16 %v827
    %v3218 = vunpack.c.l.b16 %v828
    %v3219 = vunpack.c.h.b16 %v828
    %v3220 = vunpack.c.l.b16 %v829
    %v3221 = vunpack.c.h.b16 %v829
    %v3222 = vunpack.c.l.b16 %v830
    %v3223 = vunpack.c.h.b16 %v830
    %v3224 = vunpack.c.l.b16 %v831
    %v3225 = vunpack.c.h.b16 %v831
    %v3226 = vunpack.c.l.b16 %v832
    %v3227 = vunpack.c.h.b16 %v832
    %v3228 = vunpack.c.l.b16 %v833
    %v3229 = vunpack.c.h.b16 %v833
    %v3230 = vunpack.c.l.b16 %v834
    %v3231 = vunpack.c.h.b16 %v834
    %v3232 = vunpack.c.l.b16 %v835
    %v3233 = vunpack.c.h.b16 %v835
    %v3234 = vunpack.c.l.b16 %v836
    %v3235 = vunpack.c.h.b16 %v836
    %v3236 = vunpack.c.l.b16 %v837
    %v3237 = vunpack.c.h.b16 %v837
    %v3238 = vunpack.c.l.b16 %v838
    %v3239 = vunpack.c.h.b16 %v838
    %v3240 = vunpack.c.l.b16 %v839
    %v3241 = vunpack.c.h.b16 %v839
    %v3242 = vunpack.c.l.b16 %v840
    %v3243 = vunpack.c.h.b16 %v840
    %v3244 = vunpack.c.l.b16 %v841
    %v3245 = vunpack.c.h.b16 %v841
    %v3246 = vunpack.c.l.b16 %v842
    %v3247 = vunpack.c.h.b16 %v842
    %v3248 = vunpack.c.l.b16 %v843
    %v3249 = vunpack.c.h.b16 %v843
    %v3250 = vunpack.c.l.b16 %v844
    %v3251 = vunpack.c.h.b16 %v844
    %v3252 = vunpack.c.l.b16 %v845
    %v3253 = vunpack.c.h.b16 %v845
    %v3254 = vunpack.c.l.b16 %v846
    %v3255 = vunpack.c.h.b16 %v846
    %v3256 = vunpack.c.l.b16 %v847
    %v3257 = vunpack.c.h.b16 %v847
    %v3258 = vunpack.c.l.b16 %v848
    %v3259 = vunpack.c.h.b16 %v848
    %v3260 = vunpack.c.l.b16 %v849
    %v3261 = vunpack.c.h.b16 %v849
    %v3262 = vunpack.c.l.b16 %v850
    %v3263 = vunpack.c.h.b16 %v850
    %v3264 = vunpack.c.l.b16 %v851
    %v3265 = vunpack.c.h.b16 %v851
    %v3266 = vunpack.c.l.b16 %v852
    %v3267 = vunpack.c.h.b16 %v852
    %v3268 = vunpack.c.l.b16 %v853
    %v3269 = vunpack.c.h.b16 %v853
    %v3270 = vunpack.c.l.b16 %v854
    %v3271 = vunpack.c.h.b16 %v854
    %v3272 = vunpack.c.l.b16 %v855
    %v3273 = vunpack.c.h.b16 %v855
    %v3274 = vunpack.c.l.b16 %v856
    %v3275 = vunpack.c.h.b16 %v856
    %v3276 = vunpack.c.l.b16 %v857
    %v3277 = vunpack.c.h.b16 %v857
    %v3278 = vunpack.c.l.b16 %v858
    %v3279 = vunpack.c.h.b16 %v858
    %v3280 = vunpack.c.l.b16 %v859
    %v3281 = vunpack.c.h.b16 %v859
    %v3282 = vunpack.c.l.b16 %v860
    %v3283 = vunpack.c.h.b16 %v860
    %v3284 = vunpack.c.l.b16 %v861
    %v3285 = vunpack.c.h.b16 %v861
    %v3286 = vunpack.c.l.b16 %v862
    %v3287 = vunpack.c.h.b16 %v862
    %v3288 = vunpack.c.l.b16 %v863
    %v3289 = vunpack.c.h.b16 %v863
    %v3290 = vunpack.c.l.b16 %v864
    %v3291 = vunpack.c.h.b16 %v864
    %v3292 = vunpack.c.l.b16 %v865
    %v3293 = vunpack.c.h.b16 %v865
    %v3294 = vunpack.c.l.b16 %v866
    %v3295 = vunpack.c.h.b16 %v866
    %v3296 = vunpack.c.l.b16 %v867
    %v3297 = vunpack.c.h.b16 %v867
    %v3298 = vunpack.c.l.b16 %v868
    %v3299 = vunpack.c.h.b16 %v868
    %v3300 = vunpack.c.l.b16 %v869
    %v3301 = vunpack.c.h.b16 %v869
    %v3302 = vunpack.c.l.b16 %v870
    %v3303 = vunpack.c.h.b16 %v870
    %v3304 = vunpack.c.l.b16 %v871
    %v3305 = vunpack.c.h.b16 %v871
    %v3306 = vunpack.c.l.b16 %v872
    %v3307 = vunpack.c.h.b16 %v872
    %v3308 = vunpack.c.l.b16 %v873
    %v3309 = vunpack.c.h.b16 %v873
    %v3310 = vunpack.c.l.b16 %v874
    %v3311 = vunpack.c.h.b16 %v874
    %v3312 = vunpack.c.l.b16 %v875
    %v3313 = vunpack.c.h.b16 %v875
    %v3314 = vunpack.c.l.b16 %v876
    %v3315 = vunpack.c.h.b16 %v876
    %v3316 = vunpack.c.l.b16 %v877
    %v3317 = vunpack.c.h.b16 %v877
    %v3318 = vunpack.c.l.b16 %v878
    %v3319 = vunpack.c.h.b16 %v878
    %v3320 = vunpack.c.l.b16 %v879
    %v3321 = vunpack.c.h.b16 %v879
    %v3322 = vunpack.c.l.b16 %v880
    %v3323 = vunpack.c.h.b16 %v880
    %v3324 = vunpack.c.l.b16 %v881
    %v3325 = vunpack.c.h.b16 %v881
    %v3326 = vunpack.c.l.b16 %v882
    %v3327 = vunpack.c.h.b16 %v882
    %v3328 = vunpack.c.l.b16 %v883
    %v3329 = vunpack.c.h.b16 %v883
    %v3330 = vunpack.c.l.b16 %v884
    %v3331 = vunpack.c.h.b16 %v884
    %v3332 = vunpack.c.l.b16 %v885
    %v3333 = vunpack.c.h.b16 %v885
    %v3334 = vunpack.c.l.b16 %v886
    %v3335 = vunpack.c.h.b16 %v886
    %v3336 = vunpack.c.l.b16 %v887
    %v3337 = vunpack.c.h.b16 %v887
    %v3338 = vunpack.c.l.b16 %v888
    %v3339 = vunpack.c.h.b16 %v888
    %v3340 = vunpack.c.l.b16 %v889
    %v3341 = vunpack.c.h.b16 %v889
    %v3342 = vunpack.c.l.b16 %v890
    %v3343 = vunpack.c.h.b16 %v890
    %v3344 = vunpack.c.l.b16 %v891
    %v3345 = vunpack.c.h.b16 %v891
    %v3346 = vunpack.c.l.b16 %v892
    %v3347 = vunpack.c.h.b16 %v892
    %v3348 = vunpack.c.l.b16 %v893
    %v3349 = vunpack.c.h.b16 %v893
    %v3350 = vunpack.c.l.b16 %v894
    %v3351 = vunpack.c.h.b16 %v894
    %v3352 = vunpack.c.l.b16 %v895
    %v3353 = vunpack.c.h.b16 %v895
    %v3354 = vunpack.c.l.b16 %v896
    %v3355 = vunpack.c.h.b16 %v896
    %v3356 = vunpack.c.l.b16 %v897
    %v3357 = vunpack.c.h.b16 %v897
    %v3358 = vunpack.c.l.b16 %v898
    %v3359 = vunpack.c.h.b16 %v898
    %v3360 = vunpack.c.l.b16 %v899
    %v3361 = vunpack.c.h.b16 %v899
    %v3362 = vunpack.c.l.b16 %v900
    %v3363 = vunpack.c.h.b16 %v900
    %v3364 = vunpack.c.l.b16 %v901
    %v3365 = vunpack.c.h.b16 %v901
    %v3366 = vunpack.c.l.b16 %v902
    %v3367 = vunpack.c.h.b16 %v902
    %v3368 = vunpack.c.l.b16 %v903
    %v3369 = vunpack.c.h.b16 %v903
    %v3370 = vunpack.c.l.b16 %v904
    %v3371 = vunpack.c.h.b16 %v904
    %v3372 = vunpack.c.l.b16 %v905
    %v3373 = vunpack.c.h.b16 %v905
    %v3374 = vunpack.c.l.b16 %v906
    %v3375 = vunpack.c.h.b16 %v906
    %v3376 = vunpack.c.l.b16 %v907
    %v3377 = vunpack.c.h.b16 %v907
    %v3378 = vunpack.c.l.b16 %v908
    %v3379 = vunpack.c.h.b16 %v908
    %v3380 = vunpack.c.l.b16 %v909
    %v3381 = vunpack.c.h.b16 %v909
    %v3382 = vunpack.c.l.b16 %v910
    %v3383 = vunpack.c.h.b16 %v910
    %v3384 = vunpack.c.l.b16 %v911
    %v3385 = vunpack.c.h.b16 %v911
    %v3386 = vunpack.c.l.b16 %v912
    %v3387 = vunpack.c.h.b16 %v912
    %v3388 = vunpack.c.l.b16 %v913
    %v3389 = vunpack.c.h.b16 %v913
    %v3390 = vunpack.c.l.b16 %v914
    %v3391 = vunpack.c.h.b16 %v914
    %v3392 = vunpack.c.l.b16 %v915
    %v3393 = vunpack.c.h.b16 %v915
    %v3394 = vunpack.c.l.b16 %v916
    %v3395 = vunpack.c.h.b16 %v916
    %v3396 = vunpack.c.l.b16 %v917
    %v3397 = vunpack.c.h.b16 %v917
    %v3398 = vunpack.c.l.b16 %v918
    %v3399 = vunpack.c.h.b16 %v918
    %v3400 = vunpack.c.l.b16 %v919
    %v3401 = vunpack.c.h.b16 %v919
    %v3402 = vunpack.c.l.b16 %v920
    %v3403 = vunpack.c.h.b16 %v920
    %v3404 = vunpack.c.l.b16 %v921
    %v3405 = vunpack.c.h.b16 %v921
    %v3406 = vunpack.c.l.b16 %v922
    %v3407 = vunpack.c.h.b16 %v922
    %v3408 = vunpack.c.l.b16 %v923
    %v3409 = vunpack.c.h.b16 %v923
    %v3410 = vunpack.c.l.b16 %v924
    %v3411 = vunpack.c.h.b16 %v924
    %v3412 = vunpack.c.l.b16 %v925
    %v3413 = vunpack.c.h.b16 %v925
    %v3414 = vunpack.c.l.b16 %v926
    %v3415 = vunpack.c.h.b16 %v926
    %v3416 = vunpack.c.l.b16 %v927
    %v3417 = vunpack.c.h.b16 %v927
    %v3418 = vunpack.c.l.b16 %v928
    %v3419 = vunpack.c.h.b16 %v928
    %v3420 = vunpack.c.l.b16 %v929
    %v3421 = vunpack.c.h.b16 %v929
    %v3422 = vunpack.c.l.b16 %v930
    %v3423 = vunpack.c.h.b16 %v930
    %v3424 = vunpack.c.l.b16 %v931
    %v3425 = vunpack.c.h.b16 %v931
    %v3426 = vunpack.c.l.b16 %v932
    %v3427 = vunpack.c.h.b16 %v932
    %v3428 = vunpack.c.l.b16 %v933
    %v3429 = vunpack.c.h.b16 %v933
    %v3430 = vunpack.c.l.b16 %v934
    %v3431 = vunpack.c.h.b16 %v934
    %v3432 = vunpack.c.l.b16 %v935
    %v3433 = vunpack.c.h.b16 %v935
    %v3434 = vunpack.c.l.b16 %v936
    %v3435 = vunpack.c.h.b16 %v936
    %v3436 = vunpack.c.l.b16 %v937
    %v3437 = vunpack.c.h.b16 %v937
    %v3438 = vunpack.c.l.b16 %v938
    %v3439 = vunpack.c.h.b16 %v938
    %v3440 = vunpack.c.l.b16 %v939
    %v3441 = vunpack.c.h.b16 %v939
    %v3442 = vunpack.c.l.b16 %v940
    %v3443 = vunpack.c.h.b16 %v940
    %v3444 = vunpack.c.l.b16 %v941
    %v3445 = vunpack.c.h.b16 %v941
    %v3446 = vunpack.c.l.b16 %v942
    %v3447 = vunpack.c.h.b16 %v942
    %v3448 = vunpack.c.l.b16 %v943
    %v3449 = vunpack.c.h.b16 %v943
    %v3450 = vunpack.c.l.b16 %v944
    %v3451 = vunpack.c.h.b16 %v944
    %v3452 = vunpack.c.l.b16 %v945
    %v3453 = vunpack.c.h.b16 %v945
    %v3454 = vunpack.c.l.b16 %v946
    %v3455 = vunpack.c.h.b16 %v946
    %v3456 = vunpack.c.l.b16 %v947
    %v3457 = vunpack.c.h.b16 %v947
    %v3458 = vunpack.c.l.b16 %v948
    %v3459 = vunpack.c.h.b16 %v948
    %v3460 = vunpack.c.l.b16 %v949
    %v3461 = vunpack.c.h.b16 %v949
    %v3462 = vunpack.c.l.b16 %v950
    %v3463 = vunpack.c.h.b16 %v950
    %v3464 = vunpack.c.l.b16 %v951
    %v3465 = vunpack.c.h.b16 %v951
    %v3466 = vunpack.c.l.b16 %v952
    %v3467 = vunpack.c.h.b16 %v952
    %v3468 = vunpack.c.l.b16 %v953
    %v3469 = vunpack.c.h.b16 %v953
    %v3470 = vunpack.c.l.b16 %v954
    %v3471 = vunpack.c.h.b16 %v954
    %v3472 = vunpack.c.l.b16 %v955
    %v3473 = vunpack.c.h.b16 %v955
    %v3474 = vunpack.c.l.b16 %v956
    %v3475 = vunpack.c.h.b16 %v956
    %v3476 = vunpack.c.l.b16 %v957
    %v3477 = vunpack.c.h.b16 %v957
    %v3478 = vunpack.c.l.b16 %v958
    %v3479 = vunpack.c.h.b16 %v958
    %v3480 = vunpack.c.l.b16 %v959
    %v3481 = vunpack.c.h.b16 %v959
    %v3482 = vunpack.c.l.b16 %v960
    %v3483 = vunpack.c.h.b16 %v960
    %v3484 = vunpack.c.l.b16 %v961
    %v3485 = vunpack.c.h.b16 %v961
    %v3486 = vunpack.c.l.b16 %v962
    %v3487 = vunpack.c.h.b16 %v962
    %v3488 = vunpack.c.l.b16 %v963
    %v3489 = vunpack.c.h.b16 %v963
    %v3490 = vunpack.c.l.b16 %v964
    %v3491 = vunpack.c.h.b16 %v964
    %v3492 = vunpack.c.l.b16 %v965
    %v3493 = vunpack.c.h.b16 %v965
    %v3494 = vunpack.c.l.b16 %v966
    %v3495 = vunpack.c.h.b16 %v966
    %v3496 = vunpack.c.l.b16 %v967
    %v3497 = vunpack.c.h.b16 %v967
    %v3498 = vunpack.c.l.b16 %v968
    %v3499 = vunpack.c.h.b16 %v968
    %v3500 = vunpack.c.l.b16 %v969
    %v3501 = vunpack.c.h.b16 %v969
    %v3502 = vunpack.c.l.b16 %v970
    %v3503 = vunpack.c.h.b16 %v970
    %v3504 = vunpack.c.l.b16 %v971
    %v3505 = vunpack.c.h.b16 %v971
    %v3506 = vunpack.c.l.b16 %v972
    %v3507 = vunpack.c.h.b16 %v972
    %v3508 = vunpack.c.l.b16 %v973
    %v3509 = vunpack.c.h.b16 %v973
    %v3510 = vunpack.c.l.b16 %v974
    %v3511 = vunpack.c.h.b16 %v974
    %v3512 = vunpack.c.l.b16 %v975
    %v3513 = vunpack.c.h.b16 %v975
    %v3514 = vunpack.c.l.b16 %v976
    %v3515 = vunpack.c.h.b16 %v976
    %v3516 = vunpack.c.l.b16 %v977
    %v3517 = vunpack.c.h.b16 %v977
    %v3518 = vunpack.c.l.b16 %v978
    %v3519 = vunpack.c.h.b16 %v978
    %v3520 = vunpack.c.l.b16 %v979
    %v3521 = vunpack.c.h.b16 %v979
    %v3522 = vunpack.c.l.b16 %v980
    %v3523 = vunpack.c.h.b16 %v980
    %v3524 = vunpack.c.l.b16 %v981
    %v3525 = vunpack.c.h.b16 %v981
    %v3526 = vunpack.c.l.b16 %v982
    %v3527 = vunpack.c.h.b16 %v982
    %v3528 = vunpack.c.l.b16 %v983
    %v3529 = vunpack.c.h.b16 %v983
    %v3530 = vunpack.c.l.b16 %v984
    %v3531 = vunpack.c.h.b16 %v984
    %v3532 = vunpack.c.l.b16 %v985
    %v3533 = vunpack.c.h.b16 %v985
    %v3534 = vunpack.c.l.b16 %v986
    %v3535 = vunpack.c.h.b16 %v986
    %v3536 = vunpack.c.l.b16 %v987
    %v3537 = vunpack.c.h.b16 %v987
    %v3538 = vunpack.c.l.b16 %v988
    %v3539 = vunpack.c.h.b16 %v988
    %v3540 = vunpack.c.l.b16 %v989
    %v3541 = vunpack.c.h.b16 %v989
    %v3542 = vunpack.c.l.b16 %v990
    %v3543 = vunpack.c.h.b16 %v990
    %v3544 = vunpack.c.l.b16 %v991
    %v3545 = vunpack.c.h.b16 %v991
    %v3546 = vunpack.c.l.b16 %v992
    %v3547 = vunpack.c.h.b16 %v992
    %v3548 = vunpack.c.l.b16 %v993
    %v3549 = vunpack.c.h.b16 %v993
    %v3550 = vunpack.c.l.b16 %v994
    %v3551 = vunpack.c.h.b16 %v994
    %v3552 = vunpack.c.l.b16 %v995
    %v3553 = vunpack.c.h.b16 %v995
    %v3554 = vunpack.c.l.b16 %v996
    %v3555 = vunpack.c.h.b16 %v996
    %v3556 = vunpack.c.l.b16 %v997
    %v3557 = vunpack.c.h.b16 %v997
    %v3558 = vunpack.c.l.b16 %v998
    %v3559 = vunpack.c.h.b16 %v998
    %v3560 = vunpack.c.l.b16 %v999
    %v3561 = vunpack.c.h.b16 %v999
    %v3562 = vunpack.c.l.b16 %v1000
    %v3563 = vunpack.c.h.b16 %v1000
    %v3564 = vunpack.c.l.b16 %v1001
    %v3565 = vunpack.c.h.b16 %v1001
    %v3566 = vunpack.c.l.b16 %v1002
    %v3567 = vunpack.c.h.b16 %v1002
    %v3568 = vunpack.c.l.b16 %v1003
    %v3569 = vunpack.c.h.b16 %v1003
    %v3570 = vunpack.c.l.b16 %v1004
    %v3571 = vunpack.c.h.b16 %v1004
    %v3572 = vunpack.c.l.b16 %v1005
    %v3573 = vunpack.c.h.b16 %v1005
    %v3574 = vunpack.c.l.b16 %v1006
    %v3575 = vunpack.c.h.b16 %v1006
    %v3576 = vunpack.c.l.b16 %v1007
    %v3577 = vunpack.c.h.b16 %v1007
    %v3578 = vunpack.c.l.b16 %v1008
    %v3579 = vunpack.c.h.b16 %v1008
    %v3580 = vunpack.c.l.b16 %v1009
    %v3581 = vunpack.c.h.b16 %v1009
    %v3582 = vunpack.c.l.b16 %v1010
    %v3583 = vunpack.c.h.b16 %v1010
    %v3584 = vunpack.c.l.b16 %v1011
    %v3585 = vunpack.c.h.b16 %v1011
    %v3586 = vunpack.c.l.b16 %v1012
    %v3587 = vunpack.c.h.b16 %v1012
    %v3588 = vunpack.c.l.b16 %v1013
    %v3589 = vunpack.c.h.b16 %v1013
    %v3590 = vunpack.c.l.b16 %v1014
    %v3591 = vunpack.c.h.b16 %v1014
    %v3592 = vunpack.c.l.b16 %v1015
    %v3593 = vunpack.c.h.b16 %v1015
    %v3594 = vunpack.c.l.b16 %v1016
    %v3595 = vunpack.c.h.b16 %v1016
    %v3596 = vunpack.c.l.b16 %v1017
    %v3597 = vunpack.c.h.b16 %v1017
    %v3598 = vunpack.c.l.b16 %v1018
    %v3599 = vunpack.c.h.b16 %v1018
    %v3600 = vunpack.c.l.b16 %v1019
    %v3601 = vunpack.c.h.b16 %v1019
    %v3602 = vunpack.c.l.b16 %v1020
    %v3603 = vunpack.c.h.b16 %v1020
    %v3604 = vunpack.c.l.b16 %v1021
    %v3605 = vunpack.c.h.b16 %v1021
    %v3606 = vunpack.c.l.b16 %v1022
    %v3607 = vunpack.c.h.b16 %v1022
    %v3608 = vunpack.c.l.b16 %v1023
    %v3609 = vunpack.c.h.b16 %v1023
    %v3610 = vunpack.c.l.b16 %v1024
    %v3611 = vunpack.c.h.b16 %v1024
    %v3612 = vunpack.c.l.b16 %v1025
    %v3613 = vunpack.c.h.b16 %v1025
    %v3614 = vunpack.c.l.b16 %v1026
    %v3615 = vunpack.c.h.b16 %v1026
    %v3616 = vunpack.c.l.b16 %v1027
    %v3617 = vunpack.c.h.b16 %v1027
    %v3618 = vunpack.c.l.b16 %v1028
    %v3619 = vunpack.c.h.b16 %v1028
    %v3620 = vunpack.c.l.b16 %v1029
    %v3621 = vunpack.c.h.b16 %v1029
    %v3622 = vpack.c.b16 %v1900, %v1894
    %v3623 = vpack.c.b16 %v1901, %v1895
    %v3624 = vpack.c.b16 %v1902, %v1896
    %v3625 = vpack.c.b16 %v1903, %v1897
    %v3626 = vpack.c.b16 %v1904, %v1898
    %v3627 = vpack.c.b16 %v1905, %v1899
    %v3628 = vpack.c.b16 %v1912, %v1906
    %v3629 = vpack.c.b16 %v1913, %v1907
    %v3630 = vpack.c.b16 %v1914, %v1908
    %v3631 = vpack.c.b16 %v1915, %v1909
    %v3632 = vpack.c.b16 %v1916, %v1910
    %v3633 = vpack.c.b16 %v1917, %v1911
    %v3634 = vpack.c.b16 %v1924, %v1918
    %v3635 = vpack.c.b16 %v1925, %v1919
    %v3636 = vpack.c.b16 %v1926, %v1920
    %v3637 = vpack.c.b16 %v1927, %v1921
    %v3638 = vpack.c.b16 %v1928, %v1922
    %v3639 = vpack.c.b16 %v1929, %v1923
    %v3640 = vpack.c.b16 %v1936, %v1930
    %v3641 = vpack.c.b16 %v1937, %v1931
    %v3642 = vpack.c.b16 %v1938, %v1932
    %v3643 = vpack.c.b16 %v1939, %v1933
    %v3644 = vpack.c.b16 %v1940, %v1934
    %v3645 = vpack.c.b16 %v1941, %v1935
    %v3646 = vpack.c.b16 %v1948, %v1942
    %v3647 = vpack.c.b16 %v1949, %v1943
    %v3648 = vpack.c.b16 %v1950, %v1944
    %v3649 = vpack.c.b16 %v1951, %v1945
    %v3650 = vpack.c.b16 %v1952, %v1946
    %v3651 = vpack.c.b16 %v1953, %v1947
    %v3652 = vpack.c.b16 %v1960, %v1954
    %v3653 = vpack.c.b16 %v1961, %v1955
    %v3654 = vpack.c.b16 %v1962, %v1956
    %v3655 = vpack.c.b16 %v1963, %v1957
    %v3656 = vpack.c.b16 %v1964, %v1958
    %v3657 = vpack.c.b16 %v1965, %v1959
    %v3658 = vpack.c.b16 %v1972, %v1966
    %v3659 = vpack.c.b16 %v1973, %v1967
    %v3660 = vpack.c.b16 %v1974, %v1968
    %v3661 = vpack.c.b16 %v1975, %v1969
    %v3662 = vpack.c.b16 %v1976, %v1970
    %v3663 = vpack.c.b16 %v1977, %v1971
    %v3664 = vpack.c.b16 %v1984, %v1978
    %v3665 = vpack.c.b16 %v1985, %v1979
    %v3666 = vpack.c.b16 %v1986, %v1980
    %v3667 = vpack.c.b16 %v1987, %v1981
    %v3668 = vpack.c.b16 %v1988, %v1982
    %v3669 = vpack.c.b16 %v1989, %v1983
    %v3670 = vpack.c.b16 %v1996, %v1990
    %v3671 = vpack.c.b16 %v1997, %v1991
    %v3672 = vpack.c.b16 %v1998, %v1992
    %v3673 = vpack.c.b16 %v1999, %v1993
    %v3674 = vpack.c.b16 %v2000, %v1994
    %v3675 = vpack.c.b16 %v2001, %v1995
    %v3676 = vpack.c.b16 %v2008, %v2002
    %v3677 = vpack.c.b16 %v2009, %v2003
    %v3678 = vpack.c.b16 %v2010, %v2004
    %v3679 = vpack.c.b16 %v2011, %v2005
    %v3680 = vpack.c.b16 %v2012, %v2006
    %v3681 = vpack.c.b16 %v2013, %v2007
    %v3682 = vpack.c.b16 %v2020, %v2014
    %v3683 = vpack.c.b16 %v2021, %v2015
    %v3684 = vpack.c.b16 %v2022, %v2016
    %v3685 = vpack.c.b16 %v2023, %v2017
    %v3686 = vpack.c.b16 %v2024, %v2018
    %v3687 = vpack.c.b16 %v2025, %v2019
    %v3688 = vpack.c.b16 %v2032, %v2026
    %v3689 = vpack.c.b16 %v2033, %v2027
    %v3690 = vpack.c.b16 %v2034, %v2028
    %v3691 = vpack.c.b16 %v2035, %v2029
    %v3692 = vpack.c.b16 %v2036, %v2030
    %v3693 = vpack.c.b16 %v2037, %v2031
    %v3694 = vpack.c.b16 %v2044, %v2038
    %v3695 = vpack.c.b16 %v2045, %v2039
    %v3696 = vpack.c.b16 %v2046, %v2040
    %v3697 = vpack.c.b16 %v2047, %v2041
    %v3698 = vpack.c.b16 %v2048, %v2042
    %v3699 = vpack.c.b16 %v2049, %v2043
    %v3700 = vpack.c.b16 %v2056, %v2050
    %v3701 = vpack.c.b16 %v2057, %v2051
    %v3702 = vpack.c.b16 %v2058, %v2052
    %v3703 = vpack.c.b16 %v2059, %v2053
    %v3704 = vpack.c.b16 %v2060, %v2054
    %v3705 = vpack.c.b16 %v2061, %v2055
    %v3706 = vpack.c.b16 %v2068, %v2062
    %v3707 = vpack.c.b16 %v2069, %v2063
    %v3708 = vpack.c.b16 %v2070, %v2064
    %v3709 = vpack.c.b16 %v2071, %v2065
    %v3710 = vpack.c.b16 %v2072, %v2066
    %v3711 = vpack.c.b16 %v2073, %v2067
    %v3712 = vpack.c.b16 %v2080, %v2074
    %v3713 = vpack.c.b16 %v2081, %v2075
    %v3714 = vpack.c.b16 %v2082, %v2076
    %v3715 = vpack.c.b16 %v2083, %v2077
    %v3716 = vpack.c.b16 %v2084, %v2078
    %v3717 = vpack.c.b16 %v2085, %v2079
    %v3718 = vpack.c.b16 %v2092, %v2086
    %v3719 = vpack.c.b16 %v2093, %v2087
    %v3720 = vpack.c.b16 %v2094, %v2088
    %v3721 = vpack.c.b16 %v2095, %v2089
    %v3722 = vpack.c.b16 %v2096, %v2090
    %v3723 = vpack.c.b16 %v2097, %v2091
    %v3724 = vpack.c.b16 %v2104, %v2098
    %v3725 = vpack.c.b16 %v2105, %v2099
    %v3726 = vpack.c.b16 %v2106, %v2100
    %v3727 = vpack.c.b16 %v2107, %v2101
    %v3728 = vpack.c.b16 %v2108, %v2102
    %v3729 = vpack.c.b16 %v2109, %v2103
    %v3730 = vpack.c.b16 %v2116, %v2110
    %v3731 = vpack.c.b16 %v2117, %v2111
    %v3732 = vpack.c.b16 %v2118, %v2112
    %v3733 = vpack.c.b16 %v2119, %v2113
    %v3734 = vpack.c.b16 %v2120, %v2114
    %v3735 = vpack.c.b16 %v2121, %v2115
    %v3736 = vpack.c.b16 %v2128, %v2122
    %v3737 = vpack.c.b16 %v2129, %v2123
    %v3738 = vpack.c.b16 %v2130, %v2124
    %v3739 = vpack.c.b16 %v2131, %v2125
    %v3740 = vpack.c.b16 %v2132, %v2126
    %v3741 = vpack.c.b16 %v2133, %v2127
    %v3742 = vpack.c.b16 %v2140, %v2134
    %v3743 = vpack.c.b16 %v2141, %v2135
    %v3744 = vpack.c.b16 %v2142, %v2136
    %v3745 = vpack.c.b16 %v2143, %v2137
    %v3746 = vpack.c.b16 %v2144, %v2138
    %v3747 = vpack.c.b16 %v2145, %v2139
    %v3748 = vpack.c.b16 %v2152, %v2146
    %v3749 = vpack.c.b16 %v2153, %v2147
    %v3750 = vpack.c.b16 %v2154, %v2148
    %v3751 = vpack.c.b16 %v2155, %v2149
    %v3752 = vpack.c.b16 %v2156, %v2150
    %v3753 = vpack.c.b16 %v2157, %v2151
    %v3754 = vpack.c.b16 %v2164, %v2158
    %v3755 = vpack.c.b16 %v2165, %v2159
    %v3756 = vpack.c.b16 %v2166, %v2160
    %v3757 = vpack.c.b16 %v2167, %v2161
    %v3758 = vpack.c.b16 %v2168, %v2162
    %v3759 = vpack.c.b16 %v2169, %v2163
    %v3760 = vpack.c.b16 %v2176, %v2170
    %v3761 = vpack.c.b16 %v2177, %v2171
    %v3762 = vpack.c.b16 %v2178, %v2172
    %v3763 = vpack.c.b16 %v2179, %v2173
    %v3764 = vpack.c.b16 %v2180, %v2174
    %v3765 = vpack.c.b16 %v2181, %v2175
    %v3766 = vpack.c.b16 %v2188, %v2182
    %v3767 = vpack.c.b16 %v2189, %v2183
    %v3768 = vpack.c.b16 %v2190, %v2184
    %v3769 = vpack.c.b16 %v2191, %v2185
    %v3770 = vpack.c.b16 %v2192, %v2186
    %v3771 = vpack.c.b16 %v2193, %v2187
    %v3772 = vpack.c.b16 %v2200, %v2194
    %v3773 = vpack.c.b16 %v2201, %v2195
    %v3774 = vpack.c.b16 %v2202, %v2196
    %v3775 = vpack.c.b16 %v2203, %v2197
    %v3776 = vpack.c.b16 %v2204, %v2198
    %v3777 = vpack.c.b16 %v2205, %v2199
    %v3778 = vpack.c.b16 %v2212, %v2206
    %v3779 = vpack.c.b16 %v2213, %v2207
    %v3780 = vpack.c.b16 %v2214, %v2208
    %v3781 = vpack.c.b16 %v2215, %v2209
    %v3782 = vpack.c.b16 %v2216, %v2210
    %v3783 = vpack.c.b16 %v2217, %v2211
    %v3784 = vpack.c.b16 %v2224, %v2218
    %v3785 = vpack.c.b16 %v2225, %v2219
    %v3786 = vpack.c.b16 %v2226, %v2220
    %v3787 = vpack.c.b16 %v2227, %v2221
    %v3788 = vpack.c.b16 %v2228, %v2222
    %v3789 = vpack.c.b16 %v2229, %v2223
    %v3790 = vpack.c.b16 %v2236, %v2230
    %v3791 = vpack.c.b16 %v2237, %v2231
    %v3792 = vpack.c.b16 %v2238, %v2232
    %v3793 = vpack.c.b16 %v2239, %v2233
    %v3794 = vpack.c.b16 %v2240, %v2234
    %v3795 = vpack.c.b16 %v2241, %v2235
    %v3796 = vpack.c.b16 %v2248, %v2242
    %v3797 = vpack.c.b16 %v2249, %v2243
    %v3798 = vpack.c.b16 %v2250, %v2244
    %v3799 = vpack.c.b16 %v2251, %v2245
    %v3800 = vpack.c.b16 %v2252, %v2246
    %v3801 = vpack.c.b16 %v2253, %v2247
    %v3802 = vpack.c.b16 %v2260, %v2254
    %v3803 = vpack.c.b16 %v2261, %v2255
    %v3804 = vpack.c.b16 %v2262, %v2256
    %v3805 = vpack.c.b16 %v2263, %v2257
    %v3806 = vpack.c.b16 %v2264, %v2258
    %v3807 = vpack.c.b16 %v2265, %v2259
    %v3808 = vpack.c.b16 %v2272, %v2266
    %v3809 = vpack.c.b16 %v2273, %v2267
    %v3810 = vpack.c.b16 %v2274, %v2268
    %v3811 = vpack.c.b16 %v2275, %v2269
    %v3812 = vpack.c.b16 %v2276, %v2270
    %v3813 = vpack.c.b16 %v2277, %v2271
    %v3814 = vpack.c.b16 %v2284, %v2278
    %v3815 = vpack.c.b16 %v2285, %v2279
    %v3816 = vpack.c.b16 %v2286, %v2280
    %v3817 = vpack.c.b16 %v2287, %v2281
    %v3818 = vpack.c.b16 %v2288, %v2282
    %v3819 = vpack.c.b16 %v2289, %v2283
    %v3820 = vpack.c.b16 %v2296, %v2290
    %v3821 = vpack.c.b16 %v2297, %v2291
    %v3822 = vpack.c.b16 %v2298, %v2292
    %v3823 = vpack.c.b16 %v2299, %v2293
    %v3824 = vpack.c.b16 %v2300, %v2294
    %v3825 = vpack.c.b16 %v2301, %v2295
    %v3826 = vpack.c.b16 %v2308, %v2302
    %v3827 = vpack.c.b16 %v2309, %v2303
    %v3828 = vpack.c.b16 %v2310, %v2304
    %v3829 = vpack.c.b16 %v2311, %v2305
    %v3830 = vpack.c.b16 %v2312, %v2306
    %v3831 = vpack.c.b16 %v2313, %v2307
    %v3832 = vpack.c.b16 %v2320, %v2314
    %v3833 = vpack.c.b16 %v2321, %v2315
    %v3834 = vpack.c.b16 %v2322, %v2316
    %v3835 = vpack.c.b16 %v2323, %v2317
    %v3836 = vpack.c.b16 %v2324, %v2318
    %v3837 = vpack.c.b16 %v2325, %v2319
    %v3838 = vpack.c.b16 %v2332, %v2326
    %v3839 = vpack.c.b16 %v2333, %v2327
    %v3840 = vpack.c.b16 %v2334, %v2328
    %v3841 = vpack.c.b16 %v2335, %v2329
    %v3842 = vpack.c.b16 %v2336, %v2330
    %v3843 = vpack.c.b16 %v2337, %v2331
    %v3844 = vpack.c.b16 %v2344, %v2338
    %v3845 = vpack.c.b16 %v2345, %v2339
    %v3846 = vpack.c.b16 %v2346, %v2340
    %v3847 = vpack.c.b16 %v2347, %v2341
    %v3848 = vpack.c.b16 %v2348, %v2342
    %v3849 = vpack.c.b16 %v2349, %v2343
    %v3850 = vpack.c.b16 %v2356, %v2350
    %v3851 = vpack.c.b16 %v2357, %v2351
    %v3852 = vpack.c.b16 %v2358, %v2352
    %v3853 = vpack.c.b16 %v2359, %v2353
    %v3854 = vpack.c.b16 %v2360, %v2354
    %v3855 = vpack.c.b16 %v2361, %v2355
    %v3856 = vpack.c.b16 %v2368, %v2362
    %v3857 = vpack.c.b16 %v2369, %v2363
    %v3858 = vpack.c.b16 %v2370, %v2364
    %v3859 = vpack.c.b16 %v2371, %v2365
    %v3860 = vpack.c.b16 %v2372, %v2366
    %v3861 = vpack.c.b16 %v2373, %v2367
    %v3862 = vpack.c.b16 %v2380, %v2374
    %v3863 = vpack.c.b16 %v2381, %v2375
    %v3864 = vpack.c.b16 %v2382, %v2376
    %v3865 = vpack.c.b16 %v2383, %v2377
    %v3866 = vpack.c.b16 %v2384, %v2378
    %v3867 = vpack.c.b16 %v2385, %v2379
    %v3868 = vpack.c.b16 %v2392, %v2386
    %v3869 = vpack.c.b16 %v2393, %v2387
    %v3870 = vpack.c.b16 %v2394, %v2388
    %v3871 = vpack.c.b16 %v2395, %v2389
    %v3872 = vpack.c.b16 %v2396, %v2390
    %v3873 = vpack.c.b16 %v2397, %v2391
    %v3874 = vpack.c.b16 %v2404, %v2398
    %v3875 = vpack.c.b16 %v2405, %v2399
    %v3876 = vpack.c.b16 %v2406, %v2400
    %v3877 = vpack.c.b16 %v2407, %v2401
    %v3878 = vpack.c.b16 %v2408, %v2402
    %v3879 = vpack.c.b16 %v2409, %v2403
    %v3880 = vpack.c.b16 %v2416, %v2410
    %v3881 = vpack.c.b16 %v2417, %v2411
    %v3882 = vpack.c.b16 %v2418, %v2412
    %v3883 = vpack.c.b16 %v2419, %v2413
    %v3884 = vpack.c.b16 %v2420, %v2414
    %v3885 = vpack.c.b16 %v2421, %v2415
    %v3886 = vpack.c.b16 %v2428, %v2422
    %v3887 = vpack.c.b16 %v2429, %v2423
    %v3888 = vpack.c.b16 %v2430, %v2424
    %v3889 = vpack.c.b16 %v2431, %v2425
    %v3890 = vpack.c.b16 %v2432, %v2426
    %v3891 = vpack.c.b16 %v2433, %v2427
    %v3892 = vpack.c.b16 %v2440, %v2434
    %v3893 = vpack.c.b16 %v2441, %v2435
    %v3894 = vpack.c.b16 %v2442, %v2436
    %v3895 = vpack.c.b16 %v2443, %v2437
    %v3896 = vpack.c.b16 %v2444, %v2438
    %v3897 = vpack.c.b16 %v2445, %v2439
    %v3898 = vpack.c.b16 %v2452, %v2446
    %v3899 = vpack.c.b16 %v2453, %v2447
    %v3900 = vpack.c.b16 %v2454, %v2448
    %v3901 = vpack.c.b16 %v2455, %v2449
    %v3902 = vpack.c.b16 %v2456, %v2450
    %v3903 = vpack.c.b16 %v2457, %v2451
    %v3904 = vpack.c.b16 %v2464, %v2458
    %v3905 = vpack.c.b16 %v2465, %v2459
    %v3906 = vpack.c.b16 %v2466, %v2460
    %v3907 = vpack.c.b16 %v2467, %v2461
    %v3908 = vpack.c.b16 %v2468, %v2462
    %v3909 = vpack.c.b16 %v2469, %v2463
    %v3910 = vpack.c.b16 %v2476, %v2470
    %v3911 = vpack.c.b16 %v2477, %v2471
    %v3912 = vpack.c.b16 %v2478, %v2472
    %v3913 = vpack.c.b16 %v2479, %v2473
    %v3914 = vpack.c.b16 %v2480, %v2474
    %v3915 = vpack.c.b16 %v2481, %v2475
    %v3916 = vpack.c.b16 %v2488, %v2482
    %v3917 = vpack.c.b16 %v2489, %v2483
    %v3918 = vpack.c.b16 %v2490, %v2484
    %v3919 = vpack.c.b16 %v2491, %v2485
    %v3920 = vpack.c.b16 %v2492, %v2486
    %v3921 = vpack.c.b16 %v2493, %v2487
    %v3922 = vpack.c.b16 %v2500, %v2494
    %v3923 = vpack.c.b16 %v2501, %v2495
    %v3924 = vpack.c.b16 %v2502, %v2496
    %v3925 = vpack.c.b16 %v2503, %v2497
    %v3926 = vpack.c.b16 %v2504, %v2498
    %v3927 = vpack.c.b16 %v2505, %v2499
    %v3928 = vpack.c.b16 %v2512, %v2506
    %v3929 = vpack.c.b16 %v2513, %v2507
    %v3930 = vpack.c.b16 %v2514, %v2508
    %v3931 = vpack.c.b16 %v2515, %v2509
    %v3932 = vpack.c.b16 %v2516, %v2510
    %v3933 = vpack.c.b16 %v2517, %v2511
    %v3934 = vpack.c.b16 %v2524, %v2518
    %v3935 = vpack.c.b16 %v2525, %v2519
    %v3936 = vpack.c.b16 %v2526, %v2520
    %v3937 = vpack.c.b16 %v2527, %v2521
    %v3938 = vpack.c.b16 %v2528, %v2522
    %v3939 = vpack.c.b16 %v2529, %v2523
    %v3940 = vpack.c.b16 %v2536, %v2530
    %v3941 = vpack.c.b16 %v2537, %v2531
    %v3942 = vpack.c.b16 %v2538, %v2532
    %v3943 = vpack.c.b16 %v2539, %v2533
    %v3944 = vpack.c.b16 %v2540, %v2534
    %v3945 = vpack.c.b16 %v2541, %v2535
    %v3946 = vpack.c.b16 %v2548, %v2542
    %v3947 = vpack.c.b16 %v2549, %v2543
    %v3948 = vpack.c.b16 %v2550, %v2544
    %v3949 = vpack.c.b16 %v2551, %v2545
    %v3950 = vpack.c.b16 %v2552, %v2546
    %v3951 = vpack.c.b16 %v2553, %v2547
    %v3952 = vpack.c.b16 %v2560, %v2554
    %v3953 = vpack.c.b16 %v2561, %v2555
    %v3954 = vpack.c.b16 %v2562, %v2556
    %v3955 = vpack.c.b16 %v2563, %v2557
    %v3956 = vpack.c.b16 %v2564, %v2558
    %v3957 = vpack.c.b16 %v2565, %v2559
    %v3958 = vpack.c.b16 %v2572, %v2566
    %v3959 = vpack.c.b16 %v2573, %v2567
    %v3960 = vpack.c.b16 %v2574, %v2568
    %v3961 = vpack.c.b16 %v2575, %v2569
    %v3962 = vpack.c.b16 %v2576, %v2570
    %v3963 = vpack.c.b16 %v2577, %v2571
    %v3964 = vpack.c.b16 %v2584, %v2578
    %v3965 = vpack.c.b16 %v2585, %v2579
    %v3966 = vpack.c.b16 %v2586, %v2580
    %v3967 = vpack.c.b16 %v2587, %v2581
    %v3968 = vpack.c.b16 %v2588, %v2582
    %v3969 = vpack.c.b16 %v2589, %v2583
    %v3970 = vpack.c.b16 %v2596, %v2590
    %v3971 = vpack.c.b16 %v2597, %v2591
    %v3972 = vpack.c.b16 %v2598, %v2592
    %v3973 = vpack.c.b16 %v2599, %v2593
    %v3974 = vpack.c.b16 %v2600, %v2594
    %v3975 = vpack.c.b16 %v2601, %v2595
    %v3976 = vpack.c.b16 %v2608, %v2602
    %v3977 = vpack.c.b16 %v2609, %v2603
    %v3978 = vpack.c.b16 %v2610, %v2604
    %v3979 = vpack.c.b16 %v2611, %v2605
    %v3980 = vpack.c.b16 %v2612, %v2606
    %v3981 = vpack.c.b16 %v2613, %v2607
    %v3982 = vpack.c.b16 %v2620, %v2614
    %v3983 = vpack.c.b16 %v2621, %v2615
    %v3984 = vpack.c.b16 %v2622, %v2616
    %v3985 = vpack.c.b16 %v2623, %v2617
    %v3986 = vpack.c.b16 %v2624, %v2618
    %v3987 = vpack.c.b16 %v2625, %v2619
    %v3988 = vpack.c.b16 %v2632, %v2626
    %v3989 = vpack.c.b16 %v2633, %v2627
    %v3990 = vpack.c.b16 %v2634, %v2628
    %v3991 = vpack.c.b16 %v2635, %v2629
    %v3992 = vpack.c.b16 %v2636, %v2630
    %v3993 = vpack.c.b16 %v2637, %v2631
    %v3994 = vpack.c.b16 %v2644, %v2638
    %v3995 = vpack.c.b16 %v2645, %v2639
    %v3996 = vpack.c.b16 %v2646, %v2640
    %v3997 = vpack.c.b16 %v2647, %v2641
    %v3998 = vpack.c.b16 %v2648, %v2642
    %v3999 = vpack.c.b16 %v2649, %v2643
    %v4000 = vpack.c.b16 %v2656, %v2650
    %v4001 = vpack.c.b16 %v2657, %v2651
    %v4002 = vpack.c.b16 %v2658, %v2652
    %v4003 = vpack.c.b16 %v2659, %v2653
    %v4004 = vpack.c.b16 %v2660, %v2654
    %v4005 = vpack.c.b16 %v2661, %v2655
    %v4006 = vpack.c.b16 %v2668, %v2662
    %v4007 = vpack.c.b16 %v2669, %v2663
    %v4008 = vpack.c.b16 %v2670, %v2664
    %v4009 = vpack.c.b16 %v2671, %v2665
    %v4010 = vpack.c.b16 %v2672, %v2666
    %v4011 = vpack.c.b16 %v2673, %v2667
    %v4012 = vpack.c.b16 %v2680, %v2674
    %v4013 = vpack.c.b16 %v2681, %v2675
    %v4014 = vpack.c.b16 %v2682, %v2676
    %v4015 = vpack.c.b16 %v2683, %v2677
    %v4016 = vpack.c.b16 %v2684, %v2678
    %v4017 = vpack.c.b16 %v2685, %v2679
    %v4018 = vpack.c.b16 %v2692, %v2686
    %v4019 = vpack.c.b16 %v2693, %v2687
    %v4020 = vpack.c.b16 %v2694, %v2688
    %v4021 = vpack.c.b16 %v2695, %v2689
    %v4022 = vpack.c.b16 %v2696, %v2690
    %v4023 = vpack.c.b16 %v2697, %v2691
    %v4024 = vpack.c.b16 %v2704, %v2698
    %v4025 = vpack.c.b16 %v2705, %v2699
    %v4026 = vpack.c.b16 %v2706, %v2700
    %v4027 = vpack.c.b16 %v2707, %v2701
    %v4028 = vpack.c.b16 %v2708, %v2702
    %v4029 = vpack.c.b16 %v2709, %v2703
    %v4030 = vpack.c.b16 %v2716, %v2710
    %v4031 = vpack.c.b16 %v2717, %v2711
    %v4032 = vpack.c.b16 %v2718, %v2712
    %v4033 = vpack.c.b16 %v2719, %v2713
    %v4034 = vpack.c.b16 %v2720, %v2714
    %v4035 = vpack.c.b16 %v2721, %v2715
    %v4036 = vpack.c.b16 %v2728, %v2722
    %v4037 = vpack.c.b16 %v2729, %v2723
    %v4038 = vpack.c.b16 %v2730, %v2724
    %v4039 = vpack.c.b16 %v2731, %v2725
    %v4040 = vpack.c.b16 %v2732, %v2726
    %v4041 = vpack.c.b16 %v2733, %v2727
    %v4042 = vpack.c.b16 %v2740, %v2734
    %v4043 = vpack.c.b16 %v2741, %v2735
    %v4044 = vpack.c.b16 %v2742, %v2736
    %v4045 = vpack.c.b16 %v2743, %v2737
    %v4046 = vpack.c.b16 %v2744, %v2738
    %v4047 = vpack.c.b16 %v2745, %v2739
    %v4048 = vpack.c.b16 %v2752, %v2746
    %v4049 = vpack.c.b16 %v2753, %v2747
    %v4050 = vpack.c.b16 %v2754, %v2748
    %v4051 = vpack.c.b16 %v2755, %v2749
    %v4052 = vpack.c.b16 %v2756, %v2750
    %v4053 = vpack.c.b16 %v2757, %v2751
    %v4054 = vpack.c.b16 %v2764, %v2758
    %v4055 = vpack.c.b16 %v2765, %v2759
    %v4056 = vpack.c.b16 %v2766, %v2760
    %v4057 = vpack.c.b16 %v2767, %v2761
    %v4058 = vpack.c.b16 %v2768, %v2762
    %v4059 = vpack.c.b16 %v2769, %v2763
    %v4060 = vpack.c.b16 %v2776, %v2770
    %v4061 = vpack.c.b16 %v2777, %v2771
    %v4062 = vpack.c.b16 %v2778, %v2772
    %v4063 = vpack.c.b16 %v2779, %v2773
    %v4064 = vpack.c.b16 %v2780, %v2774
    %v4065 = vpack.c.b16 %v2781, %v2775
    %v4066 = vpack.c.b16 %v2788, %v2782
    %v4067 = vpack.c.b16 %v2789, %v2783
    %v4068 = vpack.c.b16 %v2790, %v2784
    %v4069 = vpack.c.b16 %v2791, %v2785
    %v4070 = vpack.c.b16 %v2792, %v2786
    %v4071 = vpack.c.b16 %v2793, %v2787
    %v4072 = vpack.c.b16 %v2800, %v2794
    %v4073 = vpack.c.b16 %v2801, %v2795
    %v4074 = vpack.c.b16 %v2802, %v2796
    %v4075 = vpack.c.b16 %v2803, %v2797
    %v4076 = vpack.c.b16 %v2804, %v2798
    %v4077 = vpack.c.b16 %v2805, %v2799
    %v4078 = vpack.c.b16 %v2812, %v2806
    %v4079 = vpack.c.b16 %v2813, %v2807
    %v4080 = vpack.c.b16 %v2814, %v2808
    %v4081 = vpack.c.b16 %v2815, %v2809
    %v4082 = vpack.c.b16 %v2816, %v2810
    %v4083 = vpack.c.b16 %v2817, %v2811
    %v4084 = vpack.c.b16 %v2824, %v2818
    %v4085 = vpack.c.b16 %v2825, %v2819
    %v4086 = vpack.c.b16 %v2826, %v2820
    %v4087 = vpack.c.b16 %v2827, %v2821
    %v4088 = vpack.c.b16 %v2828, %v2822
    %v4089 = vpack.c.b16 %v2829, %v2823
    %v4090 = vpack.c.b16 %v2836, %v2830
    %v4091 = vpack.c.b16 %v2837, %v2831
    %v4092 = vpack.c.b16 %v2838, %v2832
    %v4093 = vpack.c.b16 %v2839, %v2833
    %v4094 = vpack.c.b16 %v2840, %v2834
    %v4095 = vpack.c.b16 %v2841, %v2835
    %v4096 = vpack.c.b16 %v2848, %v2842
    %v4097 = vpack.c.b16 %v2849, %v2843
    %v4098 = vpack.c.b16 %v2850, %v2844
    %v4099 = vpack.c.b16 %v2851, %v2845
    %v4100 = vpack.c.b16 %v2852, %v2846
    %v4101 = vpack.c.b16 %v2853, %v2847
    %v4102 = vpack.c.b16 %v2860, %v2854
    %v4103 = vpack.c.b16 %v2861, %v2855
    %v4104 = vpack.c.b16 %v2862, %v2856
    %v4105 = vpack.c.b16 %v2863, %v2857
    %v4106 = vpack.c.b16 %v2864, %v2858
    %v4107 = vpack.c.b16 %v2865, %v2859
    %v4108 = vpack.c.b16 %v2872, %v2866
    %v4109 = vpack.c.b16 %v2873, %v2867
    %v4110 = vpack.c.b16 %v2874, %v2868
    %v4111 = vpack.c.b16 %v2875, %v2869
    %v4112 = vpack.c.b16 %v2876, %v2870
    %v4113 = vpack.c.b16 %v2877, %v2871
    %v4114 = vpack.c.b16 %v2884, %v2878
    %v4115 = vpack.c.b16 %v2885, %v2879
    %v4116 = vpack.c.b16 %v2886, %v2880
    %v4117 = vpack.c.b16 %v2887, %v2881
    %v4118 = vpack.c.b16 %v2888, %v2882
    %v4119 = vpack.c.b16 %v2889, %v2883
    %v4120 = vpack.c.b16 %v2896, %v2890
    %v4121 = vpack.c.b16 %v2897, %v2891
    %v4122 = vpack.c.b16 %v2898, %v2892
    %v4123 = vpack.c.b16 %v2899, %v2893
    %v4124 = vpack.c.b16 %v2900, %v2894
    %v4125 = vpack.c.b16 %v2901, %v2895
    %v4126 = vpack.c.b16 %v2908, %v2902
    %v4127 = vpack.c.b16 %v2909, %v2903
    %v4128 = vpack.c.b16 %v2910, %v2904
    %v4129 = vpack.c.b16 %v2911, %v2905
    %v4130 = vpack.c.b16 %v2912, %v2906
    %v4131 = vpack.c.b16 %v2913, %v2907
    %v4132 = vpack.c.b16 %v2920, %v2914
    %v4133 = vpack.c.b16 %v2921, %v2915
    %v4134 = vpack.c.b16 %v2922, %v2916
    %v4135 = vpack.c.b16 %v2923, %v2917
    %v4136 = vpack.c.b16 %v2924, %v2918
    %v4137 = vpack.c.b16 %v2925, %v2919
    %v4138 = vpack.c.b16 %v2932, %v2926
    %v4139 = vpack.c.b16 %v2933, %v2927
    %v4140 = vpack.c.b16 %v2934, %v2928
    %v4141 = vpack.c.b16 %v2935, %v2929
    %v4142 = vpack.c.b16 %v2936, %v2930
    %v4143 = vpack.c.b16 %v2937, %v2931
    %v4144 = vpack.c.b16 %v2944, %v2938
    %v4145 = vpack.c.b16 %v2945, %v2939
    %v4146 = vpack.c.b16 %v2946, %v2940
    %v4147 = vpack.c.b16 %v2947, %v2941
    %v4148 = vpack.c.b16 %v2948, %v2942
    %v4149 = vpack.c.b16 %v2949, %v2943
    %v4150 = vpack.c.b16 %v2956, %v2950
    %v4151 = vpack.c.b16 %v2957, %v2951
    %v4152 = vpack.c.b16 %v2958, %v2952
    %v4153 = vpack.c.b16 %v2959, %v2953
    %v4154 = vpack.c.b16 %v2960, %v2954
    %v4155 = vpack.c.b16 %v2961, %v2955
    %v4156 = vpack.c.b16 %v2968, %v2962
    %v4157 = vpack.c.b16 %v2969, %v2963
    %v4158 = vpack.c.b16 %v2970, %v2964
    %v4159 = vpack.c.b16 %v2971, %v2965
    %v4160 = vpack.c.b16 %v2972, %v2966
    %v4161 = vpack.c.b16 %v2973, %v2967
    %v4162 = vpack.c.b16 %v2980, %v2974
    %v4163 = vpack.c.b16 %v2981, %v2975
    %v4164 = vpack.c.b16 %v2982, %v2976
    %v4165 = vpack.c.b16 %v2983, %v2977
    %v4166 = vpack.c.b16 %v2984, %v2978
    %v4167 = vpack.c.b16 %v2985, %v2979
    %v4168 = vpack.c.b16 %v2992, %v2986
    %v4169 = vpack.c.b16 %v2993, %v2987
    %v4170 = vpack.c.b16 %v2994, %v2988
    %v4171 = vpack.c.b16 %v2995, %v2989
    %v4172 = vpack.c.b16 %v2996, %v2990
    %v4173 = vpack.c.b16 %v2997, %v2991
    %v4174 = vpack.c.b16 %v3004, %v2998
    %v4175 = vpack.c.b16 %v3005, %v2999
    %v4176 = vpack.c.b16 %v3006, %v3000
    %v4177 = vpack.c.b16 %v3007, %v3001
    %v4178 = vpack.c.b16 %v3008, %v3002
    %v4179 = vpack.c.b16 %v3009, %v3003
    %v4180 = vpack.c.b16 %v3016, %v3010
    %v4181 = vpack.c.b16 %v3017, %v3011
    %v4182 = vpack.c.b16 %v3018, %v3012
    %v4183 = vpack.c.b16 %v3019, %v3013
    %v4184 = vpack.c.b16 %v3020, %v3014
    %v4185 = vpack.c.b16 %v3021, %v3015
    %v4186 = vpack.c.b16 %v3028, %v3022
    %v4187 = vpack.c.b16 %v3029, %v3023
    %v4188 = vpack.c.b16 %v3030, %v3024
    %v4189 = vpack.c.b16 %v3031, %v3025
    %v4190 = vpack.c.b16 %v3032, %v3026
    %v4191 = vpack.c.b16 %v3033, %v3027
    %v4192 = vpack.c.b16 %v3040, %v3034
    %v4193 = vpack.c.b16 %v3041, %v3035
    %v4194 = vpack.c.b16 %v3042, %v3036
    %v4195 = vpack.c.b16 %v3043, %v3037
    %v4196 = vpack.c.b16 %v3044, %v3038
    %v4197 = vpack.c.b16 %v3045, %v3039
    %v4198 = vpack.c.b16 %v3052, %v3046
    %v4199 = vpack.c.b16 %v3053, %v3047
    %v4200 = vpack.c.b16 %v3054, %v3048
    %v4201 = vpack.c.b16 %v3055, %v3049
    %v4202 = vpack.c.b16 %v3056, %v3050
    %v4203 = vpack.c.b16 %v3057, %v3051
    %v4204 = vpack.c.b16 %v3064, %v3058
    %v4205 = vpack.c.b16 %v3065, %v3059
    %v4206 = vpack.c.b16 %v3066, %v3060
    %v4207 = vpack.c.b16 %v3067, %v3061
    %v4208 = vpack.c.b16 %v3068, %v3062
    %v4209 = vpack.c.b16 %v3069, %v3063
    %v4210 = vpack.c.b16 %v3076, %v3070
    %v4211 = vpack.c.b16 %v3077, %v3071
    %v4212 = vpack.c.b16 %v3078, %v3072
    %v4213 = vpack.c.b16 %v3079, %v3073
    %v4214 = vpack.c.b16 %v3080, %v3074
    %v4215 = vpack.c.b16 %v3081, %v3075
    %v4216 = vpack.c.b16 %v3088, %v3082
    %v4217 = vpack.c.b16 %v3089, %v3083
    %v4218 = vpack.c.b16 %v3090, %v3084
    %v4219 = vpack.c.b16 %v3091, %v3085
    %v4220 = vpack.c.b16 %v3092, %v3086
    %v4221 = vpack.c.b16 %v3093, %v3087
    %v4222 = vpack.c.b16 %v3100, %v3094
    %v4223 = vpack.c.b16 %v3101, %v3095
    %v4224 = vpack.c.b16 %v3102, %v3096
    %v4225 = vpack.c.b16 %v3103, %v3097
    %v4226 = vpack.c.b16 %v3104, %v3098
    %v4227 = vpack.c.b16 %v3105, %v3099
    %v4228 = vpack.c.b16 %v3112, %v3106
    %v4229 = vpack.c.b16 %v3113, %v3107
    %v4230 = vpack.c.b16 %v3114, %v3108
    %v4231 = vpack.c.b16 %v3115, %v3109
    %v4232 = vpack.c.b16 %v3116, %v3110
    %v4233 = vpack.c.b16 %v3117, %v3111
    %v4234 = vpack.c.b16 %v3124, %v3118
    %v4235 = vpack.c.b16 %v3125, %v3119
    %v4236 = vpack.c.b16 %v3126, %v3120
    %v4237 = vpack.c.b16 %v3127, %v3121
    %v4238 = vpack.c.b16 %v3128, %v3122
    %v4239 = vpack.c.b16 %v3129, %v3123
    %v4240 = vpack.c.b16 %v3136, %v3130
    %v4241 = vpack.c.b16 %v3137, %v3131
    %v4242 = vpack.c.b16 %v3138, %v3132
    %v4243 = vpack.c.b16 %v3139, %v3133
    %v4244 = vpack.c.b16 %v3140, %v3134
    %v4245 = vpack.c.b16 %v3141, %v3135
    %v4246 = vpack.c.b16 %v3148, %v3142
    %v4247 = vpack.c.b16 %v3149, %v3143
    %v4248 = vpack.c.b16 %v3150, %v3144
    %v4249 = vpack.c.b16 %v3151, %v3145
    %v4250 = vpack.c.b16 %v3152, %v3146
    %v4251 = vpack.c.b16 %v3153, %v3147
    %v4252 = vpack.c.b16 %v3160, %v3154
    %v4253 = vpack.c.b16 %v3161, %v3155
    %v4254 = vpack.c.b16 %v3162, %v3156
    %v4255 = vpack.c.b16 %v3163, %v3157
    %v4256 = vpack.c.b16 %v3164, %v3158
    %v4257 = vpack.c.b16 %v3165, %v3159
    %v4258 = vpack.c.b16 %v3172, %v3166
    %v4259 = vpack.c.b16 %v3173, %v3167
    %v4260 = vpack.c.b16 %v3174, %v3168
    %v4261 = vpack.c.b16 %v3175, %v3169
    %v4262 = vpack.c.b16 %v3176, %v3170
    %v4263 = vpack.c.b16 %v3177, %v3171
    %v4264 = vpack.c.b16 %v3184, %v3178
    %v4265 = vpack.c.b16 %v3185, %v3179
    %v4266 = vpack.c.b16 %v3186, %v3180
    %v4267 = vpack.c.b16 %v3187, %v3181
    %v4268 = vpack.c.b16 %v3188, %v3182
    %v4269 = vpack.c.b16 %v3189, %v3183
    %v4270 = vpack.c.b16 %v3196, %v3190
    %v4271 = vpack.c.b16 %v3197, %v3191
    %v4272 = vpack.c.b16 %v3198, %v3192
    %v4273 = vpack.c.b16 %v3199, %v3193
    %v4274 = vpack.c.b16 %v3200, %v3194
    %v4275 = vpack.c.b16 %v3201, %v3195
    %v4276 = vpack.c.b16 %v3208, %v3202
    %v4277 = vpack.c.b16 %v3209, %v3203
    %v4278 = vpack.c.b16 %v3210, %v3204
    %v4279 = vpack.c.b16 %v3211, %v3205
    %v4280 = vpack.c.b16 %v3212, %v3206
    %v4281 = vpack.c.b16 %v3213, %v3207
    %v4282 = vpack.c.b16 %v3220, %v3214
    %v4283 = vpack.c.b16 %v3221, %v3215
    %v4284 = vpack.c.b16 %v3222, %v3216
    %v4285 = vpack.c.b16 %v3223, %v3217
    %v4286 = vpack.c.b16 %v3224, %v3218
    %v4287 = vpack.c.b16 %v3225, %v3219
    %v4288 = vpack.c.b16 %v3232, %v3226
    %v4289 = vpack.c.b16 %v3233, %v3227
    %v4290 = vpack.c.b16 %v3234, %v3228
    %v4291 = vpack.c.b16 %v3235, %v3229
    %v4292 = vpack.c.b16 %v3236, %v3230
    %v4293 = vpack.c.b16 %v3237, %v3231
    %v4294 = vpack.c.b16 %v3244, %v3238
    %v4295 = vpack.c.b16 %v3245, %v3239
    %v4296 = vpack.c.b16 %v3246, %v3240
    %v4297 = vpack.c.b16 %v3247, %v3241
    %v4298 = vpack.c.b16 %v3248, %v3242
    %v4299 = vpack.c.b16 %v3249, %v3243
    %v4300 = vpack.c.b16 %v3256, %v3250
    %v4301 = vpack.c.b16 %v3257, %v3251
    %v4302 = vpack.c.b16 %v3258, %v3252
    %v4303 = vpack.c.b16 %v3259, %v3253
    %v4304 = vpack.c.b16 %v3260, %v3254
    %v4305 = vpack.c.b16 %v3261, %v3255
    %v4306 = vpack.c.b16 %v3268, %v3262
    %v4307 = vpack.c.b16 %v3269, %v3263
    %v4308 = vpack.c.b16 %v3270, %v3264
    %v4309 = vpack.c.b16 %v3271, %v3265
    %v4310 = vpack.c.b16 %v3272, %v3266
    %v4311 = vpack.c.b16 %v3273, %v3267
    %v4312 = vpack.c.b16 %v3280, %v3274
    %v4313 = vpack.c.b16 %v3281, %v3275
    %v4314 = vpack.c.b16 %v3282, %v3276
    %v4315 = vpack.c.b16 %v3283, %v3277
    %v4316 = vpack.c.b16 %v3284, %v3278
    %v4317 = vpack.c.b16 %v3285, %v3279
    %v4318 = vpack.c.b16 %v3292, %v3286
    %v4319 = vpack.c.b16 %v3293, %v3287
    %v4320 = vpack.c.b16 %v3294, %v3288
    %v4321 = vpack.c.b16 %v3295, %v3289
    %v4322 = vpack.c.b16 %v3296, %v3290
    %v4323 = vpack.c.b16 %v3297, %v3291
    %v4324 = vpack.c.b16 %v3304, %v3298
    %v4325 = vpack.c.b16 %v3305, %v3299
    %v4326 = vpack.c.b16 %v3306, %v3300
    %v4327 = vpack.c.b16 %v3307, %v3301
    %v4328 = vpack.c.b16 %v3308, %v3302
    %v4329 = vpack.c.b16 %v3309, %v3303
    %v4330 = vpack.c.b16 %v3316, %v3310
    %v4331 = vpack.c.b16 %v3317, %v3311
    %v4332 = vpack.c.b16 %v3318, %v3312
    %v4333 = vpack.c.b16 %v3319, %v3313
    %v4334 = vpack.c.b16 %v3320, %v3314
    %v4335 = vpack.c.b16 %v3321, %v3315
    %v4336 = vpack.c.b16 %v3328, %v3322
    %v4337 = vpack.c.b16 %v3329, %v3323
    %v4338 = vpack.c.b16 %v3330, %v3324
    %v4339 = vpack.c.b16 %v3331, %v3325
    %v4340 = vpack.c.b16 %v3332, %v3326
    %v4341 = vpack.c.b16 %v3333, %v3327
    %v4342 = vpack.c.b16 %v3340, %v3334
    %v4343 = vpack.c.b16 %v3341, %v3335
    %v4344 = vpack.c.b16 %v3342, %v3336
    %v4345 = vpack.c.b16 %v3343, %v3337
    %v4346 = vpack.c.b16 %v3344, %v3338
    %v4347 = vpack.c.b16 %v3345, %v3339
    %v4348 = vpack.c.b16 %v3352, %v3346
    %v4349 = vpack.c.b16 %v3353, %v3347
    %v4350 = vpack.c.b16 %v3354, %v3348
    %v4351 = vpack.c.b16 %v3355, %v3349
    %v4352 = vpack.c.b16 %v3356, %v3350
    %v4353 = vpack.c.b16 %v3357, %v3351
    %v4354 = vpack.c.b16 %v3364, %v3358
    %v4355 = vpack.c.b16 %v3365, %v3359
    %v4356 = vpack.c.b16 %v3366, %v3360
    %v4357 = vpack.c.b16 %v3367, %v3361
    %v4358 = vpack.c.b16 %v3368, %v3362
    %v4359 = vpack.c.b16 %v3369, %v3363
    %v4360 = vpack.c.b16 %v3376, %v3370
    %v4361 = vpack.c.b16 %v3377, %v3371
    %v4362 = vpack.c.b16 %v3378, %v3372
    %v4363 = vpack.c.b16 %v3379, %v3373
    %v4364 = vpack.c.b16 %v3380, %v3374
    %v4365 = vpack.c.b16 %v3381, %v3375
    %v4366 = vpack.c.b16 %v3388, %v3382
    %v4367 = vpack.c.b16 %v3389, %v3383
    %v4368 = vpack.c.b16 %v3390, %v3384
    %v4369 = vpack.c.b16 %v3391, %v3385
    %v4370 = vpack.c.b16 %v3392, %v3386
    %v4371 = vpack.c.b16 %v3393, %v3387
    %v4372 = vpack.c.b16 %v3400, %v3394
    %v4373 = vpack.c.b16 %v3401, %v3395
    %v4374 = vpack.c.b16 %v3402, %v3396
    %v4375 = vpack.c.b16 %v3403, %v3397
    %v4376 = vpack.c.b16 %v3404, %v3398
    %v4377 = vpack.c.b16 %v3405, %v3399
    %v4378 = vpack.c.b16 %v3412, %v3406
    %v4379 = vpack.c.b16 %v3413, %v3407
    %v4380 = vpack.c.b16 %v3414, %v3408
    %v4381 = vpack.c.b16 %v3415, %v3409
    %v4382 = vpack.c.b16 %v3416, %v3410
    %v4383 = vpack.c.b16 %v3417, %v3411
    %v4384 = vpack.c.b16 %v3424, %v3418
    %v4385 = vpack.c.b16 %v3425, %v3419
    %v4386 = vpack.c.b16 %v3426, %v3420
    %v4387 = vpack.c.b16 %v3427, %v3421
    %v4388 = vpack.c.b16 %v3428, %v3422
    %v4389 = vpack.c.b16 %v3429, %v3423
    %v4390 = vpack.c.b16 %v3436, %v3430
    %v4391 = vpack.c.b16 %v3437, %v3431
    %v4392 = vpack.c.b16 %v3438, %v3432
    %v4393 = vpack.c.b16 %v3439, %v3433
    %v4394 = vpack.c.b16 %v3440, %v3434
    %v4395 = vpack.c.b16 %v3441, %v3435
    %v4396 = vpack.c.b16 %v3448, %v3442
    %v4397 = vpack.c.b16 %v3449, %v3443
    %v4398 = vpack.c.b16 %v3450, %v3444
    %v4399 = vpack.c.b16 %v3451, %v3445
    %v4400 = vpack.c.b16 %v3452, %v3446
    %v4401 = vpack.c.b16 %v3453, %v3447
    %v4402 = vpack.c.b16 %v3460, %v3454
    %v4403 = vpack.c.b16 %v3461, %v3455
    %v4404 = vpack.c.b16 %v3462, %v3456
    %v4405 = vpack.c.b16 %v3463, %v3457
    %v4406 = vpack.c.b16 %v3464, %v3458
    %v4407 = vpack.c.b16 %v3465, %v3459
    %v4408 = vpack.c.b16 %v3472, %v3466
    %v4409 = vpack.c.b16 %v3473, %v3467
    %v4410 = vpack.c.b16 %v3474, %v3468
    %v4411 = vpack.c.b16 %v3475, %v3469
    %v4412 = vpack.c.b16 %v3476, %v3470
    %v4413 = vpack.c.b16 %v3477, %v3471
    %v4414 = vpack.c.b16 %v3484, %v3478
    %v4415 = vpack.c.b16 %v3485, %v3479
    %v4416 = vpack.c.b16 %v3486, %v3480
    %v4417 = vpack.c.b16 %v3487, %v3481
    %v4418 = vpack.c.b16 %v3488, %v3482
    %v4419 = vpack.c.b16 %v3489, %v3483
    %v4420 = vpack.c.b16 %v3496, %v3490
    %v4421 = vpack.c.b16 %v3497, %v3491
    %v4422 = vpack.c.b16 %v3498, %v3492
    %v4423 = vpack.c.b16 %v3499, %v3493
    %v4424 = vpack.c.b16 %v3500, %v3494
    %v4425 = vpack.c.b16 %v3501, %v3495
    %v4426 = vpack.c.b16 %v3508, %v3502
    %v4427 = vpack.c.b16 %v3509, %v3503
    %v4428 = vpack.c.b16 %v3510, %v3504
    %v4429 = vpack.c.b16 %v3511, %v3505
    %v4430 = vpack.c.b16 %v3512, %v3506
    %v4431 = vpack.c.b16 %v3513, %v3507
    %v4432 = vpack.c.b16 %v3520, %v3514
    %v4433 = vpack.c.b16 %v3521, %v3515
    %v4434 = vpack.c.b16 %v3522, %v3516
    %v4435 = vpack.c.b16 %v3523, %v3517
    %v4436 = vpack.c.b16 %v3524, %v3518
    %v4437 = vpack.c.b16 %v3525, %v3519
    %v4438 = vpack.c.b16 %v3532, %v3526
    %v4439 = vpack.c.b16 %v3533, %v3527
    %v4440 = vpack.c.b16 %v3534, %v3528
    %v4441 = vpack.c.b16 %v3535, %v3529
    %v4442 = vpack.c.b16 %v3536, %v3530
    %v4443 = vpack.c.b16 %v3537, %v3531
    %v4444 = vpack.c.b16 %v3544, %v3538
    %v4445 = vpack.c.b16 %v3545, %v3539
    %v4446 = vpack.c.b16 %v3546, %v3540
    %v4447 = vpack.c.b16 %v3547, %v3541
    %v4448 = vpack.c.b16 %v3548, %v3542
    %v4449 = vpack.c.b16 %v3549, %v3543
    %v4450 = vpack.c.b16 %v3556, %v3550
    %v4451 = vpack.c.b16 %v3557, %v3551
    %v4452 = vpack.c.b16 %v3558, %v3552
    %v4453 = vpack.c.b16 %v3559, %v3553
    %v4454 = vpack.c.b16 %v3560, %v3554
    %v4455 = vpack.c.b16 %v3561, %v3555
    %v4456 = vpack.c.b16 %v3568, %v3562
    %v4457 = vpack.c.b16 %v3569, %v3563
    %v4458 = vpack.c.b16 %v3570, %v3564
    %v4459 = vpack.c.b16 %v3571, %v3565
    %v4460 = vpack.c.b16 %v3572, %v3566
    %v4461 = vpack.c.b16 %v3573, %v3567
    %v4462 = vpack.c.b16 %v3580, %v3574
    %v4463 = vpack.c.b16 %v3581, %v3575
    %v4464 = vpack.c.b16 %v3582, %v3576
    %v4465 = vpack.c.b16 %v3583, %v3577
    %v4466 = vpack.c.b16 %v3584, %v3578
    %v4467 = vpack.c.b16 %v3585, %v3579
    %v4468 = vpack.c.b16 %v3592, %v3586
    %v4469 = vpack.c.b16 %v3593, %v3587
    %v4470 = vpack.c.b16 %v3594, %v3588
    %v4471 = vpack.c.b16 %v3595, %v3589
    %v4472 = vpack.c.b16 %v3596, %v3590
    %v4473 = vpack.c.b16 %v3597, %v3591
    %v4474 = vpack.c.b16 %v3604, %v3598
    %v4475 = vpack.c.b16 %v3605, %v3599
    %v4476 = vpack.c.b16 %v3606, %v3600
    %v4477 = vpack.c.b16 %v3607, %v3601
    %v4478 = vpack.c.b16 %v3608, %v3602
    %v4479 = vpack.c.b16 %v3609, %v3603
    %v4480 = vpack.c.b16 %v3616, %v3610
    %v4481 = vpack.c.b16 %v3617, %v3611
    %v4482 = vpack.c.b16 %v3618, %v3612
    %v4483 = vpack.c.b16 %v3619, %v3613
    %v4484 = vpack.c.b16 %v3620, %v3614
    %v4485 = vpack.c.b16 %v3621, %v3615
    %5350 = vmatpush.bf16.msra.mxu0 %v3664
    %5351 = vmatpush.bf16.msra.mxu0 %v3658
    %5352 = vmatpush.bf16.msra.mxu0 %v3652
    %5353 = vmatpush.bf16.msra.mxu0 %v3646
    %5354 = vmatpush.bf16.msra.mxu0 %v3640
    %5355 = vmatpush.bf16.msra.mxu0 %v3634
    %5356 = vmatpush.bf16.msra.mxu0 %v3628
    %5357 = vmatpush.bf16.msra.mxu0 %v3622
    %5358 = vmatmul.bf16.gmra.mxu0 %v148
    %v5359 = vpop.f32.mrf.mxu0
    %v5360 = vadd.f32 0.0, %v5359
    %v5361 = vpop.f32.mrf.mxu0
    %5362 = vdwg.mxu0
    %5363 = vmatpush.bf16.msra.mxu0 %v3712
    %5364 = vmatpush.bf16.msra.mxu0 %v3706
    %5365 = vmatpush.bf16.msra.mxu0 %v3700
    %5366 = vmatpush.bf16.msra.mxu0 %v3694
    %5367 = vmatpush.bf16.msra.mxu0 %v3688
    %5368 = vmatpush.bf16.msra.mxu0 %v3682
    %5369 = vmatpush.bf16.msra.mxu0 %v3676
    %5370 = vmatpush.bf16.msra.mxu0 %v3670
    %5371 = vmatmul.bf16.gmra.mxu0 %v149
    %v5372 = vpop.f32.mrf.mxu0
    %v5373 = vadd.f32 %v5360, %v5372
    %v5374 = vpop.f32.mrf.mxu0
    %5375 = vdwg.mxu0
    %5376 = vmatpush.bf16.msra.mxu0 %v3760
    %5377 = vmatpush.bf16.msra.mxu0 %v3754
    %5378 = vmatpush.bf16.msra.mxu0 %v3748
    %5379 = vmatpush.bf16.msra.mxu0 %v3742
    %5380 = vmatpush.bf16.msra.mxu0 %v3736
    %5381 = vmatpush.bf16.msra.mxu0 %v3730
    %5382 = vmatpush.bf16.msra.mxu0 %v3724
    %5383 = vmatpush.bf16.msra.mxu0 %v3718
    %5384 = vmatmul.bf16.gmra.mxu0 %v150
    %v5385 = vpop.f32.mrf.mxu0
    %v5386 = vadd.f32 %v5373, %v5385
    %v5387 = vpop.f32.mrf.mxu0
    %5388 = vdwg.mxu0
    %5389 = vmatpush.bf16.msra.mxu0 %v3808
    %5390 = vmatpush.bf16.msra.mxu0 %v3802
    %5391 = vmatpush.bf16.msra.mxu0 %v3796
    %5392 = vmatpush.bf16.msra.mxu0 %v3790
    %5393 = vmatpush.bf16.msra.mxu0 %v3784
    %5394 = vmatpush.bf16.msra.mxu0 %v3778
    %5395 = vmatpush.bf16.msra.mxu0 %v3772
    %5396 = vmatpush.bf16.msra.mxu0 %v3766
    %5397 = vmatmul.bf16.gmra.mxu0 %v151
    %v5398 = vpop.f32.mrf.mxu0
    %v5399 = vadd.f32 %v5386, %v5398
    %v5400 = vpop.f32.mrf.mxu0
    %5401 = vdwg.mxu0
    %5402 = vmatpush.bf16.msra.mxu0 %v3856
    %5403 = vmatpush.bf16.msra.mxu0 %v3850
    %5404 = vmatpush.bf16.msra.mxu0 %v3844
    %5405 = vmatpush.bf16.msra.mxu0 %v3838
    %5406 = vmatpush.bf16.msra.mxu0 %v3832
    %5407 = vmatpush.bf16.msra.mxu0 %v3826
    %5408 = vmatpush.bf16.msra.mxu0 %v3820
    %5409 = vmatpush.bf16.msra.mxu0 %v3814
    %5410 = vmatmul.bf16.gmra.mxu0 %v152
    %v5411 = vpop.f32.mrf.mxu0
    %v5412 = vadd.f32 %v5399, %v5411
    %v5413 = vpop.f32.mrf.mxu0
    %5414 = vdwg.mxu0
    %5415 = vmatpush.bf16.msra.mxu0 %v3904
    %5416 = vmatpush.bf16.msra.mxu0 %v3898
    %5417 = vmatpush.bf16.msra.mxu0 %v3892
    %5418 = vmatpush.bf16.msra.mxu0 %v3886
    %5419 = vmatpush.bf16.msra.mxu0 %v3880
    %5420 = vmatpush.bf16.msra.mxu0 %v3874
    %5421 = vmatpush.bf16.msra.mxu0 %v3868
    %5422 = vmatpush.bf16.msra.mxu0 %v3862
    %5423 = vmatmul.bf16.gmra.mxu0 %v153
    %v5424 = vpop.f32.mrf.mxu0
    %v5425 = vadd.f32 %v5412, %v5424
    %v5426 = vpop.f32.mrf.mxu0
    %5427 = vdwg.mxu0
    %5428 = vmatpush.bf16.msra.mxu0 %v3952
    %5429 = vmatpush.bf16.msra.mxu0 %v3946
    %5430 = vmatpush.bf16.msra.mxu0 %v3940
    %5431 = vmatpush.bf16.msra.mxu0 %v3934
    %5432 = vmatpush.bf16.msra.mxu0 %v3928
    %5433 = vmatpush.bf16.msra.mxu0 %v3922
    %5434 = vmatpush.bf16.msra.mxu0 %v3916
    %5435 = vmatpush.bf16.msra.mxu0 %v3910
    %5436 = vmatmul.bf16.gmra.mxu0 %v154
    %v5437 = vpop.f32.mrf.mxu0
    %v5438 = vadd.f32 %v5425, %v5437
    %v5439 = vpop.f32.mrf.mxu0
    %5440 = vdwg.mxu0
    %5441 = vmatpush.bf16.msra.mxu0 %v4000
    %5442 = vmatpush.bf16.msra.mxu0 %v3994
    %5443 = vmatpush.bf16.msra.mxu0 %v3988
    %5444 = vmatpush.bf16.msra.mxu0 %v3982
    %5445 = vmatpush.bf16.msra.mxu0 %v3976
    %5446 = vmatpush.bf16.msra.mxu0 %v3970
    %5447 = vmatpush.bf16.msra.mxu0 %v3964
    %5448 = vmatpush.bf16.msra.mxu0 %v3958
    %5449 = vmatmul.bf16.gmra.mxu0 %v155
    %v5450 = vpop.f32.mrf.mxu0
    %v5451 = vadd.f32 %v5438, %v5450
    %v5452 = vpop.f32.mrf.mxu0
    %5453 = vdwg.mxu0
    %5454 = vmatpush.bf16.msra.mxu0 %v4048
    %5455 = vmatpush.bf16.msra.mxu0 %v4042
    %5456 = vmatpush.bf16.msra.mxu0 %v4036
    %5457 = vmatpush.bf16.msra.mxu0 %v4030
    %5458 = vmatpush.bf16.msra.mxu0 %v4024
    %5459 = vmatpush.bf16.msra.mxu0 %v4018
    %5460 = vmatpush.bf16.msra.mxu0 %v4012
    %5461 = vmatpush.bf16.msra.mxu0 %v4006
    %5462 = vmatmul.bf16.gmra.mxu0 %v156
    %v5463 = vpop.f32.mrf.mxu0
    %v5464 = vadd.f32 %v5451, %v5463
    %v5465 = vpop.f32.mrf.mxu0
    %5466 = vdwg.mxu0
    %5467 = vmatpush.bf16.msra.mxu0 %v4096
    %5468 = vmatpush.bf16.msra.mxu0 %v4090
    %5469 = vmatpush.bf16.msra.mxu0 %v4084
    %5470 = vmatpush.bf16.msra.mxu0 %v4078
    %5471 = vmatpush.bf16.msra.mxu0 %v4072
    %5472 = vmatpush.bf16.msra.mxu0 %v4066
    %5473 = vmatpush.bf16.msra.mxu0 %v4060
    %5474 = vmatpush.bf16.msra.mxu0 %v4054
    %5475 = vmatmul.bf16.gmra.mxu0 %v157
    %v5476 = vpop.f32.mrf.mxu0
    %v5477 = vadd.f32 %v5464, %v5476
    %v5478 = vpop.f32.mrf.mxu0
    %5479 = vdwg.mxu0
    %5480 = vmatpush.bf16.msra.mxu0 %v4144
    %5481 = vmatpush.bf16.msra.mxu0 %v4138
    %5482 = vmatpush.bf16.msra.mxu0 %v4132
    %5483 = vmatpush.bf16.msra.mxu0 %v4126
    %5484 = vmatpush.bf16.msra.mxu0 %v4120
    %5485 = vmatpush.bf16.msra.mxu0 %v4114
    %5486 = vmatpush.bf16.msra.mxu0 %v4108
    %5487 = vmatpush.bf16.msra.mxu0 %v4102
    %5488 = vmatmul.bf16.gmra.mxu0 %v158
    %v5489 = vpop.f32.mrf.mxu0
    %v5490 = vadd.f32 %v5477, %v5489
    %v5491 = vpop.f32.mrf.mxu0
    %5492 = vdwg.mxu0
    %5493 = vmatpush.bf16.msra.mxu0 %v4192
    %5494 = vmatpush.bf16.msra.mxu0 %v4186
    %5495 = vmatpush.bf16.msra.mxu0 %v4180
    %5496 = vmatpush.bf16.msra.mxu0 %v4174
    %5497 = vmatpush.bf16.msra.mxu0 %v4168
    %5498 = vmatpush.bf16.msra.mxu0 %v4162
    %5499 = vmatpush.bf16.msra.mxu0 %v4156
    %5500 = vmatpush.bf16.msra.mxu0 %v4150
    %5501 = vmatmul.bf16.gmra.mxu0 %v159
    %v5502 = vpop.f32.mrf.mxu0
    %v5503 = vadd.f32 %v5490, %v5502
    %v5504 = vpop.f32.mrf.mxu0
    %5505 = vdwg.mxu0
    %5506 = vmatpush.bf16.msra.mxu0 %v4240
    %5507 = vmatpush.bf16.msra.mxu0 %v4234
    %5508 = vmatpush.bf16.msra.mxu0 %v4228
    %5509 = vmatpush.bf16.msra.mxu0 %v4222
    %5510 = vmatpush.bf16.msra.mxu0 %v4216
    %5511 = vmatpush.bf16.msra.mxu0 %v4210
    %5512 = vmatpush.bf16.msra.mxu0 %v4204
    %5513 = vmatpush.bf16.msra.mxu0 %v4198
    %5514 = vmatmul.bf16.gmra.mxu0 %v160
    %v5515 = vpop.f32.mrf.mxu0
    %v5516 = vadd.f32 %v5503, %v5515
    %v5517 = vpop.f32.mrf.mxu0
    %5518 = vdwg.mxu0
    %5519 = vmatpush.bf16.msra.mxu0 %v4288
    %5520 = vmatpush.bf16.msra.mxu0 %v4282
    %5521 = vmatpush.bf16.msra.mxu0 %v4276
    %5522 = vmatpush.bf16.msra.mxu0 %v4270
    %5523 = vmatpush.bf16.msra.mxu0 %v4264
    %5524 = vmatpush.bf16.msra.mxu0 %v4258
    %5525 = vmatpush.bf16.msra.mxu0 %v4252
    %5526 = vmatpush.bf16.msra.mxu0 %v4246
    %5527 = vmatmul.bf16.gmra.mxu0 %v161
    %v5528 = vpop.f32.mrf.mxu0
    %v5529 = vadd.f32 %v5516, %v5528
    %v5530 = vpop.f32.mrf.mxu0
    %5531 = vdwg.mxu0
    %5532 = vmatpush.bf16.msra.mxu0 %v4336
    %5533 = vmatpush.bf16.msra.mxu0 %v4330
    %5534 = vmatpush.bf16.msra.mxu0 %v4324
    %5535 = vmatpush.bf16.msra.mxu0 %v4318
    %5536 = vmatpush.bf16.msra.mxu0 %v4312
    %5537 = vmatpush.bf16.msra.mxu0 %v4306
    %5538 = vmatpush.bf16.msra.mxu0 %v4300
    %5539 = vmatpush.bf16.msra.mxu0 %v4294
    %5540 = vmatmul.bf16.gmra.mxu0 %v162
    %v5541 = vpop.f32.mrf.mxu0
    %v5542 = vadd.f32 %v5529, %v5541
    %v5543 = vpop.f32.mrf.mxu0
    %5544 = vdwg.mxu0
    %5545 = vmatpush.bf16.msra.mxu0 %v4384
    %5546 = vmatpush.bf16.msra.mxu0 %v4378
    %5547 = vmatpush.bf16.msra.mxu0 %v4372
    %5548 = vmatpush.bf16.msra.mxu0 %v4366
    %5549 = vmatpush.bf16.msra.mxu0 %v4360
    %5550 = vmatpush.bf16.msra.mxu0 %v4354
    %5551 = vmatpush.bf16.msra.mxu0 %v4348
    %5552 = vmatpush.bf16.msra.mxu0 %v4342
    %5553 = vmatmul.bf16.gmra.mxu0 %v163
    %v5554 = vpop.f32.mrf.mxu0
    %v5555 = vadd.f32 %v5542, %v5554
    %v5556 = vpop.f32.mrf.mxu0
    %5557 = vdwg.mxu0
    %5558 = vmatpush.bf16.msra.mxu0 %v4432
    %5559 = vmatpush.bf16.msra.mxu0 %v4426
    %5560 = vmatpush.bf16.msra.mxu0 %v4420
    %5561 = vmatpush.bf16.msra.mxu0 %v4414
    %5562 = vmatpush.bf16.msra.mxu0 %v4408
    %5563 = vmatpush.bf16.msra.mxu0 %v4402
    %5564 = vmatpush.bf16.msra.mxu0 %v4396
    %5565 = vmatpush.bf16.msra.mxu0 %v4390
    %5566 = vmatmul.bf16.gmra.mxu0 %v164
    %v5567 = vpop.f32.mrf.mxu0
    %v5568 = vadd.f32 %v5555, %v5567
    %v5569 = vpop.f32.mrf.mxu0
    %5570 = vdwg.mxu0
    %5571 = vmatpush.bf16.msra.mxu0 %v4480
    %5572 = vmatpush.bf16.msra.mxu0 %v4474
    %5573 = vmatpush.bf16.msra.mxu0 %v4468
    %5574 = vmatpush.bf16.msra.mxu0 %v4462
    %5575 = vmatpush.bf16.msra.mxu0 %v4456
    %5576 = vmatpush.bf16.msra.mxu0 %v4450
    %5577 = vmatpush.bf16.msra.mxu0 %v4444
    %5578 = vmatpush.bf16.msra.mxu0 %v4438
    %5579 = vmatmul.bf16.gmra.mxu0 %v165
    %v5580 = vpop.f32.mrf.mxu0
    %v5581 = vadd.f32 %v5568, %v5580
    %v5582 = vpop.f32.mrf.mxu0
    %5583 = vdwg.mxu0
    %5584 = vmatpush.bf16.msra.mxu0 %v3665
    %5585 = vmatpush.bf16.msra.mxu0 %v3659
    %5586 = vmatpush.bf16.msra.mxu0 %v3653
    %5587 = vmatpush.bf16.msra.mxu0 %v3647
    %5588 = vmatpush.bf16.msra.mxu0 %v3641
    %5589 = vmatpush.bf16.msra.mxu0 %v3635
    %5590 = vmatpush.bf16.msra.mxu0 %v3629
    %5591 = vmatpush.bf16.msra.mxu0 %v3623
    %5592 = vmatmul.bf16.gmra.mxu0 %v148
    %v5593 = vpop.f32.mrf.mxu0
    %v5594 = vadd.f32 0.0, %v5593
    %v5595 = vpop.f32.mrf.mxu0
    %5596 = vdwg.mxu0
    %5597 = vmatpush.bf16.msra.mxu0 %v3713
    %5598 = vmatpush.bf16.msra.mxu0 %v3707
    %5599 = vmatpush.bf16.msra.mxu0 %v3701
    %5600 = vmatpush.bf16.msra.mxu0 %v3695
    %5601 = vmatpush.bf16.msra.mxu0 %v3689
    %5602 = vmatpush.bf16.msra.mxu0 %v3683
    %5603 = vmatpush.bf16.msra.mxu0 %v3677
    %5604 = vmatpush.bf16.msra.mxu0 %v3671
    %5605 = vmatmul.bf16.gmra.mxu0 %v149
    %v5606 = vpop.f32.mrf.mxu0
    %v5607 = vadd.f32 %v5594, %v5606
    %v5608 = vpop.f32.mrf.mxu0
    %5609 = vdwg.mxu0
    %5610 = vmatpush.bf16.msra.mxu0 %v3761
    %5611 = vmatpush.bf16.msra.mxu0 %v3755
    %5612 = vmatpush.bf16.msra.mxu0 %v3749
    %5613 = vmatpush.bf16.msra.mxu0 %v3743
    %5614 = vmatpush.bf16.msra.mxu0 %v3737
    %5615 = vmatpush.bf16.msra.mxu0 %v3731
    %5616 = vmatpush.bf16.msra.mxu0 %v3725
    %5617 = vmatpush.bf16.msra.mxu0 %v3719
    %5618 = vmatmul.bf16.gmra.mxu0 %v150
    %v5619 = vpop.f32.mrf.mxu0
    %v5620 = vadd.f32 %v5607, %v5619
    %v5621 = vpop.f32.mrf.mxu0
    %5622 = vdwg.mxu0
    %5623 = vmatpush.bf16.msra.mxu0 %v3809
    %5624 = vmatpush.bf16.msra.mxu0 %v3803
    %5625 = vmatpush.bf16.msra.mxu0 %v3797
    %5626 = vmatpush.bf16.msra.mxu0 %v3791
    %5627 = vmatpush.bf16.msra.mxu0 %v3785
    %5628 = vmatpush.bf16.msra.mxu0 %v3779
    %5629 = vmatpush.bf16.msra.mxu0 %v3773
    %5630 = vmatpush.bf16.msra.mxu0 %v3767
    %5631 = vmatmul.bf16.gmra.mxu0 %v151
    %v5632 = vpop.f32.mrf.mxu0
    %v5633 = vadd.f32 %v5620, %v5632
    %v5634 = vpop.f32.mrf.mxu0
    %5635 = vdwg.mxu0
    %5636 = vmatpush.bf16.msra.mxu0 %v3857
    %5637 = vmatpush.bf16.msra.mxu0 %v3851
    %5638 = vmatpush.bf16.msra.mxu0 %v3845
    %5639 = vmatpush.bf16.msra.mxu0 %v3839
    %5640 = vmatpush.bf16.msra.mxu0 %v3833
    %5641 = vmatpush.bf16.msra.mxu0 %v3827
    %5642 = vmatpush.bf16.msra.mxu0 %v3821
    %5643 = vmatpush.bf16.msra.mxu0 %v3815
    %5644 = vmatmul.bf16.gmra.mxu0 %v152
    %v5645 = vpop.f32.mrf.mxu0
    %v5646 = vadd.f32 %v5633, %v5645
    %v5647 = vpop.f32.mrf.mxu0
    %5648 = vdwg.mxu0
    %5649 = vmatpush.bf16.msra.mxu0 %v3905
    %5650 = vmatpush.bf16.msra.mxu0 %v3899
    %5651 = vmatpush.bf16.msra.mxu0 %v3893
    %5652 = vmatpush.bf16.msra.mxu0 %v3887
    %5653 = vmatpush.bf16.msra.mxu0 %v3881
    %5654 = vmatpush.bf16.msra.mxu0 %v3875
    %5655 = vmatpush.bf16.msra.mxu0 %v3869
    %5656 = vmatpush.bf16.msra.mxu0 %v3863
    %5657 = vmatmul.bf16.gmra.mxu0 %v153
    %v5658 = vpop.f32.mrf.mxu0
    %v5659 = vadd.f32 %v5646, %v5658
    %v5660 = vpop.f32.mrf.mxu0
    %5661 = vdwg.mxu0
    %5662 = vmatpush.bf16.msra.mxu0 %v3953
    %5663 = vmatpush.bf16.msra.mxu0 %v3947
    %5664 = vmatpush.bf16.msra.mxu0 %v3941
    %5665 = vmatpush.bf16.msra.mxu0 %v3935
    %5666 = vmatpush.bf16.msra.mxu0 %v3929
    %5667 = vmatpush.bf16.msra.mxu0 %v3923
    %5668 = vmatpush.bf16.msra.mxu0 %v3917
    %5669 = vmatpush.bf16.msra.mxu0 %v3911
    %5670 = vmatmul.bf16.gmra.mxu0 %v154
    %v5671 = vpop.f32.mrf.mxu0
    %v5672 = vadd.f32 %v5659, %v5671
    %v5673 = vpop.f32.mrf.mxu0
    %5674 = vdwg.mxu0
    %5675 = vmatpush.bf16.msra.mxu0 %v4001
    %5676 = vmatpush.bf16.msra.mxu0 %v3995
    %5677 = vmatpush.bf16.msra.mxu0 %v3989
    %5678 = vmatpush.bf16.msra.mxu0 %v3983
    %5679 = vmatpush.bf16.msra.mxu0 %v3977
    %5680 = vmatpush.bf16.msra.mxu0 %v3971
    %5681 = vmatpush.bf16.msra.mxu0 %v3965
    %5682 = vmatpush.bf16.msra.mxu0 %v3959
    %5683 = vmatmul.bf16.gmra.mxu0 %v155
    %v5684 = vpop.f32.mrf.mxu0
    %v5685 = vadd.f32 %v5672, %v5684
    %v5686 = vpop.f32.mrf.mxu0
    %5687 = vdwg.mxu0
    %5688 = vmatpush.bf16.msra.mxu0 %v4049
    %5689 = vmatpush.bf16.msra.mxu0 %v4043
    %5690 = vmatpush.bf16.msra.mxu0 %v4037
    %5691 = vmatpush.bf16.msra.mxu0 %v4031
    %5692 = vmatpush.bf16.msra.mxu0 %v4025
    %5693 = vmatpush.bf16.msra.mxu0 %v4019
    %5694 = vmatpush.bf16.msra.mxu0 %v4013
    %5695 = vmatpush.bf16.msra.mxu0 %v4007
    %5696 = vmatmul.bf16.gmra.mxu0 %v156
    %v5697 = vpop.f32.mrf.mxu0
    %v5698 = vadd.f32 %v5685, %v5697
    %v5699 = vpop.f32.mrf.mxu0
    %5700 = vdwg.mxu0
    %5701 = vmatpush.bf16.msra.mxu0 %v4097
    %5702 = vmatpush.bf16.msra.mxu0 %v4091
    %5703 = vmatpush.bf16.msra.mxu0 %v4085
    %5704 = vmatpush.bf16.msra.mxu0 %v4079
    %5705 = vmatpush.bf16.msra.mxu0 %v4073
    %5706 = vmatpush.bf16.msra.mxu0 %v4067
    %5707 = vmatpush.bf16.msra.mxu0 %v4061
    %5708 = vmatpush.bf16.msra.mxu0 %v4055
    %5709 = vmatmul.bf16.gmra.mxu0 %v157
    %v5710 = vpop.f32.mrf.mxu0
    %v5711 = vadd.f32 %v5698, %v5710
    %v5712 = vpop.f32.mrf.mxu0
    %5713 = vdwg.mxu0
    %5714 = vmatpush.bf16.msra.mxu0 %v4145
    %5715 = vmatpush.bf16.msra.mxu0 %v4139
    %5716 = vmatpush.bf16.msra.mxu0 %v4133
    %5717 = vmatpush.bf16.msra.mxu0 %v4127
    %5718 = vmatpush.bf16.msra.mxu0 %v4121
    %5719 = vmatpush.bf16.msra.mxu0 %v4115
    %5720 = vmatpush.bf16.msra.mxu0 %v4109
    %5721 = vmatpush.bf16.msra.mxu0 %v4103
    %5722 = vmatmul.bf16.gmra.mxu0 %v158
    %v5723 = vpop.f32.mrf.mxu0
    %v5724 = vadd.f32 %v5711, %v5723
    %v5725 = vpop.f32.mrf.mxu0
    %5726 = vdwg.mxu0
    %5727 = vmatpush.bf16.msra.mxu0 %v4193
    %5728 = vmatpush.bf16.msra.mxu0 %v4187
    %5729 = vmatpush.bf16.msra.mxu0 %v4181
    %5730 = vmatpush.bf16.msra.mxu0 %v4175
    %5731 = vmatpush.bf16.msra.mxu0 %v4169
    %5732 = vmatpush.bf16.msra.mxu0 %v4163
    %5733 = vmatpush.bf16.msra.mxu0 %v4157
    %5734 = vmatpush.bf16.msra.mxu0 %v4151
    %5735 = vmatmul.bf16.gmra.mxu0 %v159
    %v5736 = vpop.f32.mrf.mxu0
    %v5737 = vadd.f32 %v5724, %v5736
    %v5738 = vpop.f32.mrf.mxu0
    %5739 = vdwg.mxu0
    %5740 = vmatpush.bf16.msra.mxu0 %v4241
    %5741 = vmatpush.bf16.msra.mxu0 %v4235
    %5742 = vmatpush.bf16.msra.mxu0 %v4229
    %5743 = vmatpush.bf16.msra.mxu0 %v4223
    %5744 = vmatpush.bf16.msra.mxu0 %v4217
    %5745 = vmatpush.bf16.msra.mxu0 %v4211
    %5746 = vmatpush.bf16.msra.mxu0 %v4205
    %5747 = vmatpush.bf16.msra.mxu0 %v4199
    %5748 = vmatmul.bf16.gmra.mxu0 %v160
    %v5749 = vpop.f32.mrf.mxu0
    %v5750 = vadd.f32 %v5737, %v5749
    %v5751 = vpop.f32.mrf.mxu0
    %5752 = vdwg.mxu0
    %5753 = vmatpush.bf16.msra.mxu0 %v4289
    %5754 = vmatpush.bf16.msra.mxu0 %v4283
    %5755 = vmatpush.bf16.msra.mxu0 %v4277
    %5756 = vmatpush.bf16.msra.mxu0 %v4271
    %5757 = vmatpush.bf16.msra.mxu0 %v4265
    %5758 = vmatpush.bf16.msra.mxu0 %v4259
    %5759 = vmatpush.bf16.msra.mxu0 %v4253
    %5760 = vmatpush.bf16.msra.mxu0 %v4247
    %5761 = vmatmul.bf16.gmra.mxu0 %v161
    %v5762 = vpop.f32.mrf.mxu0
    %v5763 = vadd.f32 %v5750, %v5762
    %v5764 = vpop.f32.mrf.mxu0
    %5765 = vdwg.mxu0
    %5766 = vmatpush.bf16.msra.mxu0 %v4337
    %5767 = vmatpush.bf16.msra.mxu0 %v4331
    %5768 = vmatpush.bf16.msra.mxu0 %v4325
    %5769 = vmatpush.bf16.msra.mxu0 %v4319
    %5770 = vmatpush.bf16.msra.mxu0 %v4313
    %5771 = vmatpush.bf16.msra.mxu0 %v4307
    %5772 = vmatpush.bf16.msra.mxu0 %v4301
    %5773 = vmatpush.bf16.msra.mxu0 %v4295
    %5774 = vmatmul.bf16.gmra.mxu0 %v162
    %v5775 = vpop.f32.mrf.mxu0
    %v5776 = vadd.f32 %v5763, %v5775
    %v5777 = vpop.f32.mrf.mxu0
    %5778 = vdwg.mxu0
    %5779 = vmatpush.bf16.msra.mxu0 %v4385
    %5780 = vmatpush.bf16.msra.mxu0 %v4379
    %5781 = vmatpush.bf16.msra.mxu0 %v4373
    %5782 = vmatpush.bf16.msra.mxu0 %v4367
    %5783 = vmatpush.bf16.msra.mxu0 %v4361
    %5784 = vmatpush.bf16.msra.mxu0 %v4355
    %5785 = vmatpush.bf16.msra.mxu0 %v4349
    %5786 = vmatpush.bf16.msra.mxu0 %v4343
    %5787 = vmatmul.bf16.gmra.mxu0 %v163
    %v5788 = vpop.f32.mrf.mxu0
    %v5789 = vadd.f32 %v5776, %v5788
    %v5790 = vpop.f32.mrf.mxu0
    %5791 = vdwg.mxu0
    %5792 = vmatpush.bf16.msra.mxu0 %v4433
    %5793 = vmatpush.bf16.msra.mxu0 %v4427
    %5794 = vmatpush.bf16.msra.mxu0 %v4421
    %5795 = vmatpush.bf16.msra.mxu0 %v4415
    %5796 = vmatpush.bf16.msra.mxu0 %v4409
    %5797 = vmatpush.bf16.msra.mxu0 %v4403
    %5798 = vmatpush.bf16.msra.mxu0 %v4397
    %5799 = vmatpush.bf16.msra.mxu0 %v4391
    %5800 = vmatmul.bf16.gmra.mxu0 %v164
    %v5801 = vpop.f32.mrf.mxu0
    %v5802 = vadd.f32 %v5789, %v5801
    %v5803 = vpop.f32.mrf.mxu0
    %5804 = vdwg.mxu0
    %5805 = vmatpush.bf16.msra.mxu0 %v4481
    %5806 = vmatpush.bf16.msra.mxu0 %v4475
    %5807 = vmatpush.bf16.msra.mxu0 %v4469
    %5808 = vmatpush.bf16.msra.mxu0 %v4463
    %5809 = vmatpush.bf16.msra.mxu0 %v4457
    %5810 = vmatpush.bf16.msra.mxu0 %v4451
    %5811 = vmatpush.bf16.msra.mxu0 %v4445
    %5812 = vmatpush.bf16.msra.mxu0 %v4439
    %5813 = vmatmul.bf16.gmra.mxu0 %v165
    %v5814 = vpop.f32.mrf.mxu0
    %v5815 = vadd.f32 %v5802, %v5814
    %v5816 = vpop.f32.mrf.mxu0
    %5817 = vdwg.mxu0
    %5818 = vmatpush.bf16.msra.mxu0 %v3666
    %5819 = vmatpush.bf16.msra.mxu0 %v3660
    %5820 = vmatpush.bf16.msra.mxu0 %v3654
    %5821 = vmatpush.bf16.msra.mxu0 %v3648
    %5822 = vmatpush.bf16.msra.mxu0 %v3642
    %5823 = vmatpush.bf16.msra.mxu0 %v3636
    %5824 = vmatpush.bf16.msra.mxu0 %v3630
    %5825 = vmatpush.bf16.msra.mxu0 %v3624
    %5826 = vmatmul.bf16.gmra.mxu0 %v148
    %v5827 = vpop.f32.mrf.mxu0
    %v5828 = vadd.f32 0.0, %v5827
    %v5829 = vpop.f32.mrf.mxu0
    %5830 = vdwg.mxu0
    %5831 = vmatpush.bf16.msra.mxu0 %v3714
    %5832 = vmatpush.bf16.msra.mxu0 %v3708
    %5833 = vmatpush.bf16.msra.mxu0 %v3702
    %5834 = vmatpush.bf16.msra.mxu0 %v3696
    %5835 = vmatpush.bf16.msra.mxu0 %v3690
    %5836 = vmatpush.bf16.msra.mxu0 %v3684
    %5837 = vmatpush.bf16.msra.mxu0 %v3678
    %5838 = vmatpush.bf16.msra.mxu0 %v3672
    %5839 = vmatmul.bf16.gmra.mxu0 %v149
    %v5840 = vpop.f32.mrf.mxu0
    %v5841 = vadd.f32 %v5828, %v5840
    %v5842 = vpop.f32.mrf.mxu0
    %5843 = vdwg.mxu0
    %5844 = vmatpush.bf16.msra.mxu0 %v3762
    %5845 = vmatpush.bf16.msra.mxu0 %v3756
    %5846 = vmatpush.bf16.msra.mxu0 %v3750
    %5847 = vmatpush.bf16.msra.mxu0 %v3744
    %5848 = vmatpush.bf16.msra.mxu0 %v3738
    %5849 = vmatpush.bf16.msra.mxu0 %v3732
    %5850 = vmatpush.bf16.msra.mxu0 %v3726
    %5851 = vmatpush.bf16.msra.mxu0 %v3720
    %5852 = vmatmul.bf16.gmra.mxu0 %v150
    %v5853 = vpop.f32.mrf.mxu0
    %v5854 = vadd.f32 %v5841, %v5853
    %v5855 = vpop.f32.mrf.mxu0
    %5856 = vdwg.mxu0
    %5857 = vmatpush.bf16.msra.mxu0 %v3810
    %5858 = vmatpush.bf16.msra.mxu0 %v3804
    %5859 = vmatpush.bf16.msra.mxu0 %v3798
    %5860 = vmatpush.bf16.msra.mxu0 %v3792
    %5861 = vmatpush.bf16.msra.mxu0 %v3786
    %5862 = vmatpush.bf16.msra.mxu0 %v3780
    %5863 = vmatpush.bf16.msra.mxu0 %v3774
    %5864 = vmatpush.bf16.msra.mxu0 %v3768
    %5865 = vmatmul.bf16.gmra.mxu0 %v151
    %v5866 = vpop.f32.mrf.mxu0
    %v5867 = vadd.f32 %v5854, %v5866
    %v5868 = vpop.f32.mrf.mxu0
    %5869 = vdwg.mxu0
    %5870 = vmatpush.bf16.msra.mxu0 %v3858
    %5871 = vmatpush.bf16.msra.mxu0 %v3852
    %5872 = vmatpush.bf16.msra.mxu0 %v3846
    %5873 = vmatpush.bf16.msra.mxu0 %v3840
    %5874 = vmatpush.bf16.msra.mxu0 %v3834
    %5875 = vmatpush.bf16.msra.mxu0 %v3828
    %5876 = vmatpush.bf16.msra.mxu0 %v3822
    %5877 = vmatpush.bf16.msra.mxu0 %v3816
    %5878 = vmatmul.bf16.gmra.mxu0 %v152
    %v5879 = vpop.f32.mrf.mxu0
    %v5880 = vadd.f32 %v5867, %v5879
    %v5881 = vpop.f32.mrf.mxu0
    %5882 = vdwg.mxu0
    %5883 = vmatpush.bf16.msra.mxu0 %v3906
    %5884 = vmatpush.bf16.msra.mxu0 %v3900
    %5885 = vmatpush.bf16.msra.mxu0 %v3894
    %5886 = vmatpush.bf16.msra.mxu0 %v3888
    %5887 = vmatpush.bf16.msra.mxu0 %v3882
    %5888 = vmatpush.bf16.msra.mxu0 %v3876
    %5889 = vmatpush.bf16.msra.mxu0 %v3870
    %5890 = vmatpush.bf16.msra.mxu0 %v3864
    %5891 = vmatmul.bf16.gmra.mxu0 %v153
    %v5892 = vpop.f32.mrf.mxu0
    %v5893 = vadd.f32 %v5880, %v5892
    %v5894 = vpop.f32.mrf.mxu0
    %5895 = vdwg.mxu0
    %5896 = vmatpush.bf16.msra.mxu0 %v3954
    %5897 = vmatpush.bf16.msra.mxu0 %v3948
    %5898 = vmatpush.bf16.msra.mxu0 %v3942
    %5899 = vmatpush.bf16.msra.mxu0 %v3936
    %5900 = vmatpush.bf16.msra.mxu0 %v3930
    %5901 = vmatpush.bf16.msra.mxu0 %v3924
    %5902 = vmatpush.bf16.msra.mxu0 %v3918
    %5903 = vmatpush.bf16.msra.mxu0 %v3912
    %5904 = vmatmul.bf16.gmra.mxu0 %v154
    %v5905 = vpop.f32.mrf.mxu0
    %v5906 = vadd.f32 %v5893, %v5905
    %v5907 = vpop.f32.mrf.mxu0
    %5908 = vdwg.mxu0
    %5909 = vmatpush.bf16.msra.mxu0 %v4002
    %5910 = vmatpush.bf16.msra.mxu0 %v3996
    %5911 = vmatpush.bf16.msra.mxu0 %v3990
    %5912 = vmatpush.bf16.msra.mxu0 %v3984
    %5913 = vmatpush.bf16.msra.mxu0 %v3978
    %5914 = vmatpush.bf16.msra.mxu0 %v3972
    %5915 = vmatpush.bf16.msra.mxu0 %v3966
    %5916 = vmatpush.bf16.msra.mxu0 %v3960
    %5917 = vmatmul.bf16.gmra.mxu0 %v155
    %v5918 = vpop.f32.mrf.mxu0
    %v5919 = vadd.f32 %v5906, %v5918
    %v5920 = vpop.f32.mrf.mxu0
    %5921 = vdwg.mxu0
    %5922 = vmatpush.bf16.msra.mxu0 %v4050
    %5923 = vmatpush.bf16.msra.mxu0 %v4044
    %5924 = vmatpush.bf16.msra.mxu0 %v4038
    %5925 = vmatpush.bf16.msra.mxu0 %v4032
    %5926 = vmatpush.bf16.msra.mxu0 %v4026
    %5927 = vmatpush.bf16.msra.mxu0 %v4020
    %5928 = vmatpush.bf16.msra.mxu0 %v4014
    %5929 = vmatpush.bf16.msra.mxu0 %v4008
    %5930 = vmatmul.bf16.gmra.mxu0 %v156
    %v5931 = vpop.f32.mrf.mxu0
    %v5932 = vadd.f32 %v5919, %v5931
    %v5933 = vpop.f32.mrf.mxu0
    %5934 = vdwg.mxu0
    %5935 = vmatpush.bf16.msra.mxu0 %v4098
    %5936 = vmatpush.bf16.msra.mxu0 %v4092
    %5937 = vmatpush.bf16.msra.mxu0 %v4086
    %5938 = vmatpush.bf16.msra.mxu0 %v4080
    %5939 = vmatpush.bf16.msra.mxu0 %v4074
    %5940 = vmatpush.bf16.msra.mxu0 %v4068
    %5941 = vmatpush.bf16.msra.mxu0 %v4062
    %5942 = vmatpush.bf16.msra.mxu0 %v4056
    %5943 = vmatmul.bf16.gmra.mxu0 %v157
    %v5944 = vpop.f32.mrf.mxu0
    %v5945 = vadd.f32 %v5932, %v5944
    %v5946 = vpop.f32.mrf.mxu0
    %5947 = vdwg.mxu0
    %5948 = vmatpush.bf16.msra.mxu0 %v4146
    %5949 = vmatpush.bf16.msra.mxu0 %v4140
    %5950 = vmatpush.bf16.msra.mxu0 %v4134
    %5951 = vmatpush.bf16.msra.mxu0 %v4128
    %5952 = vmatpush.bf16.msra.mxu0 %v4122
    %5953 = vmatpush.bf16.msra.mxu0 %v4116
    %5954 = vmatpush.bf16.msra.mxu0 %v4110
    %5955 = vmatpush.bf16.msra.mxu0 %v4104
    %5956 = vmatmul.bf16.gmra.mxu0 %v158
    %v5957 = vpop.f32.mrf.mxu0
    %v5958 = vadd.f32 %v5945, %v5957
    %v5959 = vpop.f32.mrf.mxu0
    %5960 = vdwg.mxu0
    %5961 = vmatpush.bf16.msra.mxu0 %v4194
    %5962 = vmatpush.bf16.msra.mxu0 %v4188
    %5963 = vmatpush.bf16.msra.mxu0 %v4182
    %5964 = vmatpush.bf16.msra.mxu0 %v4176
    %5965 = vmatpush.bf16.msra.mxu0 %v4170
    %5966 = vmatpush.bf16.msra.mxu0 %v4164
    %5967 = vmatpush.bf16.msra.mxu0 %v4158
    %5968 = vmatpush.bf16.msra.mxu0 %v4152
    %5969 = vmatmul.bf16.gmra.mxu0 %v159
    %v5970 = vpop.f32.mrf.mxu0
    %v5971 = vadd.f32 %v5958, %v5970
    %v5972 = vpop.f32.mrf.mxu0
    %5973 = vdwg.mxu0
    %5974 = vmatpush.bf16.msra.mxu0 %v4242
    %5975 = vmatpush.bf16.msra.mxu0 %v4236
    %5976 = vmatpush.bf16.msra.mxu0 %v4230
    %5977 = vmatpush.bf16.msra.mxu0 %v4224
    %5978 = vmatpush.bf16.msra.mxu0 %v4218
    %5979 = vmatpush.bf16.msra.mxu0 %v4212
    %5980 = vmatpush.bf16.msra.mxu0 %v4206
    %5981 = vmatpush.bf16.msra.mxu0 %v4200
    %5982 = vmatmul.bf16.gmra.mxu0 %v160
    %v5983 = vpop.f32.mrf.mxu0
    %v5984 = vadd.f32 %v5971, %v5983
    %v5985 = vpop.f32.mrf.mxu0
    %5986 = vdwg.mxu0
    %5987 = vmatpush.bf16.msra.mxu0 %v4290
    %5988 = vmatpush.bf16.msra.mxu0 %v4284
    %5989 = vmatpush.bf16.msra.mxu0 %v4278
    %5990 = vmatpush.bf16.msra.mxu0 %v4272
    %5991 = vmatpush.bf16.msra.mxu0 %v4266
    %5992 = vmatpush.bf16.msra.mxu0 %v4260
    %5993 = vmatpush.bf16.msra.mxu0 %v4254
    %5994 = vmatpush.bf16.msra.mxu0 %v4248
    %5995 = vmatmul.bf16.gmra.mxu0 %v161
    %v5996 = vpop.f32.mrf.mxu0
    %v5997 = vadd.f32 %v5984, %v5996
    %v5998 = vpop.f32.mrf.mxu0
    %5999 = vdwg.mxu0
    %6000 = vmatpush.bf16.msra.mxu0 %v4338
    %6001 = vmatpush.bf16.msra.mxu0 %v4332
    %6002 = vmatpush.bf16.msra.mxu0 %v4326
    %6003 = vmatpush.bf16.msra.mxu0 %v4320
    %6004 = vmatpush.bf16.msra.mxu0 %v4314
    %6005 = vmatpush.bf16.msra.mxu0 %v4308
    %6006 = vmatpush.bf16.msra.mxu0 %v4302
    %6007 = vmatpush.bf16.msra.mxu0 %v4296
    %6008 = vmatmul.bf16.gmra.mxu0 %v162
    %v6009 = vpop.f32.mrf.mxu0
    %v6010 = vadd.f32 %v5997, %v6009
    %v6011 = vpop.f32.mrf.mxu0
    %6012 = vdwg.mxu0
    %6013 = vmatpush.bf16.msra.mxu0 %v4386
    %6014 = vmatpush.bf16.msra.mxu0 %v4380
    %6015 = vmatpush.bf16.msra.mxu0 %v4374
    %6016 = vmatpush.bf16.msra.mxu0 %v4368
    %6017 = vmatpush.bf16.msra.mxu0 %v4362
    %6018 = vmatpush.bf16.msra.mxu0 %v4356
    %6019 = vmatpush.bf16.msra.mxu0 %v4350
    %6020 = vmatpush.bf16.msra.mxu0 %v4344
    %6021 = vmatmul.bf16.gmra.mxu0 %v163
    %v6022 = vpop.f32.mrf.mxu0
    %v6023 = vadd.f32 %v6010, %v6022
    %v6024 = vpop.f32.mrf.mxu0
    %6025 = vdwg.mxu0
    %6026 = vmatpush.bf16.msra.mxu0 %v4434
    %6027 = vmatpush.bf16.msra.mxu0 %v4428
    %6028 = vmatpush.bf16.msra.mxu0 %v4422
    %6029 = vmatpush.bf16.msra.mxu0 %v4416
    %6030 = vmatpush.bf16.msra.mxu0 %v4410
    %6031 = vmatpush.bf16.msra.mxu0 %v4404
    %6032 = vmatpush.bf16.msra.mxu0 %v4398
    %6033 = vmatpush.bf16.msra.mxu0 %v4392
    %6034 = vmatmul.bf16.gmra.mxu0 %v164
    %v6035 = vpop.f32.mrf.mxu0
    %v6036 = vadd.f32 %v6023, %v6035
    %v6037 = vpop.f32.mrf.mxu0
    %6038 = vdwg.mxu0
    %6039 = vmatpush.bf16.msra.mxu0 %v4482
    %6040 = vmatpush.bf16.msra.mxu0 %v4476
    %6041 = vmatpush.bf16.msra.mxu0 %v4470
    %6042 = vmatpush.bf16.msra.mxu0 %v4464
    %6043 = vmatpush.bf16.msra.mxu0 %v4458
    %6044 = vmatpush.bf16.msra.mxu0 %v4452
    %6045 = vmatpush.bf16.msra.mxu0 %v4446
    %6046 = vmatpush.bf16.msra.mxu0 %v4440
    %6047 = vmatmul.bf16.gmra.mxu0 %v165
    %v6048 = vpop.f32.mrf.mxu0
    %v6049 = vadd.f32 %v6036, %v6048
    %v6050 = vpop.f32.mrf.mxu0
    %6051 = vdwg.mxu0
    %6052 = vmatpush.bf16.msra.mxu0 %v3667
    %6053 = vmatpush.bf16.msra.mxu0 %v3661
    %6054 = vmatpush.bf16.msra.mxu0 %v3655
    %6055 = vmatpush.bf16.msra.mxu0 %v3649
    %6056 = vmatpush.bf16.msra.mxu0 %v3643
    %6057 = vmatpush.bf16.msra.mxu0 %v3637
    %6058 = vmatpush.bf16.msra.mxu0 %v3631
    %6059 = vmatpush.bf16.msra.mxu0 %v3625
    %6060 = vmatmul.bf16.gmra.mxu0 %v148
    %v6061 = vpop.f32.mrf.mxu0
    %v6062 = vadd.f32 0.0, %v6061
    %v6063 = vpop.f32.mrf.mxu0
    %6064 = vdwg.mxu0
    %6065 = vmatpush.bf16.msra.mxu0 %v3715
    %6066 = vmatpush.bf16.msra.mxu0 %v3709
    %6067 = vmatpush.bf16.msra.mxu0 %v3703
    %6068 = vmatpush.bf16.msra.mxu0 %v3697
    %6069 = vmatpush.bf16.msra.mxu0 %v3691
    %6070 = vmatpush.bf16.msra.mxu0 %v3685
    %6071 = vmatpush.bf16.msra.mxu0 %v3679
    %6072 = vmatpush.bf16.msra.mxu0 %v3673
    %6073 = vmatmul.bf16.gmra.mxu0 %v149
    %v6074 = vpop.f32.mrf.mxu0
    %v6075 = vadd.f32 %v6062, %v6074
    %v6076 = vpop.f32.mrf.mxu0
    %6077 = vdwg.mxu0
    %6078 = vmatpush.bf16.msra.mxu0 %v3763
    %6079 = vmatpush.bf16.msra.mxu0 %v3757
    %6080 = vmatpush.bf16.msra.mxu0 %v3751
    %6081 = vmatpush.bf16.msra.mxu0 %v3745
    %6082 = vmatpush.bf16.msra.mxu0 %v3739
    %6083 = vmatpush.bf16.msra.mxu0 %v3733
    %6084 = vmatpush.bf16.msra.mxu0 %v3727
    %6085 = vmatpush.bf16.msra.mxu0 %v3721
    %6086 = vmatmul.bf16.gmra.mxu0 %v150
    %v6087 = vpop.f32.mrf.mxu0
    %v6088 = vadd.f32 %v6075, %v6087
    %v6089 = vpop.f32.mrf.mxu0
    %6090 = vdwg.mxu0
    %6091 = vmatpush.bf16.msra.mxu0 %v3811
    %6092 = vmatpush.bf16.msra.mxu0 %v3805
    %6093 = vmatpush.bf16.msra.mxu0 %v3799
    %6094 = vmatpush.bf16.msra.mxu0 %v3793
    %6095 = vmatpush.bf16.msra.mxu0 %v3787
    %6096 = vmatpush.bf16.msra.mxu0 %v3781
    %6097 = vmatpush.bf16.msra.mxu0 %v3775
    %6098 = vmatpush.bf16.msra.mxu0 %v3769
    %6099 = vmatmul.bf16.gmra.mxu0 %v151
    %v6100 = vpop.f32.mrf.mxu0
    %v6101 = vadd.f32 %v6088, %v6100
    %v6102 = vpop.f32.mrf.mxu0
    %6103 = vdwg.mxu0
    %6104 = vmatpush.bf16.msra.mxu0 %v3859
    %6105 = vmatpush.bf16.msra.mxu0 %v3853
    %6106 = vmatpush.bf16.msra.mxu0 %v3847
    %6107 = vmatpush.bf16.msra.mxu0 %v3841
    %6108 = vmatpush.bf16.msra.mxu0 %v3835
    %6109 = vmatpush.bf16.msra.mxu0 %v3829
    %6110 = vmatpush.bf16.msra.mxu0 %v3823
    %6111 = vmatpush.bf16.msra.mxu0 %v3817
    %6112 = vmatmul.bf16.gmra.mxu0 %v152
    %v6113 = vpop.f32.mrf.mxu0
    %v6114 = vadd.f32 %v6101, %v6113
    %v6115 = vpop.f32.mrf.mxu0
    %6116 = vdwg.mxu0
    %6117 = vmatpush.bf16.msra.mxu0 %v3907
    %6118 = vmatpush.bf16.msra.mxu0 %v3901
    %6119 = vmatpush.bf16.msra.mxu0 %v3895
    %6120 = vmatpush.bf16.msra.mxu0 %v3889
    %6121 = vmatpush.bf16.msra.mxu0 %v3883
    %6122 = vmatpush.bf16.msra.mxu0 %v3877
    %6123 = vmatpush.bf16.msra.mxu0 %v3871
    %6124 = vmatpush.bf16.msra.mxu0 %v3865
    %6125 = vmatmul.bf16.gmra.mxu0 %v153
    %v6126 = vpop.f32.mrf.mxu0
    %v6127 = vadd.f32 %v6114, %v6126
    %v6128 = vpop.f32.mrf.mxu0
    %6129 = vdwg.mxu0
    %6130 = vmatpush.bf16.msra.mxu0 %v3955
    %6131 = vmatpush.bf16.msra.mxu0 %v3949
    %6132 = vmatpush.bf16.msra.mxu0 %v3943
    %6133 = vmatpush.bf16.msra.mxu0 %v3937
    %6134 = vmatpush.bf16.msra.mxu0 %v3931
    %6135 = vmatpush.bf16.msra.mxu0 %v3925
    %6136 = vmatpush.bf16.msra.mxu0 %v3919
    %6137 = vmatpush.bf16.msra.mxu0 %v3913
    %6138 = vmatmul.bf16.gmra.mxu0 %v154
    %v6139 = vpop.f32.mrf.mxu0
    %v6140 = vadd.f32 %v6127, %v6139
    %v6141 = vpop.f32.mrf.mxu0
    %6142 = vdwg.mxu0
    %6143 = vmatpush.bf16.msra.mxu0 %v4003
    %6144 = vmatpush.bf16.msra.mxu0 %v3997
    %6145 = vmatpush.bf16.msra.mxu0 %v3991
    %6146 = vmatpush.bf16.msra.mxu0 %v3985
    %6147 = vmatpush.bf16.msra.mxu0 %v3979
    %6148 = vmatpush.bf16.msra.mxu0 %v3973
    %6149 = vmatpush.bf16.msra.mxu0 %v3967
    %6150 = vmatpush.bf16.msra.mxu0 %v3961
    %6151 = vmatmul.bf16.gmra.mxu0 %v155
    %v6152 = vpop.f32.mrf.mxu0
    %v6153 = vadd.f32 %v6140, %v6152
    %v6154 = vpop.f32.mrf.mxu0
    %6155 = vdwg.mxu0
    %6156 = vmatpush.bf16.msra.mxu0 %v4051
    %6157 = vmatpush.bf16.msra.mxu0 %v4045
    %6158 = vmatpush.bf16.msra.mxu0 %v4039
    %6159 = vmatpush.bf16.msra.mxu0 %v4033
    %6160 = vmatpush.bf16.msra.mxu0 %v4027
    %6161 = vmatpush.bf16.msra.mxu0 %v4021
    %6162 = vmatpush.bf16.msra.mxu0 %v4015
    %6163 = vmatpush.bf16.msra.mxu0 %v4009
    %6164 = vmatmul.bf16.gmra.mxu0 %v156
    %v6165 = vpop.f32.mrf.mxu0
    %v6166 = vadd.f32 %v6153, %v6165
    %v6167 = vpop.f32.mrf.mxu0
    %6168 = vdwg.mxu0
    %6169 = vmatpush.bf16.msra.mxu0 %v4099
    %6170 = vmatpush.bf16.msra.mxu0 %v4093
    %6171 = vmatpush.bf16.msra.mxu0 %v4087
    %6172 = vmatpush.bf16.msra.mxu0 %v4081
    %6173 = vmatpush.bf16.msra.mxu0 %v4075
    %6174 = vmatpush.bf16.msra.mxu0 %v4069
    %6175 = vmatpush.bf16.msra.mxu0 %v4063
    %6176 = vmatpush.bf16.msra.mxu0 %v4057
    %6177 = vmatmul.bf16.gmra.mxu0 %v157
    %v6178 = vpop.f32.mrf.mxu0
    %v6179 = vadd.f32 %v6166, %v6178
    %v6180 = vpop.f32.mrf.mxu0
    %6181 = vdwg.mxu0
    %6182 = vmatpush.bf16.msra.mxu0 %v4147
    %6183 = vmatpush.bf16.msra.mxu0 %v4141
    %6184 = vmatpush.bf16.msra.mxu0 %v4135
    %6185 = vmatpush.bf16.msra.mxu0 %v4129
    %6186 = vmatpush.bf16.msra.mxu0 %v4123
    %6187 = vmatpush.bf16.msra.mxu0 %v4117
    %6188 = vmatpush.bf16.msra.mxu0 %v4111
    %6189 = vmatpush.bf16.msra.mxu0 %v4105
    %6190 = vmatmul.bf16.gmra.mxu0 %v158
    %v6191 = vpop.f32.mrf.mxu0
    %v6192 = vadd.f32 %v6179, %v6191
    %v6193 = vpop.f32.mrf.mxu0
    %6194 = vdwg.mxu0
    %6195 = vmatpush.bf16.msra.mxu0 %v4195
    %6196 = vmatpush.bf16.msra.mxu0 %v4189
    %6197 = vmatpush.bf16.msra.mxu0 %v4183
    %6198 = vmatpush.bf16.msra.mxu0 %v4177
    %6199 = vmatpush.bf16.msra.mxu0 %v4171
    %6200 = vmatpush.bf16.msra.mxu0 %v4165
    %6201 = vmatpush.bf16.msra.mxu0 %v4159
    %6202 = vmatpush.bf16.msra.mxu0 %v4153
    %6203 = vmatmul.bf16.gmra.mxu0 %v159
    %v6204 = vpop.f32.mrf.mxu0
    %v6205 = vadd.f32 %v6192, %v6204
    %v6206 = vpop.f32.mrf.mxu0
    %6207 = vdwg.mxu0
    %6208 = vmatpush.bf16.msra.mxu0 %v4243
    %6209 = vmatpush.bf16.msra.mxu0 %v4237
    %6210 = vmatpush.bf16.msra.mxu0 %v4231
    %6211 = vmatpush.bf16.msra.mxu0 %v4225
    %6212 = vmatpush.bf16.msra.mxu0 %v4219
    %6213 = vmatpush.bf16.msra.mxu0 %v4213
    %6214 = vmatpush.bf16.msra.mxu0 %v4207
    %6215 = vmatpush.bf16.msra.mxu0 %v4201
    %6216 = vmatmul.bf16.gmra.mxu0 %v160
    %v6217 = vpop.f32.mrf.mxu0
    %v6218 = vadd.f32 %v6205, %v6217
    %v6219 = vpop.f32.mrf.mxu0
    %6220 = vdwg.mxu0
    %6221 = vmatpush.bf16.msra.mxu0 %v4291
    %6222 = vmatpush.bf16.msra.mxu0 %v4285
    %6223 = vmatpush.bf16.msra.mxu0 %v4279
    %6224 = vmatpush.bf16.msra.mxu0 %v4273
    %6225 = vmatpush.bf16.msra.mxu0 %v4267
    %6226 = vmatpush.bf16.msra.mxu0 %v4261
    %6227 = vmatpush.bf16.msra.mxu0 %v4255
    %6228 = vmatpush.bf16.msra.mxu0 %v4249
    %6229 = vmatmul.bf16.gmra.mxu0 %v161
    %v6230 = vpop.f32.mrf.mxu0
    %v6231 = vadd.f32 %v6218, %v6230
    %v6232 = vpop.f32.mrf.mxu0
    %6233 = vdwg.mxu0
    %6234 = vmatpush.bf16.msra.mxu0 %v4339
    %6235 = vmatpush.bf16.msra.mxu0 %v4333
    %6236 = vmatpush.bf16.msra.mxu0 %v4327
    %6237 = vmatpush.bf16.msra.mxu0 %v4321
    %6238 = vmatpush.bf16.msra.mxu0 %v4315
    %6239 = vmatpush.bf16.msra.mxu0 %v4309
    %6240 = vmatpush.bf16.msra.mxu0 %v4303
    %6241 = vmatpush.bf16.msra.mxu0 %v4297
    %6242 = vmatmul.bf16.gmra.mxu0 %v162
    %v6243 = vpop.f32.mrf.mxu0
    %v6244 = vadd.f32 %v6231, %v6243
    %v6245 = vpop.f32.mrf.mxu0
    %6246 = vdwg.mxu0
    %6247 = vmatpush.bf16.msra.mxu0 %v4387
    %6248 = vmatpush.bf16.msra.mxu0 %v4381
    %6249 = vmatpush.bf16.msra.mxu0 %v4375
    %6250 = vmatpush.bf16.msra.mxu0 %v4369
    %6251 = vmatpush.bf16.msra.mxu0 %v4363
    %6252 = vmatpush.bf16.msra.mxu0 %v4357
    %6253 = vmatpush.bf16.msra.mxu0 %v4351
    %6254 = vmatpush.bf16.msra.mxu0 %v4345
    %6255 = vmatmul.bf16.gmra.mxu0 %v163
    %v6256 = vpop.f32.mrf.mxu0
    %v6257 = vadd.f32 %v6244, %v6256
    %v6258 = vpop.f32.mrf.mxu0
    %6259 = vdwg.mxu0
    %6260 = vmatpush.bf16.msra.mxu0 %v4435
    %6261 = vmatpush.bf16.msra.mxu0 %v4429
    %6262 = vmatpush.bf16.msra.mxu0 %v4423
    %6263 = vmatpush.bf16.msra.mxu0 %v4417
    %6264 = vmatpush.bf16.msra.mxu0 %v4411
    %6265 = vmatpush.bf16.msra.mxu0 %v4405
    %6266 = vmatpush.bf16.msra.mxu0 %v4399
    %6267 = vmatpush.bf16.msra.mxu0 %v4393
    %6268 = vmatmul.bf16.gmra.mxu0 %v164
    %v6269 = vpop.f32.mrf.mxu0
    %v6270 = vadd.f32 %v6257, %v6269
    %v6271 = vpop.f32.mrf.mxu0
    %6272 = vdwg.mxu0
    %6273 = vmatpush.bf16.msra.mxu0 %v4483
    %6274 = vmatpush.bf16.msra.mxu0 %v4477
    %6275 = vmatpush.bf16.msra.mxu0 %v4471
    %6276 = vmatpush.bf16.msra.mxu0 %v4465
    %6277 = vmatpush.bf16.msra.mxu0 %v4459
    %6278 = vmatpush.bf16.msra.mxu0 %v4453
    %6279 = vmatpush.bf16.msra.mxu0 %v4447
    %6280 = vmatpush.bf16.msra.mxu0 %v4441
    %6281 = vmatmul.bf16.gmra.mxu0 %v165
    %v6282 = vpop.f32.mrf.mxu0
    %v6283 = vadd.f32 %v6270, %v6282
    %v6284 = vpop.f32.mrf.mxu0
    %6285 = vdwg.mxu0
    %6286 = vmatpush.bf16.msra.mxu0 %v3668
    %6287 = vmatpush.bf16.msra.mxu0 %v3662
    %6288 = vmatpush.bf16.msra.mxu0 %v3656
    %6289 = vmatpush.bf16.msra.mxu0 %v3650
    %6290 = vmatpush.bf16.msra.mxu0 %v3644
    %6291 = vmatpush.bf16.msra.mxu0 %v3638
    %6292 = vmatpush.bf16.msra.mxu0 %v3632
    %6293 = vmatpush.bf16.msra.mxu0 %v3626
    %6294 = vmatmul.bf16.gmra.mxu0 %v148
    %v6295 = vpop.f32.mrf.mxu0
    %v6296 = vadd.f32 0.0, %v6295
    %v6297 = vpop.f32.mrf.mxu0
    %6298 = vdwg.mxu0
    %6299 = vmatpush.bf16.msra.mxu0 %v3716
    %6300 = vmatpush.bf16.msra.mxu0 %v3710
    %6301 = vmatpush.bf16.msra.mxu0 %v3704
    %6302 = vmatpush.bf16.msra.mxu0 %v3698
    %6303 = vmatpush.bf16.msra.mxu0 %v3692
    %6304 = vmatpush.bf16.msra.mxu0 %v3686
    %6305 = vmatpush.bf16.msra.mxu0 %v3680
    %6306 = vmatpush.bf16.msra.mxu0 %v3674
    %6307 = vmatmul.bf16.gmra.mxu0 %v149
    %v6308 = vpop.f32.mrf.mxu0
    %v6309 = vadd.f32 %v6296, %v6308
    %v6310 = vpop.f32.mrf.mxu0
    %6311 = vdwg.mxu0
    %6312 = vmatpush.bf16.msra.mxu0 %v3764
    %6313 = vmatpush.bf16.msra.mxu0 %v3758
    %6314 = vmatpush.bf16.msra.mxu0 %v3752
    %6315 = vmatpush.bf16.msra.mxu0 %v3746
    %6316 = vmatpush.bf16.msra.mxu0 %v3740
    %6317 = vmatpush.bf16.msra.mxu0 %v3734
    %6318 = vmatpush.bf16.msra.mxu0 %v3728
    %6319 = vmatpush.bf16.msra.mxu0 %v3722
    %6320 = vmatmul.bf16.gmra.mxu0 %v150
    %v6321 = vpop.f32.mrf.mxu0
    %v6322 = vadd.f32 %v6309, %v6321
    %v6323 = vpop.f32.mrf.mxu0
    %6324 = vdwg.mxu0
    %6325 = vmatpush.bf16.msra.mxu0 %v3812
    %6326 = vmatpush.bf16.msra.mxu0 %v3806
    %6327 = vmatpush.bf16.msra.mxu0 %v3800
    %6328 = vmatpush.bf16.msra.mxu0 %v3794
    %6329 = vmatpush.bf16.msra.mxu0 %v3788
    %6330 = vmatpush.bf16.msra.mxu0 %v3782
    %6331 = vmatpush.bf16.msra.mxu0 %v3776
    %6332 = vmatpush.bf16.msra.mxu0 %v3770
    %6333 = vmatmul.bf16.gmra.mxu0 %v151
    %v6334 = vpop.f32.mrf.mxu0
    %v6335 = vadd.f32 %v6322, %v6334
    %v6336 = vpop.f32.mrf.mxu0
    %6337 = vdwg.mxu0
    %6338 = vmatpush.bf16.msra.mxu0 %v3860
    %6339 = vmatpush.bf16.msra.mxu0 %v3854
    %6340 = vmatpush.bf16.msra.mxu0 %v3848
    %6341 = vmatpush.bf16.msra.mxu0 %v3842
    %6342 = vmatpush.bf16.msra.mxu0 %v3836
    %6343 = vmatpush.bf16.msra.mxu0 %v3830
    %6344 = vmatpush.bf16.msra.mxu0 %v3824
    %6345 = vmatpush.bf16.msra.mxu0 %v3818
    %6346 = vmatmul.bf16.gmra.mxu0 %v152
    %v6347 = vpop.f32.mrf.mxu0
    %v6348 = vadd.f32 %v6335, %v6347
    %v6349 = vpop.f32.mrf.mxu0
    %6350 = vdwg.mxu0
    %6351 = vmatpush.bf16.msra.mxu0 %v3908
    %6352 = vmatpush.bf16.msra.mxu0 %v3902
    %6353 = vmatpush.bf16.msra.mxu0 %v3896
    %6354 = vmatpush.bf16.msra.mxu0 %v3890
    %6355 = vmatpush.bf16.msra.mxu0 %v3884
    %6356 = vmatpush.bf16.msra.mxu0 %v3878
    %6357 = vmatpush.bf16.msra.mxu0 %v3872
    %6358 = vmatpush.bf16.msra.mxu0 %v3866
    %6359 = vmatmul.bf16.gmra.mxu0 %v153
    %v6360 = vpop.f32.mrf.mxu0
    %v6361 = vadd.f32 %v6348, %v6360
    %v6362 = vpop.f32.mrf.mxu0
    %6363 = vdwg.mxu0
    %6364 = vmatpush.bf16.msra.mxu0 %v3956
    %6365 = vmatpush.bf16.msra.mxu0 %v3950
    %6366 = vmatpush.bf16.msra.mxu0 %v3944
    %6367 = vmatpush.bf16.msra.mxu0 %v3938
    %6368 = vmatpush.bf16.msra.mxu0 %v3932
    %6369 = vmatpush.bf16.msra.mxu0 %v3926
    %6370 = vmatpush.bf16.msra.mxu0 %v3920
    %6371 = vmatpush.bf16.msra.mxu0 %v3914
    %6372 = vmatmul.bf16.gmra.mxu0 %v154
    %v6373 = vpop.f32.mrf.mxu0
    %v6374 = vadd.f32 %v6361, %v6373
    %v6375 = vpop.f32.mrf.mxu0
    %6376 = vdwg.mxu0
    %6377 = vmatpush.bf16.msra.mxu0 %v4004
    %6378 = vmatpush.bf16.msra.mxu0 %v3998
    %6379 = vmatpush.bf16.msra.mxu0 %v3992
    %6380 = vmatpush.bf16.msra.mxu0 %v3986
    %6381 = vmatpush.bf16.msra.mxu0 %v3980
    %6382 = vmatpush.bf16.msra.mxu0 %v3974
    %6383 = vmatpush.bf16.msra.mxu0 %v3968
    %6384 = vmatpush.bf16.msra.mxu0 %v3962
    %6385 = vmatmul.bf16.gmra.mxu0 %v155
    %v6386 = vpop.f32.mrf.mxu0
    %v6387 = vadd.f32 %v6374, %v6386
    %v6388 = vpop.f32.mrf.mxu0
    %6389 = vdwg.mxu0
    %6390 = vmatpush.bf16.msra.mxu0 %v4052
    %6391 = vmatpush.bf16.msra.mxu0 %v4046
    %6392 = vmatpush.bf16.msra.mxu0 %v4040
    %6393 = vmatpush.bf16.msra.mxu0 %v4034
    %6394 = vmatpush.bf16.msra.mxu0 %v4028
    %6395 = vmatpush.bf16.msra.mxu0 %v4022
    %6396 = vmatpush.bf16.msra.mxu0 %v4016
    %6397 = vmatpush.bf16.msra.mxu0 %v4010
    %6398 = vmatmul.bf16.gmra.mxu0 %v156
    %v6399 = vpop.f32.mrf.mxu0
    %v6400 = vadd.f32 %v6387, %v6399
    %v6401 = vpop.f32.mrf.mxu0
    %6402 = vdwg.mxu0
    %6403 = vmatpush.bf16.msra.mxu0 %v4100
    %6404 = vmatpush.bf16.msra.mxu0 %v4094
    %6405 = vmatpush.bf16.msra.mxu0 %v4088
    %6406 = vmatpush.bf16.msra.mxu0 %v4082
    %6407 = vmatpush.bf16.msra.mxu0 %v4076
    %6408 = vmatpush.bf16.msra.mxu0 %v4070
    %6409 = vmatpush.bf16.msra.mxu0 %v4064
    %6410 = vmatpush.bf16.msra.mxu0 %v4058
    %6411 = vmatmul.bf16.gmra.mxu0 %v157
    %v6412 = vpop.f32.mrf.mxu0
    %v6413 = vadd.f32 %v6400, %v6412
    %v6414 = vpop.f32.mrf.mxu0
    %6415 = vdwg.mxu0
    %6416 = vmatpush.bf16.msra.mxu0 %v4148
    %6417 = vmatpush.bf16.msra.mxu0 %v4142
    %6418 = vmatpush.bf16.msra.mxu0 %v4136
    %6419 = vmatpush.bf16.msra.mxu0 %v4130
    %6420 = vmatpush.bf16.msra.mxu0 %v4124
    %6421 = vmatpush.bf16.msra.mxu0 %v4118
    %6422 = vmatpush.bf16.msra.mxu0 %v4112
    %6423 = vmatpush.bf16.msra.mxu0 %v4106
    %6424 = vmatmul.bf16.gmra.mxu0 %v158
    %v6425 = vpop.f32.mrf.mxu0
    %v6426 = vadd.f32 %v6413, %v6425
    %v6427 = vpop.f32.mrf.mxu0
    %6428 = vdwg.mxu0
    %6429 = vmatpush.bf16.msra.mxu0 %v4196
    %6430 = vmatpush.bf16.msra.mxu0 %v4190
    %6431 = vmatpush.bf16.msra.mxu0 %v4184
    %6432 = vmatpush.bf16.msra.mxu0 %v4178
    %6433 = vmatpush.bf16.msra.mxu0 %v4172
    %6434 = vmatpush.bf16.msra.mxu0 %v4166
    %6435 = vmatpush.bf16.msra.mxu0 %v4160
    %6436 = vmatpush.bf16.msra.mxu0 %v4154
    %6437 = vmatmul.bf16.gmra.mxu0 %v159
    %v6438 = vpop.f32.mrf.mxu0
    %v6439 = vadd.f32 %v6426, %v6438
    %v6440 = vpop.f32.mrf.mxu0
    %6441 = vdwg.mxu0
    %6442 = vmatpush.bf16.msra.mxu0 %v4244
    %6443 = vmatpush.bf16.msra.mxu0 %v4238
    %6444 = vmatpush.bf16.msra.mxu0 %v4232
    %6445 = vmatpush.bf16.msra.mxu0 %v4226
    %6446 = vmatpush.bf16.msra.mxu0 %v4220
    %6447 = vmatpush.bf16.msra.mxu0 %v4214
    %6448 = vmatpush.bf16.msra.mxu0 %v4208
    %6449 = vmatpush.bf16.msra.mxu0 %v4202
    %6450 = vmatmul.bf16.gmra.mxu0 %v160
    %v6451 = vpop.f32.mrf.mxu0
    %v6452 = vadd.f32 %v6439, %v6451
    %v6453 = vpop.f32.mrf.mxu0
    %6454 = vdwg.mxu0
    %6455 = vmatpush.bf16.msra.mxu0 %v4292
    %6456 = vmatpush.bf16.msra.mxu0 %v4286
    %6457 = vmatpush.bf16.msra.mxu0 %v4280
    %6458 = vmatpush.bf16.msra.mxu0 %v4274
    %6459 = vmatpush.bf16.msra.mxu0 %v4268
    %6460 = vmatpush.bf16.msra.mxu0 %v4262
    %6461 = vmatpush.bf16.msra.mxu0 %v4256
    %6462 = vmatpush.bf16.msra.mxu0 %v4250
    %6463 = vmatmul.bf16.gmra.mxu0 %v161
    %v6464 = vpop.f32.mrf.mxu0
    %v6465 = vadd.f32 %v6452, %v6464
    %v6466 = vpop.f32.mrf.mxu0
    %6467 = vdwg.mxu0
    %6468 = vmatpush.bf16.msra.mxu0 %v4340
    %6469 = vmatpush.bf16.msra.mxu0 %v4334
    %6470 = vmatpush.bf16.msra.mxu0 %v4328
    %6471 = vmatpush.bf16.msra.mxu0 %v4322
    %6472 = vmatpush.bf16.msra.mxu0 %v4316
    %6473 = vmatpush.bf16.msra.mxu0 %v4310
    %6474 = vmatpush.bf16.msra.mxu0 %v4304
    %6475 = vmatpush.bf16.msra.mxu0 %v4298
    %6476 = vmatmul.bf16.gmra.mxu0 %v162
    %v6477 = vpop.f32.mrf.mxu0
    %v6478 = vadd.f32 %v6465, %v6477
    %v6479 = vpop.f32.mrf.mxu0
    %6480 = vdwg.mxu0
    %6481 = vmatpush.bf16.msra.mxu0 %v4388
    %6482 = vmatpush.bf16.msra.mxu0 %v4382
    %6483 = vmatpush.bf16.msra.mxu0 %v4376
    %6484 = vmatpush.bf16.msra.mxu0 %v4370
    %6485 = vmatpush.bf16.msra.mxu0 %v4364
    %6486 = vmatpush.bf16.msra.mxu0 %v4358
    %6487 = vmatpush.bf16.msra.mxu0 %v4352
    %6488 = vmatpush.bf16.msra.mxu0 %v4346
    %6489 = vmatmul.bf16.gmra.mxu0 %v163
    %v6490 = vpop.f32.mrf.mxu0
    %v6491 = vadd.f32 %v6478, %v6490
    %v6492 = vpop.f32.mrf.mxu0
    %6493 = vdwg.mxu0
    %6494 = vmatpush.bf16.msra.mxu0 %v4436
    %6495 = vmatpush.bf16.msra.mxu0 %v4430
    %6496 = vmatpush.bf16.msra.mxu0 %v4424
    %6497 = vmatpush.bf16.msra.mxu0 %v4418
    %6498 = vmatpush.bf16.msra.mxu0 %v4412
    %6499 = vmatpush.bf16.msra.mxu0 %v4406
    %6500 = vmatpush.bf16.msra.mxu0 %v4400
    %6501 = vmatpush.bf16.msra.mxu0 %v4394
    %6502 = vmatmul.bf16.gmra.mxu0 %v164
    %v6503 = vpop.f32.mrf.mxu0
    %v6504 = vadd.f32 %v6491, %v6503
    %v6505 = vpop.f32.mrf.mxu0
    %6506 = vdwg.mxu0
    %6507 = vmatpush.bf16.msra.mxu0 %v4484
    %6508 = vmatpush.bf16.msra.mxu0 %v4478
    %6509 = vmatpush.bf16.msra.mxu0 %v4472
    %6510 = vmatpush.bf16.msra.mxu0 %v4466
    %6511 = vmatpush.bf16.msra.mxu0 %v4460
    %6512 = vmatpush.bf16.msra.mxu0 %v4454
    %6513 = vmatpush.bf16.msra.mxu0 %v4448
    %6514 = vmatpush.bf16.msra.mxu0 %v4442
    %6515 = vmatmul.bf16.gmra.mxu0 %v165
    %v6516 = vpop.f32.mrf.mxu0
    %v6517 = vadd.f32 %v6504, %v6516
    %v6518 = vpop.f32.mrf.mxu0
    %6519 = vdwg.mxu0
    %6520 = vmatpush.bf16.msra.mxu0 %v3669
    %6521 = vmatpush.bf16.msra.mxu0 %v3663
    %6522 = vmatpush.bf16.msra.mxu0 %v3657
    %6523 = vmatpush.bf16.msra.mxu0 %v3651
    %6524 = vmatpush.bf16.msra.mxu0 %v3645
    %6525 = vmatpush.bf16.msra.mxu0 %v3639
    %6526 = vmatpush.bf16.msra.mxu0 %v3633
    %6527 = vmatpush.bf16.msra.mxu0 %v3627
    %6528 = vmatmul.bf16.gmra.mxu0 %v148
    %v6529 = vpop.f32.mrf.mxu0
    %v6530 = vadd.f32 0.0, %v6529
    %v6531 = vpop.f32.mrf.mxu0
    %6532 = vdwg.mxu0
    %6533 = vmatpush.bf16.msra.mxu0 %v3717
    %6534 = vmatpush.bf16.msra.mxu0 %v3711
    %6535 = vmatpush.bf16.msra.mxu0 %v3705
    %6536 = vmatpush.bf16.msra.mxu0 %v3699
    %6537 = vmatpush.bf16.msra.mxu0 %v3693
    %6538 = vmatpush.bf16.msra.mxu0 %v3687
    %6539 = vmatpush.bf16.msra.mxu0 %v3681
    %6540 = vmatpush.bf16.msra.mxu0 %v3675
    %6541 = vmatmul.bf16.gmra.mxu0 %v149
    %v6542 = vpop.f32.mrf.mxu0
    %v6543 = vadd.f32 %v6530, %v6542
    %v6544 = vpop.f32.mrf.mxu0
    %6545 = vdwg.mxu0
    %6546 = vmatpush.bf16.msra.mxu0 %v3765
    %6547 = vmatpush.bf16.msra.mxu0 %v3759
    %6548 = vmatpush.bf16.msra.mxu0 %v3753
    %6549 = vmatpush.bf16.msra.mxu0 %v3747
    %6550 = vmatpush.bf16.msra.mxu0 %v3741
    %6551 = vmatpush.bf16.msra.mxu0 %v3735
    %6552 = vmatpush.bf16.msra.mxu0 %v3729
    %6553 = vmatpush.bf16.msra.mxu0 %v3723
    %6554 = vmatmul.bf16.gmra.mxu0 %v150
    %v6555 = vpop.f32.mrf.mxu0
    %v6556 = vadd.f32 %v6543, %v6555
    %v6557 = vpop.f32.mrf.mxu0
    %6558 = vdwg.mxu0
    %6559 = vmatpush.bf16.msra.mxu0 %v3813
    %6560 = vmatpush.bf16.msra.mxu0 %v3807
    %6561 = vmatpush.bf16.msra.mxu0 %v3801
    %6562 = vmatpush.bf16.msra.mxu0 %v3795
    %6563 = vmatpush.bf16.msra.mxu0 %v3789
    %6564 = vmatpush.bf16.msra.mxu0 %v3783
    %6565 = vmatpush.bf16.msra.mxu0 %v3777
    %6566 = vmatpush.bf16.msra.mxu0 %v3771
    %6567 = vmatmul.bf16.gmra.mxu0 %v151
    %v6568 = vpop.f32.mrf.mxu0
    %v6569 = vadd.f32 %v6556, %v6568
    %v6570 = vpop.f32.mrf.mxu0
    %6571 = vdwg.mxu0
    %6572 = vmatpush.bf16.msra.mxu0 %v3861
    %6573 = vmatpush.bf16.msra.mxu0 %v3855
    %6574 = vmatpush.bf16.msra.mxu0 %v3849
    %6575 = vmatpush.bf16.msra.mxu0 %v3843
    %6576 = vmatpush.bf16.msra.mxu0 %v3837
    %6577 = vmatpush.bf16.msra.mxu0 %v3831
    %6578 = vmatpush.bf16.msra.mxu0 %v3825
    %6579 = vmatpush.bf16.msra.mxu0 %v3819
    %6580 = vmatmul.bf16.gmra.mxu0 %v152
    %v6581 = vpop.f32.mrf.mxu0
    %v6582 = vadd.f32 %v6569, %v6581
    %v6583 = vpop.f32.mrf.mxu0
    %6584 = vdwg.mxu0
    %6585 = vmatpush.bf16.msra.mxu0 %v3909
    %6586 = vmatpush.bf16.msra.mxu0 %v3903
    %6587 = vmatpush.bf16.msra.mxu0 %v3897
    %6588 = vmatpush.bf16.msra.mxu0 %v3891
    %6589 = vmatpush.bf16.msra.mxu0 %v3885
    %6590 = vmatpush.bf16.msra.mxu0 %v3879
    %6591 = vmatpush.bf16.msra.mxu0 %v3873
    %6592 = vmatpush.bf16.msra.mxu0 %v3867
    %6593 = vmatmul.bf16.gmra.mxu0 %v153
    %v6594 = vpop.f32.mrf.mxu0
    %v6595 = vadd.f32 %v6582, %v6594
    %v6596 = vpop.f32.mrf.mxu0
    %6597 = vdwg.mxu0
    %6598 = vmatpush.bf16.msra.mxu0 %v3957
    %6599 = vmatpush.bf16.msra.mxu0 %v3951
    %6600 = vmatpush.bf16.msra.mxu0 %v3945
    %6601 = vmatpush.bf16.msra.mxu0 %v3939
    %6602 = vmatpush.bf16.msra.mxu0 %v3933
    %6603 = vmatpush.bf16.msra.mxu0 %v3927
    %6604 = vmatpush.bf16.msra.mxu0 %v3921
    %6605 = vmatpush.bf16.msra.mxu0 %v3915
    %6606 = vmatmul.bf16.gmra.mxu0 %v154
    %v6607 = vpop.f32.mrf.mxu0
    %v6608 = vadd.f32 %v6595, %v6607
    %v6609 = vpop.f32.mrf.mxu0
    %6610 = vdwg.mxu0
    %6611 = vmatpush.bf16.msra.mxu0 %v4005
    %6612 = vmatpush.bf16.msra.mxu0 %v3999
    %6613 = vmatpush.bf16.msra.mxu0 %v3993
    %6614 = vmatpush.bf16.msra.mxu0 %v3987
    %6615 = vmatpush.bf16.msra.mxu0 %v3981
    %6616 = vmatpush.bf16.msra.mxu0 %v3975
    %6617 = vmatpush.bf16.msra.mxu0 %v3969
    %6618 = vmatpush.bf16.msra.mxu0 %v3963
    %6619 = vmatmul.bf16.gmra.mxu0 %v155
    %v6620 = vpop.f32.mrf.mxu0
    %v6621 = vadd.f32 %v6608, %v6620
    %v6622 = vpop.f32.mrf.mxu0
    %6623 = vdwg.mxu0
    %6624 = vmatpush.bf16.msra.mxu0 %v4053
    %6625 = vmatpush.bf16.msra.mxu0 %v4047
    %6626 = vmatpush.bf16.msra.mxu0 %v4041
    %6627 = vmatpush.bf16.msra.mxu0 %v4035
    %6628 = vmatpush.bf16.msra.mxu0 %v4029
    %6629 = vmatpush.bf16.msra.mxu0 %v4023
    %6630 = vmatpush.bf16.msra.mxu0 %v4017
    %6631 = vmatpush.bf16.msra.mxu0 %v4011
    %6632 = vmatmul.bf16.gmra.mxu0 %v156
    %v6633 = vpop.f32.mrf.mxu0
    %v6634 = vadd.f32 %v6621, %v6633
    %v6635 = vpop.f32.mrf.mxu0
    %6636 = vdwg.mxu0
    %6637 = vmatpush.bf16.msra.mxu0 %v4101
    %6638 = vmatpush.bf16.msra.mxu0 %v4095
    %6639 = vmatpush.bf16.msra.mxu0 %v4089
    %6640 = vmatpush.bf16.msra.mxu0 %v4083
    %6641 = vmatpush.bf16.msra.mxu0 %v4077
    %6642 = vmatpush.bf16.msra.mxu0 %v4071
    %6643 = vmatpush.bf16.msra.mxu0 %v4065
    %6644 = vmatpush.bf16.msra.mxu0 %v4059
    %6645 = vmatmul.bf16.gmra.mxu0 %v157
    %v6646 = vpop.f32.mrf.mxu0
    %v6647 = vadd.f32 %v6634, %v6646
    %v6648 = vpop.f32.mrf.mxu0
    %6649 = vdwg.mxu0
    %6650 = vmatpush.bf16.msra.mxu0 %v4149
    %6651 = vmatpush.bf16.msra.mxu0 %v4143
    %6652 = vmatpush.bf16.msra.mxu0 %v4137
    %6653 = vmatpush.bf16.msra.mxu0 %v4131
    %6654 = vmatpush.bf16.msra.mxu0 %v4125
    %6655 = vmatpush.bf16.msra.mxu0 %v4119
    %6656 = vmatpush.bf16.msra.mxu0 %v4113
    %6657 = vmatpush.bf16.msra.mxu0 %v4107
    %6658 = vmatmul.bf16.gmra.mxu0 %v158
    %v6659 = vpop.f32.mrf.mxu0
    %v6660 = vadd.f32 %v6647, %v6659
    %v6661 = vpop.f32.mrf.mxu0
    %6662 = vdwg.mxu0
    %6663 = vmatpush.bf16.msra.mxu0 %v4197
    %6664 = vmatpush.bf16.msra.mxu0 %v4191
    %6665 = vmatpush.bf16.msra.mxu0 %v4185
    %6666 = vmatpush.bf16.msra.mxu0 %v4179
    %6667 = vmatpush.bf16.msra.mxu0 %v4173
    %6668 = vmatpush.bf16.msra.mxu0 %v4167
    %6669 = vmatpush.bf16.msra.mxu0 %v4161
    %6670 = vmatpush.bf16.msra.mxu0 %v4155
    %6671 = vmatmul.bf16.gmra.mxu0 %v159
    %v6672 = vpop.f32.mrf.mxu0
    %v6673 = vadd.f32 %v6660, %v6672
    %v6674 = vpop.f32.mrf.mxu0
    %6675 = vdwg.mxu0
    %6676 = vmatpush.bf16.msra.mxu0 %v4245
    %6677 = vmatpush.bf16.msra.mxu0 %v4239
    %6678 = vmatpush.bf16.msra.mxu0 %v4233
    %6679 = vmatpush.bf16.msra.mxu0 %v4227
    %6680 = vmatpush.bf16.msra.mxu0 %v4221
    %6681 = vmatpush.bf16.msra.mxu0 %v4215
    %6682 = vmatpush.bf16.msra.mxu0 %v4209
    %6683 = vmatpush.bf16.msra.mxu0 %v4203
    %6684 = vmatmul.bf16.gmra.mxu0 %v160
    %v6685 = vpop.f32.mrf.mxu0
    %v6686 = vadd.f32 %v6673, %v6685
    %v6687 = vpop.f32.mrf.mxu0
    %6688 = vdwg.mxu0
    %6689 = vmatpush.bf16.msra.mxu0 %v4293
    %6690 = vmatpush.bf16.msra.mxu0 %v4287
    %6691 = vmatpush.bf16.msra.mxu0 %v4281
    %6692 = vmatpush.bf16.msra.mxu0 %v4275
    %6693 = vmatpush.bf16.msra.mxu0 %v4269
    %6694 = vmatpush.bf16.msra.mxu0 %v4263
    %6695 = vmatpush.bf16.msra.mxu0 %v4257
    %6696 = vmatpush.bf16.msra.mxu0 %v4251
    %6697 = vmatmul.bf16.gmra.mxu0 %v161
    %v6698 = vpop.f32.mrf.mxu0
    %v6699 = vadd.f32 %v6686, %v6698
    %v6700 = vpop.f32.mrf.mxu0
    %6701 = vdwg.mxu0
    %6702 = vmatpush.bf16.msra.mxu0 %v4341
    %6703 = vmatpush.bf16.msra.mxu0 %v4335
    %6704 = vmatpush.bf16.msra.mxu0 %v4329
    %6705 = vmatpush.bf16.msra.mxu0 %v4323
    %6706 = vmatpush.bf16.msra.mxu0 %v4317
    %6707 = vmatpush.bf16.msra.mxu0 %v4311
    %6708 = vmatpush.bf16.msra.mxu0 %v4305
    %6709 = vmatpush.bf16.msra.mxu0 %v4299
    %6710 = vmatmul.bf16.gmra.mxu0 %v162
    %v6711 = vpop.f32.mrf.mxu0
    %v6712 = vadd.f32 %v6699, %v6711
    %v6713 = vpop.f32.mrf.mxu0
    %6714 = vdwg.mxu0
    %6715 = vmatpush.bf16.msra.mxu0 %v4389
    %6716 = vmatpush.bf16.msra.mxu0 %v4383
    %6717 = vmatpush.bf16.msra.mxu0 %v4377
    %6718 = vmatpush.bf16.msra.mxu0 %v4371
    %6719 = vmatpush.bf16.msra.mxu0 %v4365
    %6720 = vmatpush.bf16.msra.mxu0 %v4359
    %6721 = vmatpush.bf16.msra.mxu0 %v4353
    %6722 = vmatpush.bf16.msra.mxu0 %v4347
    %6723 = vmatmul.bf16.gmra.mxu0 %v163
    %v6724 = vpop.f32.mrf.mxu0
    %v6725 = vadd.f32 %v6712, %v6724
    %v6726 = vpop.f32.mrf.mxu0
    %6727 = vdwg.mxu0
    %6728 = vmatpush.bf16.msra.mxu0 %v4437
    %6729 = vmatpush.bf16.msra.mxu0 %v4431
    %6730 = vmatpush.bf16.msra.mxu0 %v4425
    %6731 = vmatpush.bf16.msra.mxu0 %v4419
    %6732 = vmatpush.bf16.msra.mxu0 %v4413
    %6733 = vmatpush.bf16.msra.mxu0 %v4407
    %6734 = vmatpush.bf16.msra.mxu0 %v4401
    %6735 = vmatpush.bf16.msra.mxu0 %v4395
    %6736 = vmatmul.bf16.gmra.mxu0 %v164
    %v6737 = vpop.f32.mrf.mxu0
    %v6738 = vadd.f32 %v6725, %v6737
    %v6739 = vpop.f32.mrf.mxu0
    %6740 = vdwg.mxu0
    %6741 = vmatpush.bf16.msra.mxu0 %v4485
    %6742 = vmatpush.bf16.msra.mxu0 %v4479
    %6743 = vmatpush.bf16.msra.mxu0 %v4473
    %6744 = vmatpush.bf16.msra.mxu0 %v4467
    %6745 = vmatpush.bf16.msra.mxu0 %v4461
    %6746 = vmatpush.bf16.msra.mxu0 %v4455
    %6747 = vmatpush.bf16.msra.mxu0 %v4449
    %6748 = vmatpush.bf16.msra.mxu0 %v4443
    %6749 = vmatmul.bf16.gmra.mxu0 %v165
    %v6750 = vpop.f32.mrf.mxu0
    %v6751 = vadd.f32 %v6738, %v6750
    %v6752 = vpop.f32.mrf.mxu0
    %6753 = vdwg.mxu0
    %v6754 = vld [vmem:[#allocation6] sm:$0x3f]
    %v6756 = vperm.slane %v6754, 0
    %v6757 = vperm.slane %v6754, 1
    %v6758 = vperm.slane %v6754, 2
    %v6759 = vperm.slane %v6754, 3
    %v6760 = vperm.slane %v6754, 4
    %v6761 = vperm.slane %v6754, 5
    %v6768 = vmul.f32 %v5581, %v6756
    %v6769 = vmul.f32 %v5815, %v6757
    %v6770 = vmul.f32 %v6049, %v6758
    %v6771 = vmul.f32 %v6283, %v6759
    %v6772 = vmul.f32 %v6517, %v6760
    %v6773 = vmul.f32 %v6751, %v6761
    %v6774 = vld [vmem:[#allocation7] sm:$0x3f]
    %v6776 = vperm.slane %v6774, 0
    %v6777 = vperm.slane %v6774, 1
    %v6778 = vperm.slane %v6774, 2
    %v6779 = vperm.slane %v6774, 3
    %v6780 = vperm.slane %v6774, 4
    %v6781 = vperm.slane %v6774, 5
    %v6788 = vadd.f32 %v6768, %v6776
    %v6789 = vadd.f32 %v6769, %v6777
    %v6790 = vadd.f32 %v6770, %v6778
    %v6791 = vadd.f32 %v6771, %v6779
    %v6792 = vadd.f32 %v6772, %v6780
    %v6793 = vadd.f32 %v6773, %v6781
    %v6794 = vmax.f32 %v6788, 0.0
    %v6795 = vmax.f32 %v6789, 0.0
    %v6796 = vmax.f32 %v6790, 0.0
    %v6797 = vmax.f32 %v6791, 0.0
    %v6798 = vmax.f32 %v6792, 0.0
    %v6799 = vmax.f32 %v6793, 0.0
    %v6800 = vpack.c.bf16 %v6794, %v6794
    %v6801 = vpack.c.bf16 %v6795, %v6795
    %v6802 = vpack.c.bf16 %v6796, %v6796
    %v6803 = vpack.c.bf16 %v6797, %v6797
    %v6804 = vpack.c.bf16 %v6798, %v6798
    %v6805 = vpack.c.bf16 %v6799, %v6799
    %v6806 = vld [vmem:[%s4] sm:$0xf]
    %v6807 = vld [vmem:[%s4 + $0x4] sm:$0xf]
    %v6808 = vld [vmem:[%s4 + $0x8] sm:$0xf]
    %v6809 = vld [vmem:[%s4 + $0xc] sm:$0xf]
    %v6810 = vld [vmem:[%s4 + $0x10] sm:$0xf]
    %v6811 = vld [vmem:[%s4 + $0x14] sm:$0xf]
    %v6812 = vld [vmem:[%s4 + $0x18] sm:$0xf]
    %v6813 = vld [vmem:[%s4 + $0x1c] sm:$0xf]
    %v6814 = vld [vmem:[%s4 + $0x20] sm:$0xf]
    %v6815 = vld [vmem:[%s4 + $0x24] sm:$0xf]
    %v6816 = vld [vmem:[%s4 + $0x28] sm:$0xf]
    %v6817 = vld [vmem:[%s4 + $0x2c] sm:$0xf]
    %v6818 = vld [vmem:[%s4 + $0x30] sm:$0xf]
    %v6819 = vld [vmem:[%s4 + $0x34] sm:$0xf]
    %v6820 = vld [vmem:[%s4 + $0x38] sm:$0xf]
    %v6821 = vld [vmem:[%s4 + $0x3c] sm:$0xf]
    %v6822 = vld [vmem:[%s4 + $0x40] sm:$0xf]
    %v6823 = vld [vmem:[%s4 + $0x44] sm:$0xf]
    %v6824 = vld [vmem:[%s4 + $0x48] sm:$0xf]
    %v6825 = vld [vmem:[%s4 + $0x4c] sm:$0xf]
    %v6826 = vld [vmem:[%s4 + $0x50] sm:$0xf]
    %v6827 = vld [vmem:[%s4 + $0x54] sm:$0xf]
    %v6828 = vld [vmem:[%s4 + $0x58] sm:$0xf]
    %v6829 = vld [vmem:[%s4 + $0x5c] sm:$0xf]
    %v6830 = vld [vmem:[%s4 + $0x60] sm:$0xf]
    %v6831 = vld [vmem:[%s4 + $0x64] sm:$0xf]
    %v6832 = vld [vmem:[%s4 + $0x68] sm:$0xf]
    %v6833 = vld [vmem:[%s4 + $0x6c] sm:$0xf]
    %v6834 = vld [vmem:[%s4 + $0x70] sm:$0xf]
    %v6835 = vld [vmem:[%s4 + $0x74] sm:$0xf]
    %v6836 = vld [vmem:[%s4 + $0x78] sm:$0xf]
    %v6837 = vld [vmem:[%s4 + $0x7c] sm:$0xf]
    %v6838 = vld [vmem:[%s4 + $0x80] sm:$0xf]
    %v6839 = vld [vmem:[%s4 + $0x84] sm:$0xf]
    %v6840 = vld [vmem:[%s4 + $0x88] sm:$0xf]
    %v6841 = vld [vmem:[%s4 + $0x8c] sm:$0xf]
    %v6842 = vld [vmem:[%s4 + $0x90] sm:$0xf]
    %v6843 = vld [vmem:[%s4 + $0x94] sm:$0xf]
    %v6844 = vld [vmem:[%s4 + $0x98] sm:$0xf]
    %v6845 = vld [vmem:[%s4 + $0x9c] sm:$0xf]
    %v6846 = vld [vmem:[%s4 + $0xa0] sm:$0xf]
    %v6847 = vld [vmem:[%s4 + $0xa4] sm:$0xf]
    %v6848 = vld [vmem:[%s4 + $0xa8] sm:$0xf]
    %v6849 = vld [vmem:[%s4 + $0xac] sm:$0xf]
    %v6850 = vld [vmem:[%s4 + $0xb0] sm:$0xf]
    %v6851 = vld [vmem:[%s4 + $0xb4] sm:$0xf]
    %v6852 = vld [vmem:[%s4 + $0xb8] sm:$0xf]
    %v6853 = vld [vmem:[%s4 + $0xbc] sm:$0xf]
    %v6854 = vld [vmem:[%s4 + $0xc0] sm:$0xf]
    %v6855 = vld [vmem:[%s4 + $0xc4] sm:$0xf]
    %v6856 = vld [vmem:[%s4 + $0xc8] sm:$0xf]
    %v6857 = vld [vmem:[%s4 + $0xcc] sm:$0xf]
    %v6858 = vld [vmem:[%s4 + $0xd0] sm:$0xf]
    %v6859 = vld [vmem:[%s4 + $0xd4] sm:$0xf]
    %v6860 = vld [vmem:[%s4 + $0xd8] sm:$0xf]
    %v6861 = vld [vmem:[%s4 + $0xdc] sm:$0xf]
    %v6862 = vld [vmem:[%s4 + $0xe0] sm:$0xf]
    %v6863 = vld [vmem:[%s4 + $0xe4] sm:$0xf]
    %v6864 = vld [vmem:[%s4 + $0xe8] sm:$0xf]
    %v6865 = vld [vmem:[%s4 + $0xec] sm:$0xf]
    %v6866 = vld [vmem:[%s4 + $0xf0] sm:$0xf]
    %v6867 = vld [vmem:[%s4 + $0xf4] sm:$0xf]
    %v6868 = vld [vmem:[%s4 + $0xf8] sm:$0xf]
    %v6869 = vld [vmem:[%s4 + $0xfc] sm:$0xf]
    %v6870 = vld [vmem:[%s4 + $0x100] sm:$0xf]
    %v6871 = vld [vmem:[%s4 + $0x104] sm:$0xf]
    %v6872 = vld [vmem:[%s4 + $0x108] sm:$0xf]
    %v6873 = vld [vmem:[%s4 + $0x10c] sm:$0xf]
    %v6874 = vld [vmem:[%s4 + $0x110] sm:$0xf]
    %v6875 = vld [vmem:[%s4 + $0x114] sm:$0xf]
    %v6876 = vld [vmem:[%s4 + $0x118] sm:$0xf]
    %v6877 = vld [vmem:[%s4 + $0x11c] sm:$0xf]
    %v6878 = vld [vmem:[%s4 + $0x120] sm:$0xf]
    %v6879 = vld [vmem:[%s4 + $0x124] sm:$0xf]
    %v6880 = vld [vmem:[%s4 + $0x128] sm:$0xf]
    %v6881 = vld [vmem:[%s4 + $0x12c] sm:$0xf]
    %v6882 = vld [vmem:[%s4 + $0x130] sm:$0xf]
    %v6883 = vld [vmem:[%s4 + $0x134] sm:$0xf]
    %v6884 = vld [vmem:[%s4 + $0x138] sm:$0xf]
    %v6885 = vld [vmem:[%s4 + $0x13c] sm:$0xf]
    %v6886 = vld [vmem:[%s4 + $0x140] sm:$0xf]
    %v6887 = vld [vmem:[%s4 + $0x144] sm:$0xf]
    %v6888 = vld [vmem:[%s4 + $0x148] sm:$0xf]
    %v6889 = vld [vmem:[%s4 + $0x14c] sm:$0xf]
    %v6890 = vld [vmem:[%s4 + $0x150] sm:$0xf]
    %v6891 = vld [vmem:[%s4 + $0x154] sm:$0xf]
    %v6892 = vld [vmem:[%s4 + $0x158] sm:$0xf]
    %v6893 = vld [vmem:[%s4 + $0x15c] sm:$0xf]
    %v6894 = vld [vmem:[%s4 + $0x160] sm:$0xf]
    %v6895 = vld [vmem:[%s4 + $0x164] sm:$0xf]
    %v6896 = vld [vmem:[%s4 + $0x168] sm:$0xf]
    %v6897 = vld [vmem:[%s4 + $0x16c] sm:$0xf]
    %v6898 = vld [vmem:[%s4 + $0x170] sm:$0xf]
    %v6899 = vld [vmem:[%s4 + $0x174] sm:$0xf]
    %v6900 = vld [vmem:[%s4 + $0x178] sm:$0xf]
    %v6901 = vld [vmem:[%s4 + $0x17c] sm:$0xf]
    %v6998 = vunpack.c.l.b16 %v6806
    %v6999 = vunpack.c.l.b16 %v6807
    %v7000 = vunpack.c.l.b16 %v6808
    %v7001 = vunpack.c.l.b16 %v6809
    %v7002 = vunpack.c.l.b16 %v6810
    %v7003 = vunpack.c.l.b16 %v6811
    %v7004 = vunpack.c.l.b16 %v6812
    %v7005 = vunpack.c.l.b16 %v6813
    %v7006 = vunpack.c.l.b16 %v6814
    %v7007 = vunpack.c.l.b16 %v6815
    %v7008 = vunpack.c.l.b16 %v6816
    %v7009 = vunpack.c.l.b16 %v6817
    %v7010 = vunpack.c.l.b16 %v6818
    %v7011 = vunpack.c.l.b16 %v6819
    %v7012 = vunpack.c.l.b16 %v6820
    %v7013 = vunpack.c.l.b16 %v6821
    %v7014 = vunpack.c.l.b16 %v6822
    %v7015 = vunpack.c.l.b16 %v6823
    %v7016 = vunpack.c.l.b16 %v6824
    %v7017 = vunpack.c.l.b16 %v6825
    %v7018 = vunpack.c.l.b16 %v6826
    %v7019 = vunpack.c.l.b16 %v6827
    %v7020 = vunpack.c.l.b16 %v6828
    %v7021 = vunpack.c.l.b16 %v6829
    %v7022 = vunpack.c.l.b16 %v6830
    %v7023 = vunpack.c.l.b16 %v6831
    %v7024 = vunpack.c.l.b16 %v6832
    %v7025 = vunpack.c.l.b16 %v6833
    %v7026 = vunpack.c.l.b16 %v6834
    %v7027 = vunpack.c.l.b16 %v6835
    %v7028 = vunpack.c.l.b16 %v6836
    %v7029 = vunpack.c.l.b16 %v6837
    %v7030 = vunpack.c.l.b16 %v6838
    %v7031 = vunpack.c.l.b16 %v6839
    %v7032 = vunpack.c.l.b16 %v6840
    %v7033 = vunpack.c.l.b16 %v6841
    %v7034 = vunpack.c.l.b16 %v6842
    %v7035 = vunpack.c.l.b16 %v6843
    %v7036 = vunpack.c.l.b16 %v6844
    %v7037 = vunpack.c.l.b16 %v6845
    %v7038 = vunpack.c.l.b16 %v6846
    %v7039 = vunpack.c.l.b16 %v6847
    %v7040 = vunpack.c.l.b16 %v6848
    %v7041 = vunpack.c.l.b16 %v6849
    %v7042 = vunpack.c.l.b16 %v6850
    %v7043 = vunpack.c.l.b16 %v6851
    %v7044 = vunpack.c.l.b16 %v6852
    %v7045 = vunpack.c.l.b16 %v6853
    %v7046 = vunpack.c.l.b16 %v6854
    %v7047 = vunpack.c.l.b16 %v6855
    %v7048 = vunpack.c.l.b16 %v6856
    %v7049 = vunpack.c.l.b16 %v6857
    %v7050 = vunpack.c.l.b16 %v6858
    %v7051 = vunpack.c.l.b16 %v6859
    %v7052 = vunpack.c.l.b16 %v6860
    %v7053 = vunpack.c.l.b16 %v6861
    %v7054 = vunpack.c.l.b16 %v6862
    %v7055 = vunpack.c.l.b16 %v6863
    %v7056 = vunpack.c.l.b16 %v6864
    %v7057 = vunpack.c.l.b16 %v6865
    %v7058 = vunpack.c.l.b16 %v6866
    %v7059 = vunpack.c.l.b16 %v6867
    %v7060 = vunpack.c.l.b16 %v6868
    %v7061 = vunpack.c.l.b16 %v6869
    %v7062 = vunpack.c.l.b16 %v6870
    %v7063 = vunpack.c.l.b16 %v6871
    %v7064 = vunpack.c.l.b16 %v6872
    %v7065 = vunpack.c.l.b16 %v6873
    %v7066 = vunpack.c.l.b16 %v6874
    %v7067 = vunpack.c.l.b16 %v6875
    %v7068 = vunpack.c.l.b16 %v6876
    %v7069 = vunpack.c.l.b16 %v6877
    %v7070 = vunpack.c.l.b16 %v6878
    %v7071 = vunpack.c.l.b16 %v6879
    %v7072 = vunpack.c.l.b16 %v6880
    %v7073 = vunpack.c.l.b16 %v6881
    %v7074 = vunpack.c.l.b16 %v6882
    %v7075 = vunpack.c.l.b16 %v6883
    %v7076 = vunpack.c.l.b16 %v6884
    %v7077 = vunpack.c.l.b16 %v6885
    %v7078 = vunpack.c.l.b16 %v6886
    %v7079 = vunpack.c.l.b16 %v6887
    %v7080 = vunpack.c.l.b16 %v6888
    %v7081 = vunpack.c.l.b16 %v6889
    %v7082 = vunpack.c.l.b16 %v6890
    %v7083 = vunpack.c.l.b16 %v6891
    %v7084 = vunpack.c.l.b16 %v6892
    %v7085 = vunpack.c.l.b16 %v6893
    %v7086 = vunpack.c.l.b16 %v6894
    %v7087 = vunpack.c.l.b16 %v6895
    %v7088 = vunpack.c.l.b16 %v6896
    %v7089 = vunpack.c.l.b16 %v6897
    %v7090 = vunpack.c.l.b16 %v6898
    %v7091 = vunpack.c.l.b16 %v6899
    %v7092 = vunpack.c.l.b16 %v6900
    %v7093 = vunpack.c.l.b16 %v6901
    %v7094 = vpack.c.b16 %v6999, %v6998
    %v7095 = vpack.c.b16 %v7001, %v7000
    %v7096 = vpack.c.b16 %v7003, %v7002
    %v7097 = vpack.c.b16 %v7005, %v7004
    %v7098 = vpack.c.b16 %v7007, %v7006
    %v7099 = vpack.c.b16 %v7009, %v7008
    %v7100 = vpack.c.b16 %v7011, %v7010
    %v7101 = vpack.c.b16 %v7013, %v7012
    %v7102 = vpack.c.b16 %v7015, %v7014
    %v7103 = vpack.c.b16 %v7017, %v7016
    %v7104 = vpack.c.b16 %v7019, %v7018
    %v7105 = vpack.c.b16 %v7021, %v7020
    %v7106 = vpack.c.b16 %v7023, %v7022
    %v7107 = vpack.c.b16 %v7025, %v7024
    %v7108 = vpack.c.b16 %v7027, %v7026
    %v7109 = vpack.c.b16 %v7029, %v7028
    %v7110 = vpack.c.b16 %v7031, %v7030
    %v7111 = vpack.c.b16 %v7033, %v7032
    %v7112 = vpack.c.b16 %v7035, %v7034
    %v7113 = vpack.c.b16 %v7037, %v7036
    %v7114 = vpack.c.b16 %v7039, %v7038
    %v7115 = vpack.c.b16 %v7041, %v7040
    %v7116 = vpack.c.b16 %v7043, %v7042
    %v7117 = vpack.c.b16 %v7045, %v7044
    %v7118 = vpack.c.b16 %v7047, %v7046
    %v7119 = vpack.c.b16 %v7049, %v7048
    %v7120 = vpack.c.b16 %v7051, %v7050
    %v7121 = vpack.c.b16 %v7053, %v7052
    %v7122 = vpack.c.b16 %v7055, %v7054
    %v7123 = vpack.c.b16 %v7057, %v7056
    %v7124 = vpack.c.b16 %v7059, %v7058
    %v7125 = vpack.c.b16 %v7061, %v7060
    %v7126 = vpack.c.b16 %v7063, %v7062
    %v7127 = vpack.c.b16 %v7065, %v7064
    %v7128 = vpack.c.b16 %v7067, %v7066
    %v7129 = vpack.c.b16 %v7069, %v7068
    %v7130 = vpack.c.b16 %v7071, %v7070
    %v7131 = vpack.c.b16 %v7073, %v7072
    %v7132 = vpack.c.b16 %v7075, %v7074
    %v7133 = vpack.c.b16 %v7077, %v7076
    %v7134 = vpack.c.b16 %v7079, %v7078
    %v7135 = vpack.c.b16 %v7081, %v7080
    %v7136 = vpack.c.b16 %v7083, %v7082
    %v7137 = vpack.c.b16 %v7085, %v7084
    %v7138 = vpack.c.b16 %v7087, %v7086
    %v7139 = vpack.c.b16 %v7089, %v7088
    %v7140 = vpack.c.b16 %v7091, %v7090
    %v7141 = vpack.c.b16 %v7093, %v7092
    %7190 = vmatpush.bf16.msra.mxu0 %v7101
    %7191 = vmatpush.bf16.msra.mxu0 %v7100
    %7192 = vmatpush.bf16.msra.mxu0 %v7099
    %7193 = vmatpush.bf16.msra.mxu0 %v7098
    %7194 = vmatpush.bf16.msra.mxu0 %v7097
    %7195 = vmatpush.bf16.msra.mxu0 %v7096
    %7196 = vmatpush.bf16.msra.mxu0 %v7095
    %7197 = vmatpush.bf16.msra.mxu0 %v7094
    %7198 = vmatmul.bf16.gmra.mxu0 %v6800
    %v7199 = vpop.f32.mrf.mxu0
    %v7200 = vadd.f32 0.0, %v7199
    %v7201 = vpop.f32.mrf.mxu0
    %7202 = vdwg.mxu0
    %7203 = vmatpush.bf16.msra.mxu0 %v7109
    %7204 = vmatpush.bf16.msra.mxu0 %v7108
    %7205 = vmatpush.bf16.msra.mxu0 %v7107
    %7206 = vmatpush.bf16.msra.mxu0 %v7106
    %7207 = vmatpush.bf16.msra.mxu0 %v7105
    %7208 = vmatpush.bf16.msra.mxu0 %v7104
    %7209 = vmatpush.bf16.msra.mxu0 %v7103
    %7210 = vmatpush.bf16.msra.mxu0 %v7102
    %7211 = vmatmul.bf16.gmra.mxu0 %v6801
    %v7212 = vpop.f32.mrf.mxu0
    %v7213 = vadd.f32 %v7200, %v7212
    %v7214 = vpop.f32.mrf.mxu0
    %7215 = vdwg.mxu0
    %7216 = vmatpush.bf16.msra.mxu0 %v7117
    %7217 = vmatpush.bf16.msra.mxu0 %v7116
    %7218 = vmatpush.bf16.msra.mxu0 %v7115
    %7219 = vmatpush.bf16.msra.mxu0 %v7114
    %7220 = vmatpush.bf16.msra.mxu0 %v7113
    %7221 = vmatpush.bf16.msra.mxu0 %v7112
    %7222 = vmatpush.bf16.msra.mxu0 %v7111
    %7223 = vmatpush.bf16.msra.mxu0 %v7110
    %7224 = vmatmul.bf16.gmra.mxu0 %v6802
    %v7225 = vpop.f32.mrf.mxu0
    %v7226 = vadd.f32 %v7213, %v7225
    %v7227 = vpop.f32.mrf.mxu0
    %7228 = vdwg.mxu0
    %7229 = vmatpush.bf16.msra.mxu0 %v7125
    %7230 = vmatpush.bf16.msra.mxu0 %v7124
    %7231 = vmatpush.bf16.msra.mxu0 %v7123
    %7232 = vmatpush.bf16.msra.mxu0 %v7122
    %7233 = vmatpush.bf16.msra.mxu0 %v7121
    %7234 = vmatpush.bf16.msra.mxu0 %v7120
    %7235 = vmatpush.bf16.msra.mxu0 %v7119
    %7236 = vmatpush.bf16.msra.mxu0 %v7118
    %7237 = vmatmul.bf16.gmra.mxu0 %v6803
    %v7238 = vpop.f32.mrf.mxu0
    %v7239 = vadd.f32 %v7226, %v7238
    %v7240 = vpop.f32.mrf.mxu0
    %7241 = vdwg.mxu0
    %7242 = vmatpush.bf16.msra.mxu0 %v7133
    %7243 = vmatpush.bf16.msra.mxu0 %v7132
    %7244 = vmatpush.bf16.msra.mxu0 %v7131
    %7245 = vmatpush.bf16.msra.mxu0 %v7130
    %7246 = vmatpush.bf16.msra.mxu0 %v7129
    %7247 = vmatpush.bf16.msra.mxu0 %v7128
    %7248 = vmatpush.bf16.msra.mxu0 %v7127
    %7249 = vmatpush.bf16.msra.mxu0 %v7126
    %7250 = vmatmul.bf16.gmra.mxu0 %v6804
    %v7251 = vpop.f32.mrf.mxu0
    %v7252 = vadd.f32 %v7239, %v7251
    %v7253 = vpop.f32.mrf.mxu0
    %7254 = vdwg.mxu0
    %7255 = vmatpush.bf16.msra.mxu0 %v7141
    %7256 = vmatpush.bf16.msra.mxu0 %v7140
    %7257 = vmatpush.bf16.msra.mxu0 %v7139
    %7258 = vmatpush.bf16.msra.mxu0 %v7138
    %7259 = vmatpush.bf16.msra.mxu0 %v7137
    %7260 = vmatpush.bf16.msra.mxu0 %v7136
    %7261 = vmatpush.bf16.msra.mxu0 %v7135
    %7262 = vmatpush.bf16.msra.mxu0 %v7134
    %7263 = vmatmul.bf16.gmra.mxu0 %v6805
    %v7264 = vpop.f32.mrf.mxu0
    %v7265 = vadd.f32 %v7252, %v7264
    %v7266 = vpop.f32.mrf.mxu0
    %7267 = vdwg.mxu0
    %v7268 = vld [vmem:[#allocation9] sm:$0x1]
    %v7270 = vperm.slane %v7268, 0
    %v7272 = vmul.f32 %v7265, %v7270
    %v7273 = vld [vmem:[#allocation10] sm:$0x1]
    %v7275 = vperm.slane %v7273, 0
    %v7277 = vadd.f32 %v7272, %v7275
    %v7278 = vmax.f32 %v7277, 0.0
    %v7279 = vpack.c.bf16 %v7278, %v7278
    %v7280 = vld [vmem:[%s7] sm:$0xf]
    %v7281 = vld [vmem:[%s7 + $0x4] sm:$0xf]
    %v7282 = vld [vmem:[%s7 + $0x8] sm:$0xf]
    %v7283 = vld [vmem:[%s7 + $0xc] sm:$0xf]
    %v7284 = vld [vmem:[%s7 + $0x10] sm:$0xf]
    %v7285 = vld [vmem:[%s7 + $0x14] sm:$0xf]
    %v7286 = vld [vmem:[%s7 + $0x18] sm:$0xf]
    %v7287 = vld [vmem:[%s7 + $0x1c] sm:$0xf]
    %v7288 = vld [vmem:[#allocation12] sm:$0x1]
    %v7290 = vperm.slane %v7288, 0
    %v7300 = vunpack.c.l.b16 %v7280
    %v7301 = vunpack.c.l.b16 %v7281
    %v7302 = vunpack.c.l.b16 %v7282
    %v7303 = vunpack.c.l.b16 %v7283
    %v7304 = vunpack.c.l.b16 %v7284
    %v7305 = vunpack.c.l.b16 %v7285
    %v7306 = vunpack.c.l.b16 %v7286
    %v7307 = vunpack.c.l.b16 %v7287
    %v7308 = vpack.c.b16 %v7301, %v7300
    %v7309 = vpack.c.b16 %v7303, %v7302
    %v7310 = vpack.c.b16 %v7305, %v7304
    %v7311 = vpack.c.b16 %v7307, %v7306
    %vm7316 = vcmask 523264
    %v7318 = vsel %vm7316, %v7279, 0
    %7320 = vmatpush.bf16.msra.mxu0 0
    %7321 = vmatpush.bf16.msra.mxu0 0
    %7322 = vmatpush.bf16.msra.mxu0 0
    %7323 = vmatpush.bf16.msra.mxu0 0
    %7324 = vmatpush.bf16.msra.mxu0 %v7311
    %7325 = vmatpush.bf16.msra.mxu0 %v7310
    %7326 = vmatpush.bf16.msra.mxu0 %v7309
    %7327 = vmatpush.bf16.msra.mxu0 %v7308
    %7328 = vmatmul.bf16.gmra.mxu0 %v7318
    %v7329 = vpop.f32.mrf.mxu0
    %v7330 = vadd.f32 %v7290, %v7329
    %v7331 = vpop.f32.mrf.mxu0
    %7332 = vdwg.mxu0
    %vm7333 = vcmask 23552
    %v7334 = vsel %vm7333, %v7330, -inf
    %7335 = vmax.xlane.f32.xlu0 %v7334
    %v7336 = vpop.xlane.xlu0 %7335
    %v7337 = vsub.f32 %v7330, %v7336
    %v7338 = vmul.f32 %v7337, 1.442695
    %v7339 = vpow.pop %v7338
    %v7340 = vsel %vm7333, %v7339, 0.0
    %7341 = vadd.xlane.f32.xlu0 %v7340
    %v7342 = vpop.xlane.xlu0 %7341
    %v7343 = vrcp.pop %v7342
    %v7344 = vmul.f32 %v7342, %v7343
    %v7345 = vsub.f32 1.0, %v7344
    %v7346 = vmul.f32 %v7343, %v7345
    %v7347 = vadd.f32 %v7343, %v7346
    %vm7348 = vweird.f32 %v7342
    %vm7349 = vweird.f32 %v7343
    %vm7350 = vmor %vm7348, %vm7349
    %v7351 = vsel %vm7350, %v7343, %v7347
    %v7352 = vand.u32 2147483647, %v7342
    %vm7353 = vcmp.eq.f32.partialorder %v7352, 8.507059e+37
    %v7354 = vand.u32 %v7342, 2147483648
    %v7355 = vor.u32 1.1754944e-38, %v7354
    %v7356 = vsel %vm7353, %v7355, %v7351
    %v7357 = vmul.f32 %v7339, %v7356
    %7358 = vst.msk [vmem:[%s9] sm:$0xff] %vm7333, %v7357
    // Predicated region
    $region66: #{tpu_custom_call.1} parent=1 // pred_check
      _
    $region67: #{tpu_custom_call.1} parent=1 // pred_check_branch
      %7360 = sbr.rel (0) target = $region69
    $region68: #{tpu_custom_call.1} parent=1 // pred_region
      _
    $region69: #{tpu_custom_call.1} parent=1 // pred_fallthru
      _
    // Predicated region
    $region70: #{tpu_custom_call.1} parent=1 // pred_check
      _
    $region71: #{tpu_custom_call.1} parent=1 // pred_check_branch
      %7362 = sbr.rel (0) target = $region73
    $region72: #{tpu_custom_call.1} parent=1 // pred_region
      _
    $region73: #{tpu_custom_call.1} parent=1 // pred_fallthru
      _
    %7363 = vsyncpa [#allocation3], 1
    %7364 = vsyncpa [#allocation5], 1
    %7365 = vsyncpa [#allocation8], 1
    %7366 = vsyncpa [#allocation11], 1

</llo_original>
